<compile_context>
chip_gen: v7x
topology: tpu7x:2x2x1
jax: 0.10.0
libtpu: 0.0.40
codegen_flags: <defaults>
</compile_context>

<pallas_src>
import functools
import jax
import jax.numpy as jnp
from jax.experimental import pallas as pl
from jax.experimental.pallas import tpu as pltpu

_BF16 = jnp.bfloat16


# ----------------------------------------------------------------------------
# tiling / VMEM helpers
# ----------------------------------------------------------------------------
def _round_up(x, m):
    return ((x + m - 1) // m) * m


def _compute_vmem_limit():
    """Generation-aware scoped-VMEM cap (75% of per-core capacity)."""
    cap = None
    try:
        cap = getattr(pltpu.get_tpu_info(), "vmem_capacity_bytes", None)
    except Exception:   # query unavailable -> conservative default
        cap = None
    if not cap:
        cap = 64 * 1024 * 1024          # v7x per-TC VMEM (smallest generation)
    return int(cap) * 3 // 4


_VMEM_LIMIT = _compute_vmem_limit()


def _pick_tile(dim, target, align):
    """Largest tile <= target that is a multiple of `align` and divides `dim`,
    else the full dim (full-extent blocks are always layout-legal)."""
    if dim <= target:
        return dim
    t = (target // align) * align
    while t >= align:
        if dim % t == 0:
            return t
        t -= align
    return dim


def _tile_pad(dim, target, align):
    """(tile, padded_dim). Ragged dims are padded to a tile multiple instead of
    falling back to a (possibly VMEM-busting) full-extent block."""
    if dim <= target:
        t = _round_up(max(dim, align), align)
        return t, t
    if dim % target == 0:
        return target, dim
    t = (target // align) * align
    while t >= align:
        if dim % t == 0:
            return t, dim
        t -= align
    return target, _round_up(dim, target)


# ----------------------------------------------------------------------------
# Tiled matmul (bf16 operands fed from the caller, f32 accumulation)
# ----------------------------------------------------------------------------
def _matmul_kernel(a_ref, b_ref, o_ref, acc_ref):
    @pl.when(pl.program_id(2) == 0)
    def _():
        acc_ref[...] = jnp.zeros_like(acc_ref)

    acc_ref[...] += jnp.dot(a_ref[...], b_ref[...],
                            preferred_element_type=jnp.float32)

    @pl.when(pl.program_id(2) == pl.num_programs(2) - 1)
    def _():
        o_ref[...] = acc_ref[...].astype(o_ref.dtype)


def pallas_matmul(a, b, *, out_dtype=_BF16, tm_t=512, tn_t=512, tk_t=512):
    a = a.astype(_BF16)
    b = b.astype(_BF16)
    M, K = a.shape
    _, N = b.shape
    tm, Mp = _tile_pad(M, tm_t, 8)
    tn, Np = _tile_pad(N, tn_t, 128)
    tk, Kp = _tile_pad(K, tk_t, 128)
    if (Mp, Kp) != (M, K):
        a = jnp.pad(a, ((0, Mp - M), (0, Kp - K)))
    if (Kp, Np) != (K, N):
        b = jnp.pad(b, ((0, Kp - K), (0, Np - N)))
    out_bytes = Mp * Np * jnp.dtype(out_dtype).itemsize
    out = pl.pallas_call(
        _matmul_kernel,
        out_shape=jax.ShapeDtypeStruct((Mp, Np), out_dtype),
        grid=(Mp // tm, Np // tn, Kp // tk),
        in_specs=[pl.BlockSpec((tm, tk), lambda i, j, k: (i, k)),
                  pl.BlockSpec((tk, tn), lambda i, j, k: (k, j))],
        out_specs=pl.BlockSpec((tm, tn), lambda i, j, k: (i, j)),
        scratch_shapes=[pltpu.VMEM((tm, tn), jnp.float32)],
        compiler_params=pltpu.CompilerParams(
            dimension_semantics=("parallel", "parallel", "arbitrary"),
            vmem_limit_bytes=_VMEM_LIMIT),
        cost_estimate=pl.CostEstimate(
            flops=2 * Mp * Np * Kp, transcendentals=0,
            bytes_accessed=2 * (Mp * Kp + Kp * Np) + out_bytes),
    )(a, b)
    if (Mp, Np) != (M, N):
        out = out[:M, :N]
    return out


# ----------------------------------------------------------------------------
# Fused attention sub-block: LN1 + QKV + MHA + out-proj + residual
# ----------------------------------------------------------------------------
def _attn_block_kernel(*refs, n_heads, has_mask):
    if has_mask:
        (x_ref, g_ref, b_ref, qw_ref, qb_ref,
         ow_ref, ob_ref, mask_ref, o_ref) = refs
    else:
        (x_ref, g_ref, b_ref, qw_ref, qb_ref,
         ow_ref, ob_ref, o_ref) = refs
        mask_ref = None

    x = x_ref[0].astype(jnp.float32)                        # (S, D) f32
    S, D = x.shape
    dh = D // n_heads

    # LayerNorm, computed once per batch element (no N-tile recompute).
    mu = jnp.mean(x, axis=-1, keepdims=True)
    var = jnp.mean((x - mu) ** 2, axis=-1, keepdims=True)
    h = ((x - mu) * jax.lax.rsqrt(var + 1e-5)
         * g_ref[...] + b_ref[...]).astype(_BF16)

    # Fused QKV projection; (S, 3D) stays resident in VMEM/vregs.
    qkv = jnp.dot(h, qw_ref[...], preferred_element_type=jnp.float32) + qb_ref[...]

    scale = 1.0 / float(dh) ** 0.5
    acc = x + ob_ref[...]          # residual + out-proj bias, f32 accumulator

    # Per-head attention. Each head's PV goes straight through its slice of
    # the out-projection and is accumulated in f32 -> no lane concatenate and
    # bounded per-head live ranges.
    # TODO(synk): switch to lax.fori_loop over heads for very large n_heads.
    for hh in range(n_heads):
        q = (qkv[:, hh * dh:(hh + 1) * dh] * scale).astype(_BF16)  # scale folded into q
        k = qkv[:, D + hh * dh:D + (hh + 1) * dh].astype(_BF16)
        v = qkv[:, 2 * D + hh * dh:2 * D + (hh + 1) * dh].astype(_BF16)
        s = jax.lax.dot_general(q, k, (((1,), (1,)), ((), ())),
                                preferred_element_type=jnp.float32)
        if has_mask:
            s = s + mask_ref[...]
        s = s - jnp.max(s, axis=-1, keepdims=True)
        p = jnp.exp(s)
        p = p * pl.reciprocal(jnp.sum(p, axis=-1, keepdims=True), approx=True)
        pv = jnp.dot(p.astype(_BF16), v, preferred_element_type=jnp.float32)
        acc = acc + jnp.dot(pv.astype(_BF16), ow_ref[hh * dh:(hh + 1) * dh, :],
                            preferred_element_type=jnp.float32)

    o_ref[0] = acc.astype(o_ref.dtype)


def pallas_attn_block(x, ln_g, ln_b, qkv_w, qkv_b, out_w, out_b, *,
                      n_heads, mask=None):
    """x: (N, S, D) (bf16 or f32) -> (N, S, D) bf16.  One grid step per batch
    element; the batch axis is 'parallel' so both v7x TensorCores get work."""
    N, S, D = x.shape
    has_mask = mask is not None
    in_specs = [pl.BlockSpec((1, S, D), lambda i: (i, 0, 0)),
                pl.BlockSpec((1, D), lambda i: (0, 0)),
                pl.BlockSpec((1, D), lambda i: (0, 0)),
                pl.BlockSpec((D, 3 * D), lambda i: (0, 0)),
                pl.BlockSpec((1, 3 * D), lambda i: (0, 0)),
                pl.BlockSpec((D, D), lambda i: (0, 0)),
                pl.BlockSpec((1, D), lambda i: (0, 0))]
    args = [x,
            ln_g.reshape(1, D).astype(jnp.float32),
            ln_b.reshape(1, D).astype(jnp.float32),
            qkv_w.astype(_BF16),
            qkv_b.reshape(1, 3 * D).astype(jnp.float32),
            out_w.astype(_BF16),
            out_b.reshape(1, D).astype(jnp.float32)]
    if has_mask:
        in_specs.append(pl.BlockSpec((S, S), lambda i: (0, 0)))
        args.append(mask.astype(jnp.float32))
    return pl.pallas_call(
        functools.partial(_attn_block_kernel, n_heads=n_heads, has_mask=has_mask),
        out_shape=jax.ShapeDtypeStruct((N, S, D), _BF16),
        grid=(N,),
        in_specs=in_specs,
        out_specs=pl.BlockSpec((1, S, D), lambda i: (i, 0, 0)),
        compiler_params=pltpu.CompilerParams(
            dimension_semantics=("parallel",),
            vmem_limit_bytes=_VMEM_LIMIT),
        cost_estimate=pl.CostEstimate(
            flops=N * (8 * S * D * D + 4 * S * S * D),
            transcendentals=N * n_heads * S * S,
            bytes_accessed=2 * (2 * N * S * D + 4 * D * D) + 4 * S * S),
    )(*args)


# ----------------------------------------------------------------------------
# Fused MLP sub-block: LN2 + fc + QuickGELU + proj + residual
# ----------------------------------------------------------------------------
def _mlp_block_kernel(x_ref, g_ref, b_ref, fcw_ref, fcb_ref, pw_ref, pb_ref,
                      o_ref):
    x = x_ref[...].astype(jnp.float32)
    mu = jnp.mean(x, axis=-1, keepdims=True)
    var = jnp.mean((x - mu) ** 2, axis=-1, keepdims=True)
    h = ((x - mu) * jax.lax.rsqrt(var + 1e-5)
         * g_ref[...] + b_ref[...]).astype(_BF16)
    u = jnp.dot(h, fcw_ref[...], preferred_element_type=jnp.float32) + fcb_ref[...]
    u = u * 0.5 * (1.0 + jnp.tanh(0.851 * u))        # QuickGELU (tanh form)
    out = jnp.dot(u.astype(_BF16), pw_ref[...],
                  preferred_element_type=jnp.float32) + pb_ref[...] + x
    o_ref[...] = out.astype(o_ref.dtype)


def pallas_mlp_block(x, gamma, beta, fc_w, fc_b, proj_w, proj_b, *, tm_t=256):
    M, D = x.shape
    Dh = fc_w.shape[1]
    tm = _pick_tile(M, tm_t, 8)
    return pl.pallas_call(
        _mlp_block_kernel,
        out_shape=jax.ShapeDtypeStruct((M, D), _BF16),
        grid=(M // tm,),
        in_specs=[pl.BlockSpec((tm, D), lambda i: (i, 0)),
                  pl.BlockSpec((1, D), lambda i: (0, 0)),
                  pl.BlockSpec((1, D), lambda i: (0, 0)),
                  pl.BlockSpec((D, Dh), lambda i: (0, 0)),
                  pl.BlockSpec((1, Dh), lambda i: (0, 0)),
                  pl.BlockSpec((Dh, D), lambda i: (0, 0)),
                  pl.BlockSpec((1, D), lambda i: (0, 0))],
        out_specs=pl.BlockSpec((tm, D), lambda i: (i, 0)),
        compiler_params=pltpu.CompilerParams(
            dimension_semantics=("parallel",),
            vmem_limit_bytes=_VMEM_LIMIT),
        cost_estimate=pl.CostEstimate(
            flops=4 * M * D * Dh,
            transcendentals=M * Dh,
            bytes_accessed=2 * (2 * M * D + 2 * D * Dh)),
    )(x, gamma.reshape(1, D).astype(jnp.float32),
      beta.reshape(1, D).astype(jnp.float32),
      fc_w.astype(_BF16), fc_b.reshape(1, Dh).astype(jnp.float32),
      proj_w.astype(_BF16), proj_b.reshape(1, D).astype(jnp.float32))


# ----------------------------------------------------------------------------
# Standalone LayerNorm and fused LN->Linear (post_ln + vision_proj)
# ----------------------------------------------------------------------------
def _layernorm_kernel(x_ref, g_ref, b_ref, o_ref):
    x = x_ref[...].astype(jnp.float32)
    mu = jnp.mean(x, axis=-1, keepdims=True)
    var = jnp.mean((x - mu) ** 2, axis=-1, keepdims=True)
    o_ref[...] = ((x - mu) * jax.lax.rsqrt(var + 1e-5)
                  * g_ref[...] + b_ref[...]).astype(o_ref.dtype)


def pallas_layernorm(x, gamma, beta, *, out_dtype=_BF16, tm_t=512):
    M, D = x.shape
    tm = _pick_tile(M, tm_t, 8)
    return pl.pallas_call(
        _layernorm_kernel,
        out_shape=jax.ShapeDtypeStruct((M, D), out_dtype),
        grid=(M // tm,),
        in_specs=[pl.BlockSpec((tm, D), lambda i: (i, 0)),
                  pl.BlockSpec((1, D), lambda i: (0, 0)),
                  pl.BlockSpec((1, D), lambda i: (0, 0))],
        out_specs=pl.BlockSpec((tm, D), lambda i: (i, 0)),
        compiler_params=pltpu.CompilerParams(
            dimension_semantics=("parallel",),
            vmem_limit_bytes=_VMEM_LIMIT),
    )(x, gamma.reshape(1, D).astype(jnp.float32),
      beta.reshape(1, D).astype(jnp.float32))


def _ln_linear_kernel(x_ref, g_ref, b_ref, w_ref, bias_ref, o_ref, h_sc, *,
                      apply_gelu):
    # LN (+ bf16 cast) hoisted out of the column-tile loop: computed once per
    # row block into VMEM scratch, reused for every j (j axis is 'arbitrary').
    @pl.when(pl.program_id(1) == 0)
    def _():
        x = x_ref[...].astype(jnp.float32)
        mu = jnp.mean(x, axis=-1, keepdims=True)
        var = jnp.mean((x - mu) ** 2, axis=-1, keepdims=True)
        h_sc[...] = ((x - mu) * jax.lax.rsqrt(var + 1e-5)
                     * g_ref[...] + b_ref[...]).astype(_BF16)

    o = jnp.dot(h_sc[...], w_ref[...],
                preferred_element_type=jnp.float32) + bias_ref[...]
    if apply_gelu:
        o = o * 0.5 * (1.0 + jnp.tanh(0.851 * o))
    o_ref[...] = o.astype(o_ref.dtype)


def pallas_ln_linear(x, gamma, beta, w, bias, *, gelu=False,
                     out_dtype=jnp.float32, tm_t=256, tn_t=512):
    M, D = x.shape
    _, N = w.shape
    tm = _pick_tile(M, tm_t, 8)
    tn = _pick_tile(N, tn_t, 128)
    return pl.pallas_call(
        functools.partial(_ln_linear_kernel, apply_gelu=gelu),
        out_shape=jax.ShapeDtypeStruct((M, N), out_dtype),
        grid=(M // tm, N // tn),
        in_specs=[pl.BlockSpec((tm, D), lambda i, j: (i, 0)),
                  pl.BlockSpec((1, D), lambda i, j: (0, 0)),
                  pl.BlockSpec((1, D), lambda i, j: (0, 0)),
                  pl.BlockSpec((D, tn), lambda i, j: (0, j)),
                  pl.BlockSpec((1, tn), lambda i, j: (0, j))],
        out_specs=pl.BlockSpec((tm, tn), lambda i, j: (i, j)),
        scratch_shapes=[pltpu.VMEM((tm, D), _BF16)],
        compiler_params=pltpu.CompilerParams(
            dimension_semantics=("parallel", "arbitrary"),
            vmem_limit_bytes=_VMEM_LIMIT),
        cost_estimate=pl.CostEstimate(
            flops=2 * M * N * D,
            transcendentals=(M * N) if gelu else 0,
            bytes_accessed=2 * (M * D + D * N) + 4 * M * N),
    )(x, gamma.reshape(1, D).astype(jnp.float32),
      beta.reshape(1, D).astype(jnp.float32),
      w.astype(_BF16), bias.reshape(1, N).astype(jnp.float32))


# ----------------------------------------------------------------------------
# Cosine-similarity logits (padded to unmasked sublane/lane stores)
# ----------------------------------------------------------------------------
def _logits_kernel(img_ref, txt_ref, ls_ref, o_ref):
    img = img_ref[...]
    txt = txt_ref[...]
    img = img * jax.lax.rsqrt(jnp.sum(img * img, axis=-1, keepdims=True) + 1e-12)
    txt = txt * jax.lax.rsqrt(jnp.sum(txt * txt, axis=-1, keepdims=True) + 1e-12)
    scale = jnp.exp(ls_ref[0, 0])
    o_ref[...] = scale * jax.lax.dot_general(
        img, txt, (((1,), (1,)), ((), ())), preferred_element_type=jnp.float32)


def pallas_logits(img_f, text_f, logit_scale):
    B, E = img_f.shape
    C, _ = text_f.shape
    Bp = _round_up(B, 8)
    Cp = _round_up(C, 128)
    img_p = jnp.pad(img_f, ((0, Bp - B), (0, 0)))
    txt_p = jnp.pad(text_f, ((0, Cp - C), (0, 0)))
    out = pl.pallas_call(
        _logits_kernel,
        out_shape=jax.ShapeDtypeStruct((Bp, Cp), jnp.float32),
        grid=(1,),
        in_specs=[pl.BlockSpec((Bp, E), lambda i: (0, 0)),
                  pl.BlockSpec((Cp, E), lambda i: (0, 0)),
                  pl.BlockSpec((1, 1), lambda i: (0, 0))],
        out_specs=pl.BlockSpec((Bp, Cp), lambda i: (0, 0)),
        compiler_params=pltpu.CompilerParams(vmem_limit_bytes=_VMEM_LIMIT),
    )(img_p, txt_p, logit_scale)
    return out[:B, :C]


# ----------------------------------------------------------------------------
# Model (glue in plain JAX, compute in the fused Pallas kernels above)
# ----------------------------------------------------------------------------
def resblock(x, p, mask, n_heads):
    """CLIP ResidualAttentionBlock as 2 fused pallas_calls (activations carried
    in bf16; LN stats / softmax / residual adds in f32 inside the kernels)."""
    N, S, D = x.shape
    x = pallas_attn_block(x, p["ln1_g"], p["ln1_b"], p["qkv_w"], p["qkv_b"],
                          p["out_w"], p["out_b"], n_heads=n_heads, mask=mask)
    x2 = pallas_mlp_block(x.reshape(N * S, D), p["ln2_g"], p["ln2_b"],
                          p["fc_w"], p["fc_b"], p["proj_w"], p["proj_b"])
    return x2.reshape(N, S, D)


def causal_mask(L):
    i = jnp.arange(L)[:, None]
    j = jnp.arange(L)[None, :]
    return jnp.where(j > i, -1e30, 0.0).astype(jnp.float32)


def text_encoder(params, prompt, tokens, cfg):
    n_cls, L, D = prompt.shape
    x = (prompt + params["text_pos_emb"][None]).astype(_BF16)
    mask = causal_mask(L)
    for blk in params["text_blocks"]:
        x = resblock(x, blk, mask, cfg["t_heads"])
    x = pallas_layernorm(x.reshape(n_cls * L, D),
                         params["ln_final_g"], params["ln_final_b"],
                         out_dtype=_BF16)
    x = x.reshape(n_cls, L, D)
    eot_pos = jnp.argmax(tokens, axis=-1)            # EOT token has max id
    x = x[jnp.arange(n_cls), eot_pos]                # (n_cls, D)
    return pallas_matmul(x, params["text_proj"], out_dtype=jnp.float32)


def visual_branch(params, pixel_values, cfg):
    B, C, H, W = pixel_values.shape
    patch = cfg["patch"]
    Dv = cfg["v_h_dim"]
    nP = (H // patch) * (W // patch)
    # im2col for conv(kernel=stride=patch, bias=False), NCHW -> (B*nP, C*p*p).
    # TODO(synk): this one-time patch-extraction copy stays in XLA; for large
    # images it could be folded into the matmul in_spec index_map instead.
    patches = pixel_values.reshape(B, C, H // patch, patch, W // patch, patch)
    patches = patches.transpose(0, 2, 4, 1, 3, 5).reshape(B * nP,
                                                          C * patch * patch)
    w = params["conv_w"].reshape(Dv, C * patch * patch).T
    x = pallas_matmul(patches, w, out_dtype=_BF16).reshape(B, nP, Dv)
    cls = jnp.broadcast_to(params["cls_emb"].reshape(1, 1, Dv),
                           (B, 1, Dv)).astype(jnp.float32)
    x = jnp.concatenate([cls, x.astype(jnp.float32)], axis=1)
    x = x + params["vis_pos_emb"][None]
    vp = jnp.broadcast_to(params["v_prompt_emb"][None],
                          (B, cfg["v_ctx_len"], Dv)).astype(jnp.float32)
    x = jnp.concatenate([x[:, :1], vp, x[:, 1:]], axis=1)  # insert after CLS
    N, S, D = x.shape
    # VisualEncoder (L is None path): pre_ln -> transformer -> post_ln(cls)@proj
    x = pallas_layernorm(x.reshape(N * S, D), params["pre_ln_g"],
                         params["pre_ln_b"], out_dtype=_BF16).reshape(N, S, D)
    for blk in params["vis_blocks"]:
        x = resblock(x, blk, None, cfg["v_heads"])   # no mask
    x0 = x[:, 0, :]
    zero_bias = jnp.zeros((params["vision_proj"].shape[1],), jnp.float32)
    return pallas_ln_linear(x0, params["post_ln_g"], params["post_ln_b"],
                            params["vision_proj"], zero_bias,
                            out_dtype=jnp.float32)


def vt_prompt_lrn_forward(params, img, cfg):
    # TODO(synk): T.Resize((224,224)) bilinear resize has no Pallas hot path
    # here; inputs are assumed already at the target spatial resolution.
    mean = jnp.array([0.485, 0.456, 0.406], jnp.float32).reshape(1, 3, 1, 1)
    std = jnp.array([0.229, 0.224, 0.225], jnp.float32).reshape(1, 3, 1, 1)
    pixel_values = (img - mean) / std

    # --- text branch: [SOS] + learned context + class tokens ---
    context = jnp.broadcast_to(
        params["prompt_emb"][None],
        (cfg["n_cls"], cfg["ctx_len"], cfg["t_h_dim"]))
    prompt = jnp.concatenate(
        [params["sos_emb"], context, params["class_emb"]], axis=1)
    text_f = text_encoder(params, prompt, params["prompts_tokenized"], cfg)

    # --- visual branch ---
    img_f = visual_branch(params, pixel_values, cfg)

    # --- cosine-similarity logits ---
    # TODO(synk): optional fp8 weight quantization on v7x not implemented.
    return pallas_logits(img_f, text_f, params["logit_scale"])


# ----------------------------------------------------------------------------
# Deterministic parameter init (synthetic CLIP backbone); matmul weights are
# stored in bf16 (MXU operand dtype), LN params / biases stay f32.
# ----------------------------------------------------------------------------
def init_block_params(key, d, mlp_ratio=4):
    ks = jax.random.split(key, 4)
    dh = d * mlp_ratio
    return dict(
        ln1_g=jnp.ones((d,), jnp.float32), ln1_b=jnp.zeros((d,), jnp.float32),
        ln2_g=jnp.ones((d,), jnp.float32), ln2_b=jnp.zeros((d,), jnp.float32),
        qkv_w=(0.02 * jax.random.normal(ks[0], (d, 3 * d))).astype(_BF16),
        qkv_b=jnp.zeros((3 * d,), jnp.float32),
        out_w=(0.02 * jax.random.normal(ks[1], (d, d))).astype(_BF16),
        out_b=jnp.zeros((d,), jnp.float32),
        fc_w=(0.02 * jax.random.normal(ks[2], (d, dh))).astype(_BF16),
        fc_b=jnp.zeros((dh,), jnp.float32),
        proj_w=(0.02 * jax.random.normal(ks[3], (dh, d))).astype(_BF16),
        proj_b=jnp.zeros((d,), jnp.float32),
    )


def build_tokens(n_cls, ctx_len, l_text, vocab):
    # synthetic clip.tokenize: [SOS] [ctx placeholders] [class tokens] [EOT] pad
    eot = vocab - 1
    rows = []
    for c in range(n_cls):
        name_len = 2 + (c % 3)
        row = [1] + [2] * ctx_len + [3 + c] * name_len + [eot]
        row = row + [0] * (l_text - len(row))
        rows.append(row[:l_text])
    return jnp.array(rows, dtype=jnp.int32)


def init_params(key, cfg):
    ks = jax.random.split(key, 16)
    Dt, Dv, E = cfg["t_h_dim"], cfg["v_h_dim"], cfg["embed_dim"]
    nP = (cfg["img_size"] // cfg["patch"]) ** 2
    tokens = build_tokens(cfg["n_cls"], cfg["ctx_len"],
                          cfg["l_text"], cfg["vocab"])
    token_table = 0.02 * jax.random.normal(ks[0], (cfg["vocab"], Dt),
                                           jnp.float32)
    embedding = token_table[tokens]                      # (n_cls, L, Dt)
    params = dict(
        prompts_tokenized=tokens,
        sos_emb=embedding[:, :1, :],
        class_emb=embedding[:, 1 + cfg["ctx_len"]:, :],
        prompt_emb=0.02 * jax.random.normal(ks[1], (cfg["ctx_len"], Dt),
                                            jnp.float32),
        v_prompt_emb=0.02 * jax.random.normal(ks[2], (cfg["v_ctx_len"], Dv),
                                              jnp.float32),
        text_pos_emb=0.02 * jax.random.normal(ks[3], (cfg["l_text"], Dt),
                                              jnp.float32),
        vis_pos_emb=0.02 * jax.random.normal(ks[4], (1 + nP, Dv), jnp.float32),
        cls_emb=0.02 * jax.random.normal(ks[5], (Dv,), jnp.float32),
        conv_w=(0.02 * jax.random.normal(
            ks[6], (Dv, cfg["channels"], cfg["patch"], cfg["patch"]))
        ).astype(_BF16),
        text_proj=(0.02 * jax.random.normal(ks[7], (Dt, E))).astype(_BF16),
        vision_proj=(0.02 * jax.random.normal(ks[8], (Dv, E))).astype(_BF16),
        ln_final_g=jnp.ones((Dt,), jnp.float32),
        ln_final_b=jnp.zeros((Dt,), jnp.float32),
        pre_ln_g=jnp.ones((Dv,), jnp.float32),
        pre_ln_b=jnp.zeros((Dv,), jnp.float32),
        post_ln_g=jnp.ones((Dv,), jnp.float32),
        post_ln_b=jnp.zeros((Dv,), jnp.float32),
        logit_scale=jnp.full((1, 1), jnp.log(1.0 / 0.07), jnp.float32),
    )
    tkeys = jax.random.split(ks[9], cfg["t_layers"])
    vkeys = jax.random.split(ks[10], cfg["v_layers"])
    params["text_blocks"] = [init_block_params(k, Dt) for k in tkeys]
    params["vis_blocks"] = [init_block_params(k, Dv) for k in vkeys]
    return params


# ----------------------------------------------------------------------------
if __name__ == "__main__":
    cfg = dict(
        n_cls=3, ctx_len=4, v_ctx_len=2,
        t_h_dim=32, v_h_dim=32, embed_dim=16,
        t_heads=4, v_heads=4, t_layers=2, v_layers=2,
        vocab=64, l_text=16,
        channels=3, img_size=16, patch=4,
    )
    key = jax.random.PRNGKey(0)
    k_params, k_img = jax.random.split(key)
    params = init_params(k_params, cfg)
    img = jax.random.uniform(k_img, (2, 3, cfg["img_size"], cfg["img_size"]),
                             jnp.float32)
    fwd = jax.jit(lambda p, im: vt_prompt_lrn_forward(p, im, cfg))
    logits = fwd(params, img)
    logits = jax.block_until_ready(logits)
    assert logits.shape == (2, cfg["n_cls"]), logits.shape
    assert bool(jnp.all(jnp.isfinite(logits)))
    print("KERNEL_OK")
</pallas_src>

<mosaic_0001>
module attributes {stable_mosaic.version = 11 : i64} {
  func.func @_matmul_kernel(%arg0: i32, %arg1: i32, %arg2: i32, %arg3: memref<32x128xbf16, #tpu.memory_space<vmem>>, %arg4: memref<128x128xbf16, #tpu.memory_space<vmem>>, %arg5: memref<32x128xbf16, #tpu.memory_space<vmem>>, %arg6: memref<32x128xf32, #tpu.memory_space<vmem>>) attributes {dimension_semantics = [#tpu.dimension_semantics<parallel>, #tpu.dimension_semantics<parallel>, #tpu.dimension_semantics<arbitrary>], iteration_bounds = array<i64: 1, 1, 1>, scalar_prefetch = 0 : i64, scratch_operands = 1 : i64, tpu.core_type = #tpu.core_type<tc>, window_params = [{transform_indices = @transform_0, window_bounds = array<i64: 32, 128>}, {transform_indices = @transform_1, window_bounds = array<i64: 128, 128>}, {transform_indices = @transform_2, window_bounds = array<i64: 32, 128>}]} {
    %c0_i32 = arith.constant 0 : i32
    %0 = arith.cmpi eq, %arg2, %c0_i32 : i32
    %1 = arith.extui %0 : i1 to i32
    %c0_i32_0 = arith.constant 0 : i32
    %2 = arith.cmpi ne, %1, %c0_i32_0 : i32
    scf.if %2 {
      %cst_10 = arith.constant 0.000000e+00 : f32
      %12 = vector.broadcast %cst_10 : f32 to vector<32x128xf32>
      %c0_11 = arith.constant 0 : index
      %c0_12 = arith.constant 0 : index
      %13 = vector.load %arg6[%c0_11, %c0_12] : memref<32x128xf32, #tpu.memory_space<vmem>>, vector<32x128xf32>
      tpu.vector_store %arg6[%c0_11, %c0_12], %12 {strides = array<i32>} : memref<32x128xf32, #tpu.memory_space<vmem>>, vector<32x128xf32>,
    } else {
    }
    %c0 = arith.constant 0 : index
    %c0_1 = arith.constant 0 : index
    %3 = vector.load %arg6[%c0, %c0_1] : memref<32x128xf32, #tpu.memory_space<vmem>>, vector<32x128xf32>
    %c0_2 = arith.constant 0 : index
    %c0_3 = arith.constant 0 : index
    %4 = vector.load %arg3[%c0_2, %c0_3] : memref<32x128xbf16, #tpu.memory_space<vmem>>, vector<32x128xbf16>
    %c0_4 = arith.constant 0 : index
    %c0_5 = arith.constant 0 : index
    %5 = vector.load %arg4[%c0_4, %c0_5] : memref<128x128xbf16, #tpu.memory_space<vmem>>, vector<128x128xbf16>
    %cst = arith.constant dense<0.000000e+00> : vector<32x128xf32>
    %6 = tpu.matmul %4, %5, %cst {dimension_numbers = #tpu.dot_dimension_numbers<[1], [0], [0], [1], [0, 0, 1, 1], [], []>} : vector<32x128xbf16>, vector<128x128xbf16>, vector<32x128xf32> -> vector<32x128xf32>
    %7 = arith.addf %3, %6 : vector<32x128xf32>
    %c0_6 = arith.constant 0 : index
    %c0_7 = arith.constant 0 : index
    %8 = vector.load %arg6[%c0_6, %c0_7] : memref<32x128xf32, #tpu.memory_space<vmem>>, vector<32x128xf32>
    tpu.vector_store %arg6[%c0_6, %c0_7], %7 {strides = array<i32>} : memref<32x128xf32, #tpu.memory_space<vmem>>, vector<32x128xf32>,
    %c0_i32_8 = arith.constant 0 : i32
    %9 = arith.cmpi eq, %arg2, %c0_i32_8 : i32
    %10 = arith.extui %9 : i1 to i32
    %c0_i32_9 = arith.constant 0 : i32
    %11 = arith.cmpi ne, %10, %c0_i32_9 : i32
    scf.if %11 {
      %c0_10 = arith.constant 0 : index
      %c0_11 = arith.constant 0 : index
      %12 = vector.load %arg6[%c0_10, %c0_11] : memref<32x128xf32, #tpu.memory_space<vmem>>, vector<32x128xf32>
      %13 = arith.truncf %12 : vector<32x128xf32> to vector<32x128xbf16>
      %c0_12 = arith.constant 0 : index
      %c0_13 = arith.constant 0 : index
      %14 = vector.load %arg5[%c0_12, %c0_13] : memref<32x128xbf16, #tpu.memory_space<vmem>>, vector<32x128xbf16>
      tpu.vector_store %arg5[%c0_12, %c0_13], %13 {strides = array<i32>} : memref<32x128xbf16, #tpu.memory_space<vmem>>, vector<32x128xbf16>,
    } else {
    }
    return
  }
  func.func @transform_0(%arg0: i32, %arg1: i32, %arg2: i32) -> (i32, i32) {
    %c0_i32 = arith.constant 0 : i32
    return %arg0, %arg2 : i32, i32
  }
  func.func @transform_1(%arg0: i32, %arg1: i32, %arg2: i32) -> (i32, i32) {
    %c0_i32 = arith.constant 0 : i32
    return %arg2, %arg1 : i32, i32
  }
  func.func @transform_2(%arg0: i32, %arg1: i32, %arg2: i32) -> (i32, i32) {
    %c0_i32 = arith.constant 0 : i32
    return %arg0, %arg1 : i32, i32
  }
}

module attributes {stable_mosaic.version = 11 : i64} {
  func.func @_attn_block_kernel(%arg0: i32, %arg1: memref<1x19x32xbf16, #tpu.memory_space<vmem>>, %arg2: memref<1x32xf32, #tpu.memory_space<vmem>>, %arg3: memref<1x32xf32, #tpu.memory_space<vmem>>, %arg4: memref<32x96xbf16, #tpu.memory_space<vmem>>, %arg5: memref<1x96xf32, #tpu.memory_space<vmem>>, %arg6: memref<32x32xbf16, #tpu.memory_space<vmem>>, %arg7: memref<1x32xf32, #tpu.memory_space<vmem>>, %arg8: memref<1x19x32xbf16, #tpu.memory_space<vmem>>) attributes {dimension_semantics = [#tpu.dimension_semantics<parallel>], iteration_bounds = array<i64: 2>, scalar_prefetch = 0 : i64, scratch_operands = 0 : i64, tpu.core_type = #tpu.core_type<tc>, window_params = [{transform_indices = @transform_0, window_bounds = array<i64: 1, 19, 32>}, {pipeline_mode = #tpu.pipeline_mode<synchronous>, transform_indices = @transform_1, window_bounds = array<i64: 1, 32>}, {pipeline_mode = #tpu.pipeline_mode<synchronous>, transform_indices = @transform_2, window_bounds = array<i64: 1, 32>}, {pipeline_mode = #tpu.pipeline_mode<synchronous>, transform_indices = @transform_3, window_bounds = array<i64: 32, 96>}, {pipeline_mode = #tpu.pipeline_mode<synchronous>, transform_indices = @transform_4, window_bounds = array<i64: 1, 96>}, {pipeline_mode = #tpu.pipeline_mode<synchronous>, transform_indices = @transform_5, window_bounds = array<i64: 32, 32>}, {pipeline_mode = #tpu.pipeline_mode<synchronous>, transform_indices = @transform_6, window_bounds = array<i64: 1, 32>}, {transform_indices = @transform_7, window_bounds = array<i64: 1, 19, 32>}]} {
    %c0 = arith.constant 0 : index
    %c0_0 = arith.constant 0 : index
    %c0_1 = arith.constant 0 : index
    %0 = vector.load %arg1[%c0, %c0_0, %c0_1] : memref<1x19x32xbf16, #tpu.memory_space<vmem>>, vector<1x19x32xbf16>
    %1 = vector.shape_cast %0 : vector<1x19x32xbf16> to vector<19x32xbf16>
    %2 = arith.extf %1 : vector<19x32xbf16> to vector<19x32xf32>
    %cst = arith.constant dense<0.000000e+00> : vector<19xf32>
    %3 = vector.multi_reduction <add>, %2, %cst [1] : vector<19x32xf32> to vector<19xf32>
    %4 = vector.shape_cast %3 : vector<19xf32> to vector<19x1xf32>
    %cst_2 = arith.constant 3.200000e+01 : f32
    %5 = vector.broadcast %cst_2 : f32 to vector<19x1xf32>
    %6 = arith.divf %4, %5 : vector<19x1xf32>
    %7 = vector.broadcast %6 : vector<19x1xf32> to vector<19x32xf32>
    %8 = arith.subf %2, %7 : vector<19x32xf32>
    %9 = arith.mulf %8, %8 : vector<19x32xf32>
    %cst_3 = arith.constant dense<0.000000e+00> : vector<19xf32>
    %10 = vector.multi_reduction <add>, %9, %cst_3 [1] : vector<19x32xf32> to vector<19xf32>
    %11 = vector.shape_cast %10 : vector<19xf32> to vector<19x1xf32>
    %cst_4 = arith.constant 3.200000e+01 : f32
    %12 = vector.broadcast %cst_4 : f32 to vector<19x1xf32>
    %13 = arith.divf %11, %12 : vector<19x1xf32>
    %14 = vector.broadcast %6 : vector<19x1xf32> to vector<19x32xf32>
    %15 = arith.subf %2, %14 : vector<19x32xf32>
    %cst_5 = arith.constant 9.99999974E-6 : f32
    %16 = vector.broadcast %cst_5 : f32 to vector<19x1xf32>
    %17 = arith.addf %13, %16 : vector<19x1xf32>
    %18 = math.rsqrt %17 : vector<19x1xf32>
    %19 = vector.broadcast %18 : vector<19x1xf32> to vector<19x32xf32>
    %20 = arith.mulf %15, %19 : vector<19x32xf32>
    %c0_6 = arith.constant 0 : index
    %c0_7 = arith.constant 0 : index
    %21 = vector.load %arg2[%c0_6, %c0_7] : memref<1x32xf32, #tpu.memory_space<vmem>>, vector<1x32xf32>
    %22 = vector.broadcast %21 : vector<1x32xf32> to vector<19x32xf32>
    %23 = arith.mulf %20, %22 : vector<19x32xf32>
    %c0_8 = arith.constant 0 : index
    %c0_9 = arith.constant 0 : index
    %24 = vector.load %arg3[%c0_8, %c0_9] : memref<1x32xf32, #tpu.memory_space<vmem>>, vector<1x32xf32>
    %25 = vector.broadcast %24 : vector<1x32xf32> to vector<19x32xf32>
    %26 = arith.addf %23, %25 : vector<19x32xf32>
    %27 = arith.truncf %26 : vector<19x32xf32> to vector<19x32xbf16>
    %c0_10 = arith.constant 0 : index
    %c0_11 = arith.constant 0 : index
    %28 = vector.load %arg4[%c0_10, %c0_11] : memref<32x96xbf16, #tpu.memory_space<vmem>>, vector<32x96xbf16>
    %cst_12 = arith.constant dense<0.000000e+00> : vector<19x96xf32>
    %29 = tpu.matmul %27, %28, %cst_12 {dimension_numbers = #tpu.dot_dimension_numbers<[1], [0], [0], [1], [0, 0, 1, 1], [], []>} : vector<19x32xbf16>, vector<32x96xbf16>, vector<19x96xf32> -> vector<19x96xf32>
    %c0_13 = arith.constant 0 : index
    %c0_14 = arith.constant 0 : index
    %30 = vector.load %arg5[%c0_13, %c0_14] : memref<1x96xf32, #tpu.memory_space<vmem>>, vector<1x96xf32>
    %31 = vector.broadcast %30 : vector<1x96xf32> to vector<19x96xf32>
    %32 = arith.addf %29, %31 : vector<19x96xf32>
    %c0_15 = arith.constant 0 : index
    %c0_16 = arith.constant 0 : index
    %33 = vector.load %arg7[%c0_15, %c0_16] : memref<1x32xf32, #tpu.memory_space<vmem>>, vector<1x32xf32>
    %34 = vector.broadcast %33 : vector<1x32xf32> to vector<19x32xf32>
    %35 = arith.addf %2, %34 : vector<19x32xf32>
    %36 = vector.extract_strided_slice %32 {offsets = [0, 0], sizes = [19, 8], strides = [1, 1]} : vector<19x96xf32> to vector<19x8xf32>
    %cst_17 = arith.constant 0.353553385 : f32
    %37 = vector.broadcast %cst_17 : f32 to vector<19x8xf32>
    %38 = arith.mulf %36, %37 : vector<19x8xf32>
    %39 = arith.truncf %38 : vector<19x8xf32> to vector<19x8xbf16>
    %40 = vector.extract_strided_slice %32 {offsets = [0, 32], sizes = [19, 8], strides = [1, 1]} : vector<19x96xf32> to vector<19x8xf32>
    %41 = arith.truncf %40 : vector<19x8xf32> to vector<19x8xbf16>
    %42 = vector.extract_strided_slice %32 {offsets = [0, 64], sizes = [19, 8], strides = [1, 1]} : vector<19x96xf32> to vector<19x8xf32>
    %43 = arith.truncf %42 : vector<19x8xf32> to vector<19x8xbf16>
    %cst_18 = arith.constant dense<0.000000e+00> : vector<19x19xf32>
    %44 = tpu.matmul %39, %41, %cst_18 {dimension_numbers = #tpu.dot_dimension_numbers<[1], [1], [0], [0], [0, 0, 1, 0], [], []>} : vector<19x8xbf16>, vector<19x8xbf16>, vector<19x19xf32> -> vector<19x19xf32>
    %cst_19 = arith.constant dense<0xFF800000> : vector<19xf32>
    %45 = vector.multi_reduction <maximumf>, %44, %cst_19 [1] : vector<19x19xf32> to vector<19xf32>
    %46 = vector.shape_cast %45 : vector<19xf32> to vector<19x1xf32>
    %47 = vector.broadcast %46 : vector<19x1xf32> to vector<19x19xf32>
    %48 = arith.subf %44, %47 : vector<19x19xf32>
    %49 = math.exp %48 : vector<19x19xf32>
    %cst_20 = arith.constant dense<0.000000e+00> : vector<19xf32>
    %50 = vector.multi_reduction <add>, %49, %cst_20 [1] : vector<19x19xf32> to vector<19xf32>
    %51 = vector.shape_cast %50 : vector<19xf32> to vector<19x1xf32>
    %52 = tpu.reciprocal %51 {approx = true} : vector<19x1xf32> -> vector<19x1xf32>
    %53 = vector.broadcast %52 : vector<19x1xf32> to vector<19x19xf32>
    %54 = arith.mulf %49, %53 : vector<19x19xf32>
    %55 = arith.truncf %54 : vector<19x19xf32> to vector<19x19xbf16>
    %cst_21 = arith.constant dense<0.000000e+00> : vector<19x8xf32>
    %56 = tpu.matmul %55, %43, %cst_21 {dimension_numbers = #tpu.dot_dimension_numbers<[1], [0], [0], [1], [0, 0, 1, 1], [], []>} : vector<19x19xbf16>, vector<19x8xbf16>, vector<19x8xf32> -> vector<19x8xf32>
    %57 = arith.truncf %56 : vector<19x8xf32> to vector<19x8xbf16>
    %c0_22 = arith.constant 0 : index
    %c0_23 = arith.constant 0 : index
    %58 = vector.load %arg6[%c0_22, %c0_23] : memref<32x32xbf16, #tpu.memory_space<vmem>>, vector<8x32xbf16>
    %cst_24 = arith.constant dense<0.000000e+00> : vector<19x32xf32>
    %59 = tpu.matmul %57, %58, %cst_24 {dimension_numbers = #tpu.dot_dimension_numbers<[1], [0], [0], [1], [0, 0, 1, 1], [], []>} : vector<19x8xbf16>, vector<8x32xbf16>, vector<19x32xf32> -> vector<19x32xf32>
    %60 = arith.addf %35, %59 : vector<19x32xf32>
    %61 = vector.extract_strided_slice %32 {offsets = [0, 8], sizes = [19, 8], strides = [1, 1]} : vector<19x96xf32> to vector<19x8xf32>
    %cst_25 = arith.constant 0.353553385 : f32
    %62 = vector.broadcast %cst_25 : f32 to vector<19x8xf32>
    %63 = arith.mulf %61, %62 : vector<19x8xf32>
    %64 = arith.truncf %63 : vector<19x8xf32> to vector<19x8xbf16>
    %65 = vector.extract_strided_slice %32 {offsets = [0, 40], sizes = [19, 8], strides = [1, 1]} : vector<19x96xf32> to vector<19x8xf32>
    %66 = arith.truncf %65 : vector<19x8xf32> to vector<19x8xbf16>
    %67 = vector.extract_strided_slice %32 {offsets = [0, 72], sizes = [19, 8], strides = [1, 1]} : vector<19x96xf32> to vector<19x8xf32>
    %68 = arith.truncf %67 : vector<19x8xf32> to vector<19x8xbf16>
    %cst_26 = arith.constant dense<0.000000e+00> : vector<19x19xf32>
    %69 = tpu.matmul %64, %66, %cst_26 {dimension_numbers = #tpu.dot_dimension_numbers<[1], [1], [0], [0], [0, 0, 1, 0], [], []>} : vector<19x8xbf16>, vector<19x8xbf16>, vector<19x19xf32> -> vector<19x19xf32>
    %cst_27 = arith.constant dense<0xFF800000> : vector<19xf32>
    %70 = vector.multi_reduction <maximumf>, %69, %cst_27 [1] : vector<19x19xf32> to vector<19xf32>
    %71 = vector.shape_cast %70 : vector<19xf32> to vector<19x1xf32>
    %72 = vector.broadcast %71 : vector<19x1xf32> to vector<19x19xf32>
    %73 = arith.subf %69, %72 : vector<19x19xf32>
    %74 = math.exp %73 : vector<19x19xf32>
    %cst_28 = arith.constant dense<0.000000e+00> : vector<19xf32>
    %75 = vector.multi_reduction <add>, %74, %cst_28 [1] : vector<19x19xf32> to vector<19xf32>
    %76 = vector.shape_cast %75 : vector<19xf32> to vector<19x1xf32>
    %77 = tpu.reciprocal %76 {approx = true} : vector<19x1xf32> -> vector<19x1xf32>
    %78 = vector.broadcast %77 : vector<19x1xf32> to vector<19x19xf32>
    %79 = arith.mulf %74, %78 : vector<19x19xf32>
    %80 = arith.truncf %79 : vector<19x19xf32> to vector<19x19xbf16>
    %cst_29 = arith.constant dense<0.000000e+00> : vector<19x8xf32>
    %81 = tpu.matmul %80, %68, %cst_29 {dimension_numbers = #tpu.dot_dimension_numbers<[1], [0], [0], [1], [0, 0, 1, 1], [], []>} : vector<19x19xbf16>, vector<19x8xbf16>, vector<19x8xf32> -> vector<19x8xf32>
    %82 = arith.truncf %81 : vector<19x8xf32> to vector<19x8xbf16>
    %c8 = arith.constant 8 : index
    %c0_30 = arith.constant 0 : index
    %83 = vector.load %arg6[%c8, %c0_30] : memref<32x32xbf16, #tpu.memory_space<vmem>>, vector<8x32xbf16>
    %cst_31 = arith.constant dense<0.000000e+00> : vector<19x32xf32>
    %84 = tpu.matmul %82, %83, %cst_31 {dimension_numbers = #tpu.dot_dimension_numbers<[1], [0], [0], [1], [0, 0, 1, 1], [], []>} : vector<19x8xbf16>, vector<8x32xbf16>, vector<19x32xf32> -> vector<19x32xf32>
    %85 = arith.addf %60, %84 : vector<19x32xf32>
    %86 = vector.extract_strided_slice %32 {offsets = [0, 16], sizes = [19, 8], strides = [1, 1]} : vector<19x96xf32> to vector<19x8xf32>
    %cst_32 = arith.constant 0.353553385 : f32
    %87 = vector.broadcast %cst_32 : f32 to vector<19x8xf32>
    %88 = arith.mulf %86, %87 : vector<19x8xf32>
    %89 = arith.truncf %88 : vector<19x8xf32> to vector<19x8xbf16>
    %90 = vector.extract_strided_slice %32 {offsets = [0, 48], sizes = [19, 8], strides = [1, 1]} : vector<19x96xf32> to vector<19x8xf32>
    %91 = arith.truncf %90 : vector<19x8xf32> to vector<19x8xbf16>
    %92 = vector.extract_strided_slice %32 {offsets = [0, 80], sizes = [19, 8], strides = [1, 1]} : vector<19x96xf32> to vector<19x8xf32>
    %93 = arith.truncf %92 : vector<19x8xf32> to vector<19x8xbf16>
    %cst_33 = arith.constant dense<0.000000e+00> : vector<19x19xf32>
    %94 = tpu.matmul %89, %91, %cst_33 {dimension_numbers = #tpu.dot_dimension_numbers<[1], [1], [0], [0], [0, 0, 1, 0], [], []>} : vector<19x8xbf16>, vector<19x8xbf16>, vector<19x19xf32> -> vector<19x19xf32>
    %cst_34 = arith.constant dense<0xFF800000> : vector<19xf32>
    %95 = vector.multi_reduction <maximumf>, %94, %cst_34 [1] : vector<19x19xf32> to vector<19xf32>
    %96 = vector.shape_cast %95 : vector<19xf32> to vector<19x1xf32>
    %97 = vector.broadcast %96 : vector<19x1xf32> to vector<19x19xf32>
    %98 = arith.subf %94, %97 : vector<19x19xf32>
    %99 = math.exp %98 : vector<19x19xf32>
    %cst_35 = arith.constant dense<0.000000e+00> : vector<19xf32>
    %100 = vector.multi_reduction <add>, %99, %cst_35 [1] : vector<19x19xf32> to vector<19xf32>
    %101 = vector.shape_cast %100 : vector<19xf32> to vector<19x1xf32>
    %102 = tpu.reciprocal %101 {approx = true} : vector<19x1xf32> -> vector<19x1xf32>
    %103 = vector.broadcast %102 : vector<19x1xf32> to vector<19x19xf32>
    %104 = arith.mulf %99, %103 : vector<19x19xf32>
    %105 = arith.truncf %104 : vector<19x19xf32> to vector<19x19xbf16>
    %cst_36 = arith.constant dense<0.000000e+00> : vector<19x8xf32>
    %106 = tpu.matmul %105, %93, %cst_36 {dimension_numbers = #tpu.dot_dimension_numbers<[1], [0], [0], [1], [0, 0, 1, 1], [], []>} : vector<19x19xbf16>, vector<19x8xbf16>, vector<19x8xf32> -> vector<19x8xf32>
    %107 = arith.truncf %106 : vector<19x8xf32> to vector<19x8xbf16>
    %c16 = arith.constant 16 : index
    %c0_37 = arith.constant 0 : index
    %108 = vector.load %arg6[%c16, %c0_37] : memref<32x32xbf16, #tpu.memory_space<vmem>>, vector<8x32xbf16>
    %cst_38 = arith.constant dense<0.000000e+00> : vector<19x32xf32>
    %109 = tpu.matmul %107, %108, %cst_38 {dimension_numbers = #tpu.dot_dimension_numbers<[1], [0], [0], [1], [0, 0, 1, 1], [], []>} : vector<19x8xbf16>, vector<8x32xbf16>, vector<19x32xf32> -> vector<19x32xf32>
    %110 = arith.addf %85, %109 : vector<19x32xf32>
    %111 = vector.extract_strided_slice %32 {offsets = [0, 24], sizes = [19, 8], strides = [1, 1]} : vector<19x96xf32> to vector<19x8xf32>
    %cst_39 = arith.constant 0.353553385 : f32
    %112 = vector.broadcast %cst_39 : f32 to vector<19x8xf32>
    %113 = arith.mulf %111, %112 : vector<19x8xf32>
    %114 = arith.truncf %113 : vector<19x8xf32> to vector<19x8xbf16>
    %115 = vector.extract_strided_slice %32 {offsets = [0, 56], sizes = [19, 8], strides = [1, 1]} : vector<19x96xf32> to vector<19x8xf32>
    %116 = arith.truncf %115 : vector<19x8xf32> to vector<19x8xbf16>
    %117 = vector.extract_strided_slice %32 {offsets = [0, 88], sizes = [19, 8], strides = [1, 1]} : vector<19x96xf32> to vector<19x8xf32>
    %118 = arith.truncf %117 : vector<19x8xf32> to vector<19x8xbf16>
    %cst_40 = arith.constant dense<0.000000e+00> : vector<19x19xf32>
    %119 = tpu.matmul %114, %116, %cst_40 {dimension_numbers = #tpu.dot_dimension_numbers<[1], [1], [0], [0], [0, 0, 1, 0], [], []>} : vector<19x8xbf16>, vector<19x8xbf16>, vector<19x19xf32> -> vector<19x19xf32>
    %cst_41 = arith.constant dense<0xFF800000> : vector<19xf32>
    %120 = vector.multi_reduction <maximumf>, %119, %cst_41 [1] : vector<19x19xf32> to vector<19xf32>
    %121 = vector.shape_cast %120 : vector<19xf32> to vector<19x1xf32>
    %122 = vector.broadcast %121 : vector<19x1xf32> to vector<19x19xf32>
    %123 = arith.subf %119, %122 : vector<19x19xf32>
    %124 = math.exp %123 : vector<19x19xf32>
    %cst_42 = arith.constant dense<0.000000e+00> : vector<19xf32>
    %125 = vector.multi_reduction <add>, %124, %cst_42 [1] : vector<19x19xf32> to vector<19xf32>
    %126 = vector.shape_cast %125 : vector<19xf32> to vector<19x1xf32>
    %127 = tpu.reciprocal %126 {approx = true} : vector<19x1xf32> -> vector<19x1xf32>
    %128 = vector.broadcast %127 : vector<19x1xf32> to vector<19x19xf32>
    %129 = arith.mulf %124, %128 : vector<19x19xf32>
    %130 = arith.truncf %129 : vector<19x19xf32> to vector<19x19xbf16>
    %cst_43 = arith.constant dense<0.000000e+00> : vector<19x8xf32>
    %131 = tpu.matmul %130, %118, %cst_43 {dimension_numbers = #tpu.dot_dimension_numbers<[1], [0], [0], [1], [0, 0, 1, 1], [], []>} : vector<19x19xbf16>, vector<19x8xbf16>, vector<19x8xf32> -> vector<19x8xf32>
    %132 = arith.truncf %131 : vector<19x8xf32> to vector<19x8xbf16>
    %c24 = arith.constant 24 : index
    %c0_44 = arith.constant 0 : index
    %133 = vector.load %arg6[%c24, %c0_44] : memref<32x32xbf16, #tpu.memory_space<vmem>>, vector<8x32xbf16>
    %cst_45 = arith.constant dense<0.000000e+00> : vector<19x32xf32>
    %134 = tpu.matmul %132, %133, %cst_45 {dimension_numbers = #tpu.dot_dimension_numbers<[1], [0], [0], [1], [0, 0, 1, 1], [], []>} : vector<19x8xbf16>, vector<8x32xbf16>, vector<19x32xf32> -> vector<19x32xf32>
    %135 = arith.addf %110, %134 : vector<19x32xf32>
    %136 = arith.truncf %135 : vector<19x32xf32> to vector<19x32xbf16>
    %c0_46 = arith.constant 0 : index
    %c0_47 = arith.constant 0 : index
    %c0_48 = arith.constant 0 : index
    %137 = vector.load %arg8[%c0_46, %c0_47, %c0_48] : memref<1x19x32xbf16, #tpu.memory_space<vmem>>, vector<1x19x32xbf16>
    %138 = vector.shape_cast %137 : vector<1x19x32xbf16> to vector<19x32xbf16>
    %139 = vector.shape_cast %136 : vector<19x32xbf16> to vector<1x19x32xbf16>
    tpu.vector_store %arg8[%c0_46, %c0_47, %c0_48], %139 {strides = array<i32>} : memref<1x19x32xbf16, #tpu.memory_space<vmem>>, vector<1x19x32xbf16>,
    return
  }
  func.func @transform_0(%arg0: i32) -> (i32, i32, i32) {
    %c0_i32 = arith.constant 0 : i32
    %c0_i32_0 = arith.constant 0 : i32
    %c0_i32_1 = arith.constant 0 : i32
    return %arg0, %c0_i32, %c0_i32_0 : i32, i32, i32
  }
  func.func @transform_1(%arg0: i32) -> (i32, i32) {
    %c0_i32 = arith.constant 0 : i32
    %c0_i32_0 = arith.constant 0 : i32
    %c0_i32_1 = arith.constant 0 : i32
    return %c0_i32, %c0_i32_0 : i32, i32
  }
  func.func @transform_2(%arg0: i32) -> (i32, i32) {
    %c0_i32 = arith.constant 0 : i32
    %c0_i32_0 = arith.constant 0 : i32
    %c0_i32_1 = arith.constant 0 : i32
    return %c0_i32, %c0_i32_0 : i32, i32
  }
  func.func @transform_3(%arg0: i32) -> (i32, i32) {
    %c0_i32 = arith.constant 0 : i32
    %c0_i32_0 = arith.constant 0 : i32
    %c0_i32_1 = arith.constant 0 : i32
    return %c0_i32, %c0_i32_0 : i32, i32
  }
  func.func @transform_4(%arg0: i32) -> (i32, i32) {
    %c0_i32 = arith.constant 0 : i32
    %c0_i32_0 = arith.constant 0 : i32
    %c0_i32_1 = arith.constant 0 : i32
    return %c0_i32, %c0_i32_0 : i32, i32
  }
  func.func @transform_5(%arg0: i32) -> (i32, i32) {
    %c0_i32 = arith.constant 0 : i32
    %c0_i32_0 = arith.constant 0 : i32
    %c0_i32_1 = arith.constant 0 : i32
    return %c0_i32, %c0_i32_0 : i32, i32
  }
  func.func @transform_6(%arg0: i32) -> (i32, i32) {
    %c0_i32 = arith.constant 0 : i32
    %c0_i32_0 = arith.constant 0 : i32
    %c0_i32_1 = arith.constant 0 : i32
    return %c0_i32, %c0_i32_0 : i32, i32
  }
  func.func @transform_7(%arg0: i32) -> (i32, i32, i32) {
    %c0_i32 = arith.constant 0 : i32
    %c0_i32_0 = arith.constant 0 : i32
    %c0_i32_1 = arith.constant 0 : i32
    return %arg0, %c0_i32, %c0_i32_0 : i32, i32, i32
  }
}

module attributes {stable_mosaic.version = 11 : i64} {
  func.func @_layernorm_kernel(%arg0: i32, %arg1: memref<38x32xf32, #tpu.memory_space<vmem>>, %arg2: memref<1x32xf32, #tpu.memory_space<vmem>>, %arg3: memref<1x32xf32, #tpu.memory_space<vmem>>, %arg4: memref<38x32xbf16, #tpu.memory_space<vmem>>) attributes {dimension_semantics = [#tpu.dimension_semantics<parallel>], iteration_bounds = array<i64: 1>, scalar_prefetch = 0 : i64, scratch_operands = 0 : i64, tpu.core_type = #tpu.core_type<tc>, window_params = [{transform_indices = @transform_0, window_bounds = array<i64: 38, 32>}, {pipeline_mode = #tpu.pipeline_mode<synchronous>, transform_indices = @transform_1, window_bounds = array<i64: 1, 32>}, {pipeline_mode = #tpu.pipeline_mode<synchronous>, transform_indices = @transform_2, window_bounds = array<i64: 1, 32>}, {transform_indices = @transform_3, window_bounds = array<i64: 38, 32>}]} {
    %c0 = arith.constant 0 : index
    %c0_0 = arith.constant 0 : index
    %0 = vector.load %arg1[%c0, %c0_0] : memref<38x32xf32, #tpu.memory_space<vmem>>, vector<38x32xf32>
    %cst = arith.constant dense<0.000000e+00> : vector<38xf32>
    %1 = vector.multi_reduction <add>, %0, %cst [1] : vector<38x32xf32> to vector<38xf32>
    %2 = vector.shape_cast %1 : vector<38xf32> to vector<38x1xf32>
    %cst_1 = arith.constant 3.200000e+01 : f32
    %3 = vector.broadcast %cst_1 : f32 to vector<38x1xf32>
    %4 = arith.divf %2, %3 : vector<38x1xf32>
    %5 = vector.broadcast %4 : vector<38x1xf32> to vector<38x32xf32>
    %6 = arith.subf %0, %5 : vector<38x32xf32>
    %7 = arith.mulf %6, %6 : vector<38x32xf32>
    %cst_2 = arith.constant dense<0.000000e+00> : vector<38xf32>
    %8 = vector.multi_reduction <add>, %7, %cst_2 [1] : vector<38x32xf32> to vector<38xf32>
    %9 = vector.shape_cast %8 : vector<38xf32> to vector<38x1xf32>
    %cst_3 = arith.constant 3.200000e+01 : f32
    %10 = vector.broadcast %cst_3 : f32 to vector<38x1xf32>
    %11 = arith.divf %9, %10 : vector<38x1xf32>
    %12 = vector.broadcast %4 : vector<38x1xf32> to vector<38x32xf32>
    %13 = arith.subf %0, %12 : vector<38x32xf32>
    %cst_4 = arith.constant 9.99999974E-6 : f32
    %14 = vector.broadcast %cst_4 : f32 to vector<38x1xf32>
    %15 = arith.addf %11, %14 : vector<38x1xf32>
    %16 = math.rsqrt %15 : vector<38x1xf32>
    %17 = vector.broadcast %16 : vector<38x1xf32> to vector<38x32xf32>
    %18 = arith.mulf %13, %17 : vector<38x32xf32>
    %c0_5 = arith.constant 0 : index
    %c0_6 = arith.constant 0 : index
    %19 = vector.load %arg2[%c0_5, %c0_6] : memref<1x32xf32, #tpu.memory_space<vmem>>, vector<1x32xf32>
    %20 = vector.broadcast %19 : vector<1x32xf32> to vector<38x32xf32>
    %21 = arith.mulf %18, %20 : vector<38x32xf32>
    %c0_7 = arith.constant 0 : index
    %c0_8 = arith.constant 0 : index
    %22 = vector.load %arg3[%c0_7, %c0_8] : memref<1x32xf32, #tpu.memory_space<vmem>>, vector<1x32xf32>
    %23 = vector.broadcast %22 : vector<1x32xf32> to vector<38x32xf32>
    %24 = arith.addf %21, %23 : vector<38x32xf32>
    %25 = arith.truncf %24 : vector<38x32xf32> to vector<38x32xbf16>
    %c0_9 = arith.constant 0 : index
    %c0_10 = arith.constant 0 : index
    %26 = vector.load %arg4[%c0_9, %c0_10] : memref<38x32xbf16, #tpu.memory_space<vmem>>, vector<38x32xbf16>
    tpu.vector_store %arg4[%c0_9, %c0_10], %25 {strides = array<i32>} : memref<38x32xbf16, #tpu.memory_space<vmem>>, vector<38x32xbf16>,
    return
  }
  func.func @transform_0(%arg0: i32) -> (i32, i32) {
    %c0_i32 = arith.constant 0 : i32
    %c0_i32_0 = arith.constant 0 : i32
    return %arg0, %c0_i32 : i32, i32
  }
  func.func @transform_1(%arg0: i32) -> (i32, i32) {
    %c0_i32 = arith.constant 0 : i32
    %c0_i32_0 = arith.constant 0 : i32
    %c0_i32_1 = arith.constant 0 : i32
    return %c0_i32, %c0_i32_0 : i32, i32
  }
  func.func @transform_2(%arg0: i32) -> (i32, i32) {
    %c0_i32 = arith.constant 0 : i32
    %c0_i32_0 = arith.constant 0 : i32
    %c0_i32_1 = arith.constant 0 : i32
    return %c0_i32, %c0_i32_0 : i32, i32
  }
  func.func @transform_3(%arg0: i32) -> (i32, i32) {
    %c0_i32 = arith.constant 0 : i32
    %c0_i32_0 = arith.constant 0 : i32
    return %arg0, %c0_i32 : i32, i32
  }
}

module attributes {stable_mosaic.version = 11 : i64} {
  func.func @_mlp_block_kernel(%arg0: i32, %arg1: memref<38x32xbf16, #tpu.memory_space<vmem>>, %arg2: memref<1x32xf32, #tpu.memory_space<vmem>>, %arg3: memref<1x32xf32, #tpu.memory_space<vmem>>, %arg4: memref<32x128xbf16, #tpu.memory_space<vmem>>, %arg5: memref<1x128xf32, #tpu.memory_space<vmem>>, %arg6: memref<128x32xbf16, #tpu.memory_space<vmem>>, %arg7: memref<1x32xf32, #tpu.memory_space<vmem>>, %arg8: memref<38x32xbf16, #tpu.memory_space<vmem>>) attributes {dimension_semantics = [#tpu.dimension_semantics<parallel>], iteration_bounds = array<i64: 1>, scalar_prefetch = 0 : i64, scratch_operands = 0 : i64, tpu.core_type = #tpu.core_type<tc>, window_params = [{transform_indices = @transform_0, window_bounds = array<i64: 38, 32>}, {pipeline_mode = #tpu.pipeline_mode<synchronous>, transform_indices = @transform_1, window_bounds = array<i64: 1, 32>}, {pipeline_mode = #tpu.pipeline_mode<synchronous>, transform_indices = @transform_2, window_bounds = array<i64: 1, 32>}, {pipeline_mode = #tpu.pipeline_mode<synchronous>, transform_indices = @transform_3, window_bounds = array<i64: 32, 128>}, {pipeline_mode = #tpu.pipeline_mode<synchronous>, transform_indices = @transform_4, window_bounds = array<i64: 1, 128>}, {pipeline_mode = #tpu.pipeline_mode<synchronous>, transform_indices = @transform_5, window_bounds = array<i64: 128, 32>}, {pipeline_mode = #tpu.pipeline_mode<synchronous>, transform_indices = @transform_6, window_bounds = array<i64: 1, 32>}, {transform_indices = @transform_7, window_bounds = array<i64: 38, 32>}]} {
    %c0 = arith.constant 0 : index
    %c0_0 = arith.constant 0 : index
    %0 = vector.load %arg1[%c0, %c0_0] : memref<38x32xbf16, #tpu.memory_space<vmem>>, vector<38x32xbf16>
    %1 = arith.extf %0 : vector<38x32xbf16> to vector<38x32xf32>
    %cst = arith.constant dense<0.000000e+00> : vector<38xf32>
    %2 = vector.multi_reduction <add>, %1, %cst [1] : vector<38x32xf32> to vector<38xf32>
    %3 = vector.shape_cast %2 : vector<38xf32> to vector<38x1xf32>
    %cst_1 = arith.constant 3.200000e+01 : f32
    %4 = vector.broadcast %cst_1 : f32 to vector<38x1xf32>
    %5 = arith.divf %3, %4 : vector<38x1xf32>
    %6 = vector.broadcast %5 : vector<38x1xf32> to vector<38x32xf32>
    %7 = arith.subf %1, %6 : vector<38x32xf32>
    %8 = arith.mulf %7, %7 : vector<38x32xf32>
    %cst_2 = arith.constant dense<0.000000e+00> : vector<38xf32>
    %9 = vector.multi_reduction <add>, %8, %cst_2 [1] : vector<38x32xf32> to vector<38xf32>
    %10 = vector.shape_cast %9 : vector<38xf32> to vector<38x1xf32>
    %cst_3 = arith.constant 3.200000e+01 : f32
    %11 = vector.broadcast %cst_3 : f32 to vector<38x1xf32>
    %12 = arith.divf %10, %11 : vector<38x1xf32>
    %13 = vector.broadcast %5 : vector<38x1xf32> to vector<38x32xf32>
    %14 = arith.subf %1, %13 : vector<38x32xf32>
    %cst_4 = arith.constant 9.99999974E-6 : f32
    %15 = vector.broadcast %cst_4 : f32 to vector<38x1xf32>
    %16 = arith.addf %12, %15 : vector<38x1xf32>
    %17 = math.rsqrt %16 : vector<38x1xf32>
    %18 = vector.broadcast %17 : vector<38x1xf32> to vector<38x32xf32>
    %19 = arith.mulf %14, %18 : vector<38x32xf32>
    %c0_5 = arith.constant 0 : index
    %c0_6 = arith.constant 0 : index
    %20 = vector.load %arg2[%c0_5, %c0_6] : memref<1x32xf32, #tpu.memory_space<vmem>>, vector<1x32xf32>
    %21 = vector.broadcast %20 : vector<1x32xf32> to vector<38x32xf32>
    %22 = arith.mulf %19, %21 : vector<38x32xf32>
    %c0_7 = arith.constant 0 : index
    %c0_8 = arith.constant 0 : index
    %23 = vector.load %arg3[%c0_7, %c0_8] : memref<1x32xf32, #tpu.memory_space<vmem>>, vector<1x32xf32>
    %24 = vector.broadcast %23 : vector<1x32xf32> to vector<38x32xf32>
    %25 = arith.addf %22, %24 : vector<38x32xf32>
    %26 = arith.truncf %25 : vector<38x32xf32> to vector<38x32xbf16>
    %c0_9 = arith.constant 0 : index
    %c0_10 = arith.constant 0 : index
    %27 = vector.load %arg4[%c0_9, %c0_10] : memref<32x128xbf16, #tpu.memory_space<vmem>>, vector<32x128xbf16>
    %cst_11 = arith.constant dense<0.000000e+00> : vector<38x128xf32>
    %28 = tpu.matmul %26, %27, %cst_11 {dimension_numbers = #tpu.dot_dimension_numbers<[1], [0], [0], [1], [0, 0, 1, 1], [], []>} : vector<38x32xbf16>, vector<32x128xbf16>, vector<38x128xf32> -> vector<38x128xf32>
    %c0_12 = arith.constant 0 : index
    %c0_13 = arith.constant 0 : index
    %29 = vector.load %arg5[%c0_12, %c0_13] : memref<1x128xf32, #tpu.memory_space<vmem>>, vector<1x128xf32>
    %30 = vector.broadcast %29 : vector<1x128xf32> to vector<38x128xf32>
    %31 = arith.addf %28, %30 : vector<38x128xf32>
    %cst_14 = arith.constant 5.000000e-01 : f32
    %32 = vector.broadcast %cst_14 : f32 to vector<38x128xf32>
    %33 = arith.mulf %31, %32 : vector<38x128xf32>
    %cst_15 = arith.constant 8.510000e-01 : f32
    %34 = vector.broadcast %cst_15 : f32 to vector<38x128xf32>
    %35 = arith.mulf %34, %31 : vector<38x128xf32>
    %36 = math.tanh %35 : vector<38x128xf32>
    %cst_16 = arith.constant 1.000000e+00 : f32
    %37 = vector.broadcast %cst_16 : f32 to vector<38x128xf32>
    %38 = arith.addf %37, %36 : vector<38x128xf32>
    %39 = arith.mulf %33, %38 : vector<38x128xf32>
    %40 = arith.truncf %39 : vector<38x128xf32> to vector<38x128xbf16>
    %c0_17 = arith.constant 0 : index
    %c0_18 = arith.constant 0 : index
    %41 = vector.load %arg6[%c0_17, %c0_18] : memref<128x32xbf16, #tpu.memory_space<vmem>>, vector<128x32xbf16>
    %cst_19 = arith.constant dense<0.000000e+00> : vector<38x32xf32>
    %42 = tpu.matmul %40, %41, %cst_19 {dimension_numbers = #tpu.dot_dimension_numbers<[1], [0], [0], [1], [0, 0, 1, 1], [], []>} : vector<38x128xbf16>, vector<128x32xbf16>, vector<38x32xf32> -> vector<38x32xf32>
    %c0_20 = arith.constant 0 : index
    %c0_21 = arith.constant 0 : index
    %43 = vector.load %arg7[%c0_20, %c0_21] : memref<1x32xf32, #tpu.memory_space<vmem>>, vector<1x32xf32>
    %44 = vector.broadcast %43 : vector<1x32xf32> to vector<38x32xf32>
    %45 = arith.addf %42, %44 : vector<38x32xf32>
    %46 = arith.addf %45, %1 : vector<38x32xf32>
    %47 = arith.truncf %46 : vector<38x32xf32> to vector<38x32xbf16>
    %c0_22 = arith.constant 0 : index
    %c0_23 = arith.constant 0 : index
    %48 = vector.load %arg8[%c0_22, %c0_23] : memref<38x32xbf16, #tpu.memory_space<vmem>>, vector<38x32xbf16>
    tpu.vector_store %arg8[%c0_22, %c0_23], %47 {strides = array<i32>} : memref<38x32xbf16, #tpu.memory_space<vmem>>, vector<38x32xbf16>,
    return
  }
  func.func @transform_0(%arg0: i32) -> (i32, i32) {
    %c0_i32 = arith.constant 0 : i32
    %c0_i32_0 = arith.constant 0 : i32
    return %arg0, %c0_i32 : i32, i32
  }
  func.func @transform_1(%arg0: i32) -> (i32, i32) {
    %c0_i32 = arith.constant 0 : i32
    %c0_i32_0 = arith.constant 0 : i32
    %c0_i32_1 = arith.constant 0 : i32
    return %c0_i32, %c0_i32_0 : i32, i32
  }
  func.func @transform_2(%arg0: i32) -> (i32, i32) {
    %c0_i32 = arith.constant 0 : i32
    %c0_i32_0 = arith.constant 0 : i32
    %c0_i32_1 = arith.constant 0 : i32
    return %c0_i32, %c0_i32_0 : i32, i32
  }
  func.func @transform_3(%arg0: i32) -> (i32, i32) {
    %c0_i32 = arith.constant 0 : i32
    %c0_i32_0 = arith.constant 0 : i32
    %c0_i32_1 = arith.constant 0 : i32
    return %c0_i32, %c0_i32_0 : i32, i32
  }
  func.func @transform_4(%arg0: i32) -> (i32, i32) {
    %c0_i32 = arith.constant 0 : i32
    %c0_i32_0 = arith.constant 0 : i32
    %c0_i32_1 = arith.constant 0 : i32
    return %c0_i32, %c0_i32_0 : i32, i32
  }
  func.func @transform_5(%arg0: i32) -> (i32, i32) {
    %c0_i32 = arith.constant 0 : i32
    %c0_i32_0 = arith.constant 0 : i32
    %c0_i32_1 = arith.constant 0 : i32
    return %c0_i32, %c0_i32_0 : i32, i32
  }
  func.func @transform_6(%arg0: i32) -> (i32, i32) {
    %c0_i32 = arith.constant 0 : i32
    %c0_i32_0 = arith.constant 0 : i32
    %c0_i32_1 = arith.constant 0 : i32
    return %c0_i32, %c0_i32_0 : i32, i32
  }
  func.func @transform_7(%arg0: i32) -> (i32, i32) {
    %c0_i32 = arith.constant 0 : i32
    %c0_i32_0 = arith.constant 0 : i32
    return %arg0, %c0_i32 : i32, i32
  }
}

module attributes {stable_mosaic.version = 11 : i64} {
  func.func @_ln_linear_kernel(%arg0: i32, %arg1: i32, %arg2: memref<2x32xbf16, #tpu.memory_space<vmem>>, %arg3: memref<1x32xf32, #tpu.memory_space<vmem>>, %arg4: memref<1x32xf32, #tpu.memory_space<vmem>>, %arg5: memref<32x16xbf16, #tpu.memory_space<vmem>>, %arg6: memref<1x16xf32, #tpu.memory_space<vmem>>, %arg7: memref<2x16xf32, #tpu.memory_space<vmem>>, %arg8: memref<2x32xbf16, #tpu.memory_space<vmem>>) attributes {dimension_semantics = [#tpu.dimension_semantics<parallel>, #tpu.dimension_semantics<arbitrary>], iteration_bounds = array<i64: 1, 1>, scalar_prefetch = 0 : i64, scratch_operands = 1 : i64, tpu.core_type = #tpu.core_type<tc>, window_params = [{transform_indices = @transform_0, window_bounds = array<i64: 2, 32>}, {pipeline_mode = #tpu.pipeline_mode<synchronous>, transform_indices = @transform_1, window_bounds = array<i64: 1, 32>}, {pipeline_mode = #tpu.pipeline_mode<synchronous>, transform_indices = @transform_2, window_bounds = array<i64: 1, 32>}, {transform_indices = @transform_3, window_bounds = array<i64: 32, 16>}, {transform_indices = @transform_4, window_bounds = array<i64: 1, 16>}, {transform_indices = @transform_5, window_bounds = array<i64: 2, 16>}]} {
    %c0_i32 = arith.constant 0 : i32
    %0 = arith.cmpi eq, %arg1, %c0_i32 : i32
    %1 = arith.extui %0 : i1 to i32
    %c0_i32_0 = arith.constant 0 : i32
    %2 = arith.cmpi ne, %1, %c0_i32_0 : i32
    scf.if %2 {
      %c0_8 = arith.constant 0 : index
      %c0_9 = arith.constant 0 : index
      %10 = vector.load %arg2[%c0_8, %c0_9] : memref<2x32xbf16, #tpu.memory_space<vmem>>, vector<2x32xbf16>
      %11 = arith.extf %10 : vector<2x32xbf16> to vector<2x32xf32>
      %cst_10 = arith.constant dense<0.000000e+00> : vector<2xf32>
      %12 = vector.multi_reduction <add>, %11, %cst_10 [1] : vector<2x32xf32> to vector<2xf32>
      %13 = vector.shape_cast %12 : vector<2xf32> to vector<2x1xf32>
      %cst_11 = arith.constant 3.200000e+01 : f32
      %14 = vector.broadcast %cst_11 : f32 to vector<2x1xf32>
      %15 = arith.divf %13, %14 : vector<2x1xf32>
      %16 = vector.broadcast %15 : vector<2x1xf32> to vector<2x32xf32>
      %17 = arith.subf %11, %16 : vector<2x32xf32>
      %18 = arith.mulf %17, %17 : vector<2x32xf32>
      %cst_12 = arith.constant dense<0.000000e+00> : vector<2xf32>
      %19 = vector.multi_reduction <add>, %18, %cst_12 [1] : vector<2x32xf32> to vector<2xf32>
      %20 = vector.shape_cast %19 : vector<2xf32> to vector<2x1xf32>
      %cst_13 = arith.constant 3.200000e+01 : f32
      %21 = vector.broadcast %cst_13 : f32 to vector<2x1xf32>
      %22 = arith.divf %20, %21 : vector<2x1xf32>
      %23 = vector.broadcast %15 : vector<2x1xf32> to vector<2x32xf32>
      %24 = arith.subf %11, %23 : vector<2x32xf32>
      %cst_14 = arith.constant 9.99999974E-6 : f32
      %25 = vector.broadcast %cst_14 : f32 to vector<2x1xf32>
      %26 = arith.addf %22, %25 : vector<2x1xf32>
      %27 = math.rsqrt %26 : vector<2x1xf32>
      %28 = vector.broadcast %27 : vector<2x1xf32> to vector<2x32xf32>
      %29 = arith.mulf %24, %28 : vector<2x32xf32>
      %c0_15 = arith.constant 0 : index
      %c0_16 = arith.constant 0 : index
      %30 = vector.load %arg3[%c0_15, %c0_16] : memref<1x32xf32, #tpu.memory_space<vmem>>, vector<1x32xf32>
      %31 = vector.broadcast %30 : vector<1x32xf32> to vector<2x32xf32>
      %32 = arith.mulf %29, %31 : vector<2x32xf32>
      %c0_17 = arith.constant 0 : index
      %c0_18 = arith.constant 0 : index
      %33 = vector.load %arg4[%c0_17, %c0_18] : memref<1x32xf32, #tpu.memory_space<vmem>>, vector<1x32xf32>
      %34 = vector.broadcast %33 : vector<1x32xf32> to vector<2x32xf32>
      %35 = arith.addf %32, %34 : vector<2x32xf32>
      %36 = arith.truncf %35 : vector<2x32xf32> to vector<2x32xbf16>
      %c0_19 = arith.constant 0 : index
      %c0_20 = arith.constant 0 : index
      %37 = vector.load %arg8[%c0_19, %c0_20] : memref<2x32xbf16, #tpu.memory_space<vmem>>, vector<2x32xbf16>
      tpu.vector_store %arg8[%c0_19, %c0_20], %36 {strides = array<i32>} : memref<2x32xbf16, #tpu.memory_space<vmem>>, vector<2x32xbf16>,
    } else {
    }
    %c0 = arith.constant 0 : index
    %c0_1 = arith.constant 0 : index
    %3 = vector.load %arg8[%c0, %c0_1] : memref<2x32xbf16, #tpu.memory_space<vmem>>, vector<2x32xbf16>
    %c0_2 = arith.constant 0 : index
    %c0_3 = arith.constant 0 : index
    %4 = vector.load %arg5[%c0_2, %c0_3] : memref<32x16xbf16, #tpu.memory_space<vmem>>, vector<32x16xbf16>
    %cst = arith.constant dense<0.000000e+00> : vector<2x16xf32>
    %5 = tpu.matmul %3, %4, %cst {dimension_numbers = #tpu.dot_dimension_numbers<[1], [0], [0], [1], [0, 0, 1, 1], [], []>} : vector<2x32xbf16>, vector<32x16xbf16>, vector<2x16xf32> -> vector<2x16xf32>
    %c0_4 = arith.constant 0 : index
    %c0_5 = arith.constant 0 : index
    %6 = vector.load %arg6[%c0_4, %c0_5] : memref<1x16xf32, #tpu.memory_space<vmem>>, vector<1x16xf32>
    %7 = vector.broadcast %6 : vector<1x16xf32> to vector<2x16xf32>
    %8 = arith.addf %5, %7 : vector<2x16xf32>
    %c0_6 = arith.constant 0 : index
    %c0_7 = arith.constant 0 : index
    %9 = vector.load %arg7[%c0_6, %c0_7] : memref<2x16xf32, #tpu.memory_space<vmem>>, vector<2x16xf32>
    tpu.vector_store %arg7[%c0_6, %c0_7], %8 {strides = array<i32>} : memref<2x16xf32, #tpu.memory_space<vmem>>, vector<2x16xf32>,
    return
  }
  func.func @transform_0(%arg0: i32, %arg1: i32) -> (i32, i32) {
    %c0_i32 = arith.constant 0 : i32
    %c0_i32_0 = arith.constant 0 : i32
    return %arg0, %c0_i32 : i32, i32
  }
  func.func @transform_1(%arg0: i32, %arg1: i32) -> (i32, i32) {
    %c0_i32 = arith.constant 0 : i32
    %c0_i32_0 = arith.constant 0 : i32
    %c0_i32_1 = arith.constant 0 : i32
    return %c0_i32, %c0_i32_0 : i32, i32
  }
  func.func @transform_2(%arg0: i32, %arg1: i32) -> (i32, i32) {
    %c0_i32 = arith.constant 0 : i32
    %c0_i32_0 = arith.constant 0 : i32
    %c0_i32_1 = arith.constant 0 : i32
    return %c0_i32, %c0_i32_0 : i32, i32
  }
  func.func @transform_3(%arg0: i32, %arg1: i32) -> (i32, i32) {
    %c0_i32 = arith.constant 0 : i32
    %c0_i32_0 = arith.constant 0 : i32
    return %c0_i32, %arg1 : i32, i32
  }
  func.func @transform_4(%arg0: i32, %arg1: i32) -> (i32, i32) {
    %c0_i32 = arith.constant 0 : i32
    %c0_i32_0 = arith.constant 0 : i32
    return %c0_i32, %arg1 : i32, i32
  }
  func.func @transform_5(%arg0: i32, %arg1: i32) -> (i32, i32) {
    %c0_i32 = arith.constant 0 : i32
    return %arg0, %arg1 : i32, i32
  }
}

module attributes {stable_mosaic.version = 11 : i64} {
  func.func @_mlp_block_kernel(%arg0: i32, %arg1: memref<48x32xbf16, #tpu.memory_space<vmem>>, %arg2: memref<1x32xf32, #tpu.memory_space<vmem>>, %arg3: memref<1x32xf32, #tpu.memory_space<vmem>>, %arg4: memref<32x128xbf16, #tpu.memory_space<vmem>>, %arg5: memref<1x128xf32, #tpu.memory_space<vmem>>, %arg6: memref<128x32xbf16, #tpu.memory_space<vmem>>, %arg7: memref<1x32xf32, #tpu.memory_space<vmem>>, %arg8: memref<48x32xbf16, #tpu.memory_space<vmem>>) attributes {dimension_semantics = [#tpu.dimension_semantics<parallel>], iteration_bounds = array<i64: 1>, scalar_prefetch = 0 : i64, scratch_operands = 0 : i64, tpu.core_type = #tpu.core_type<tc>, window_params = [{transform_indices = @transform_0, window_bounds = array<i64: 48, 32>}, {pipeline_mode = #tpu.pipeline_mode<synchronous>, transform_indices = @transform_1, window_bounds = array<i64: 1, 32>}, {pipeline_mode = #tpu.pipeline_mode<synchronous>, transform_indices = @transform_2, window_bounds = array<i64: 1, 32>}, {pipeline_mode = #tpu.pipeline_mode<synchronous>, transform_indices = @transform_3, window_bounds = array<i64: 32, 128>}, {pipeline_mode = #tpu.pipeline_mode<synchronous>, transform_indices = @transform_4, window_bounds = array<i64: 1, 128>}, {pipeline_mode = #tpu.pipeline_mode<synchronous>, transform_indices = @transform_5, window_bounds = array<i64: 128, 32>}, {pipeline_mode = #tpu.pipeline_mode<synchronous>, transform_indices = @transform_6, window_bounds = array<i64: 1, 32>}, {transform_indices = @transform_7, window_bounds = array<i64: 48, 32>}]} {
    %c0 = arith.constant 0 : index
    %c0_0 = arith.constant 0 : index
    %0 = vector.load %arg1[%c0, %c0_0] : memref<48x32xbf16, #tpu.memory_space<vmem>>, vector<48x32xbf16>
    %1 = arith.extf %0 : vector<48x32xbf16> to vector<48x32xf32>
    %cst = arith.constant dense<0.000000e+00> : vector<48xf32>
    %2 = vector.multi_reduction <add>, %1, %cst [1] : vector<48x32xf32> to vector<48xf32>
    %3 = vector.shape_cast %2 : vector<48xf32> to vector<48x1xf32>
    %cst_1 = arith.constant 3.200000e+01 : f32
    %4 = vector.broadcast %cst_1 : f32 to vector<48x1xf32>
    %5 = arith.divf %3, %4 : vector<48x1xf32>
    %6 = vector.broadcast %5 : vector<48x1xf32> to vector<48x32xf32>
    %7 = arith.subf %1, %6 : vector<48x32xf32>
    %8 = arith.mulf %7, %7 : vector<48x32xf32>
    %cst_2 = arith.constant dense<0.000000e+00> : vector<48xf32>
    %9 = vector.multi_reduction <add>, %8, %cst_2 [1] : vector<48x32xf32> to vector<48xf32>
    %10 = vector.shape_cast %9 : vector<48xf32> to vector<48x1xf32>
    %cst_3 = arith.constant 3.200000e+01 : f32
    %11 = vector.broadcast %cst_3 : f32 to vector<48x1xf32>
    %12 = arith.divf %10, %11 : vector<48x1xf32>
    %13 = vector.broadcast %5 : vector<48x1xf32> to vector<48x32xf32>
    %14 = arith.subf %1, %13 : vector<48x32xf32>
    %cst_4 = arith.constant 9.99999974E-6 : f32
    %15 = vector.broadcast %cst_4 : f32 to vector<48x1xf32>
    %16 = arith.addf %12, %15 : vector<48x1xf32>
    %17 = math.rsqrt %16 : vector<48x1xf32>
    %18 = vector.broadcast %17 : vector<48x1xf32> to vector<48x32xf32>
    %19 = arith.mulf %14, %18 : vector<48x32xf32>
    %c0_5 = arith.constant 0 : index
    %c0_6 = arith.constant 0 : index
    %20 = vector.load %arg2[%c0_5, %c0_6] : memref<1x32xf32, #tpu.memory_space<vmem>>, vector<1x32xf32>
    %21 = vector.broadcast %20 : vector<1x32xf32> to vector<48x32xf32>
    %22 = arith.mulf %19, %21 : vector<48x32xf32>
    %c0_7 = arith.constant 0 : index
    %c0_8 = arith.constant 0 : index
    %23 = vector.load %arg3[%c0_7, %c0_8] : memref<1x32xf32, #tpu.memory_space<vmem>>, vector<1x32xf32>
    %24 = vector.broadcast %23 : vector<1x32xf32> to vector<48x32xf32>
    %25 = arith.addf %22, %24 : vector<48x32xf32>
    %26 = arith.truncf %25 : vector<48x32xf32> to vector<48x32xbf16>
    %c0_9 = arith.constant 0 : index
    %c0_10 = arith.constant 0 : index
    %27 = vector.load %arg4[%c0_9, %c0_10] : memref<32x128xbf16, #tpu.memory_space<vmem>>, vector<32x128xbf16>
    %cst_11 = arith.constant dense<0.000000e+00> : vector<48x128xf32>
    %28 = tpu.matmul %26, %27, %cst_11 {dimension_numbers = #tpu.dot_dimension_numbers<[1], [0], [0], [1], [0, 0, 1, 1], [], []>} : vector<48x32xbf16>, vector<32x128xbf16>, vector<48x128xf32> -> vector<48x128xf32>
    %c0_12 = arith.constant 0 : index
    %c0_13 = arith.constant 0 : index
    %29 = vector.load %arg5[%c0_12, %c0_13] : memref<1x128xf32, #tpu.memory_space<vmem>>, vector<1x128xf32>
    %30 = vector.broadcast %29 : vector<1x128xf32> to vector<48x128xf32>
    %31 = arith.addf %28, %30 : vector<48x128xf32>
    %cst_14 = arith.constant 5.000000e-01 : f32
    %32 = vector.broadcast %cst_14 : f32 to vector<48x128xf32>
    %33 = arith.mulf %31, %32 : vector<48x128xf32>
    %cst_15 = arith.constant 8.510000e-01 : f32
    %34 = vector.broadcast %cst_15 : f32 to vector<48x128xf32>
    %35 = arith.mulf %34, %31 : vector<48x128xf32>
    %36 = math.tanh %35 : vector<48x128xf32>
    %cst_16 = arith.constant 1.000000e+00 : f32
    %37 = vector.broadcast %cst_16 : f32 to vector<48x128xf32>
    %38 = arith.addf %37, %36 : vector<48x128xf32>
    %39 = arith.mulf %33, %38 : vector<48x128xf32>
    %40 = arith.truncf %39 : vector<48x128xf32> to vector<48x128xbf16>
    %c0_17 = arith.constant 0 : index
    %c0_18 = arith.constant 0 : index
    %41 = vector.load %arg6[%c0_17, %c0_18] : memref<128x32xbf16, #tpu.memory_space<vmem>>, vector<128x32xbf16>
    %cst_19 = arith.constant dense<0.000000e+00> : vector<48x32xf32>
    %42 = tpu.matmul %40, %41, %cst_19 {dimension_numbers = #tpu.dot_dimension_numbers<[1], [0], [0], [1], [0, 0, 1, 1], [], []>} : vector<48x128xbf16>, vector<128x32xbf16>, vector<48x32xf32> -> vector<48x32xf32>
    %c0_20 = arith.constant 0 : index
    %c0_21 = arith.constant 0 : index
    %43 = vector.load %arg7[%c0_20, %c0_21] : memref<1x32xf32, #tpu.memory_space<vmem>>, vector<1x32xf32>
    %44 = vector.broadcast %43 : vector<1x32xf32> to vector<48x32xf32>
    %45 = arith.addf %42, %44 : vector<48x32xf32>
    %46 = arith.addf %45, %1 : vector<48x32xf32>
    %47 = arith.truncf %46 : vector<48x32xf32> to vector<48x32xbf16>
    %c0_22 = arith.constant 0 : index
    %c0_23 = arith.constant 0 : index
    %48 = vector.load %arg8[%c0_22, %c0_23] : memref<48x32xbf16, #tpu.memory_space<vmem>>, vector<48x32xbf16>
    tpu.vector_store %arg8[%c0_22, %c0_23], %47 {strides = array<i32>} : memref<48x32xbf16, #tpu.memory_space<vmem>>, vector<48x32xbf16>,
    return
  }
  func.func @transform_0(%arg0: i32) -> (i32, i32) {
    %c0_i32 = arith.constant 0 : i32
    %c0_i32_0 = arith.constant 0 : i32
    return %arg0, %c0_i32 : i32, i32
  }
  func.func @transform_1(%arg0: i32) -> (i32, i32) {
    %c0_i32 = arith.constant 0 : i32
    %c0_i32_0 = arith.constant 0 : i32
    %c0_i32_1 = arith.constant 0 : i32
    return %c0_i32, %c0_i32_0 : i32, i32
  }
  func.func @transform_2(%arg0: i32) -> (i32, i32) {
    %c0_i32 = arith.constant 0 : i32
    %c0_i32_0 = arith.constant 0 : i32
    %c0_i32_1 = arith.constant 0 : i32
    return %c0_i32, %c0_i32_0 : i32, i32
  }
  func.func @transform_3(%arg0: i32) -> (i32, i32) {
    %c0_i32 = arith.constant 0 : i32
    %c0_i32_0 = arith.constant 0 : i32
    %c0_i32_1 = arith.constant 0 : i32
    return %c0_i32, %c0_i32_0 : i32, i32
  }
  func.func @transform_4(%arg0: i32) -> (i32, i32) {
    %c0_i32 = arith.constant 0 : i32
    %c0_i32_0 = arith.constant 0 : i32
    %c0_i32_1 = arith.constant 0 : i32
    return %c0_i32, %c0_i32_0 : i32, i32
  }
  func.func @transform_5(%arg0: i32) -> (i32, i32) {
    %c0_i32 = arith.constant 0 : i32
    %c0_i32_0 = arith.constant 0 : i32
    %c0_i32_1 = arith.constant 0 : i32
    return %c0_i32, %c0_i32_0 : i32, i32
  }
  func.func @transform_6(%arg0: i32) -> (i32, i32) {
    %c0_i32 = arith.constant 0 : i32
    %c0_i32_0 = arith.constant 0 : i32
    %c0_i32_1 = arith.constant 0 : i32
    return %c0_i32, %c0_i32_0 : i32, i32
  }
  func.func @transform_7(%arg0: i32) -> (i32, i32) {
    %c0_i32 = arith.constant 0 : i32
    %c0_i32_0 = arith.constant 0 : i32
    return %arg0, %c0_i32 : i32, i32
  }
}

module attributes {stable_mosaic.version = 11 : i64} {
  func.func @_attn_block_kernel(%arg0: i32, %arg1: memref<1x16x32xbf16, #tpu.memory_space<vmem>>, %arg2: memref<1x32xf32, #tpu.memory_space<vmem>>, %arg3: memref<1x32xf32, #tpu.memory_space<vmem>>, %arg4: memref<32x96xbf16, #tpu.memory_space<vmem>>, %arg5: memref<1x96xf32, #tpu.memory_space<vmem>>, %arg6: memref<32x32xbf16, #tpu.memory_space<vmem>>, %arg7: memref<1x32xf32, #tpu.memory_space<vmem>>, %arg8: memref<16x16xf32, #tpu.memory_space<vmem>>, %arg9: memref<1x16x32xbf16, #tpu.memory_space<vmem>>) attributes {dimension_semantics = [#tpu.dimension_semantics<parallel>], iteration_bounds = array<i64: 3>, scalar_prefetch = 0 : i64, scratch_operands = 0 : i64, tpu.core_type = #tpu.core_type<tc>, window_params = [{transform_indices = @transform_0, window_bounds = array<i64: 1, 16, 32>}, {pipeline_mode = #tpu.pipeline_mode<synchronous>, transform_indices = @transform_1, window_bounds = array<i64: 1, 32>}, {pipeline_mode = #tpu.pipeline_mode<synchronous>, transform_indices = @transform_2, window_bounds = array<i64: 1, 32>}, {pipeline_mode = #tpu.pipeline_mode<synchronous>, transform_indices = @transform_3, window_bounds = array<i64: 32, 96>}, {pipeline_mode = #tpu.pipeline_mode<synchronous>, transform_indices = @transform_4, window_bounds = array<i64: 1, 96>}, {pipeline_mode = #tpu.pipeline_mode<synchronous>, transform_indices = @transform_5, window_bounds = array<i64: 32, 32>}, {pipeline_mode = #tpu.pipeline_mode<synchronous>, transform_indices = @transform_6, window_bounds = array<i64: 1, 32>}, {pipeline_mode = #tpu.pipeline_mode<synchronous>, transform_indices = @transform_7, window_bounds = array<i64: 16, 16>}, {transform_indices = @transform_8, window_bounds = array<i64: 1, 16, 32>}]} {
    %c0 = arith.constant 0 : index
    %c0_0 = arith.constant 0 : index
    %c0_1 = arith.constant 0 : index
    %0 = vector.load %arg1[%c0, %c0_0, %c0_1] : memref<1x16x32xbf16, #tpu.memory_space<vmem>>, vector<1x16x32xbf16>
    %1 = vector.shape_cast %0 : vector<1x16x32xbf16> to vector<16x32xbf16>
    %2 = arith.extf %1 : vector<16x32xbf16> to vector<16x32xf32>
    %cst = arith.constant dense<0.000000e+00> : vector<16xf32>
    %3 = vector.multi_reduction <add>, %2, %cst [1] : vector<16x32xf32> to vector<16xf32>
    %4 = vector.shape_cast %3 : vector<16xf32> to vector<16x1xf32>
    %cst_2 = arith.constant 3.200000e+01 : f32
    %5 = vector.broadcast %cst_2 : f32 to vector<16x1xf32>
    %6 = arith.divf %4, %5 : vector<16x1xf32>
    %7 = vector.broadcast %6 : vector<16x1xf32> to vector<16x32xf32>
    %8 = arith.subf %2, %7 : vector<16x32xf32>
    %9 = arith.mulf %8, %8 : vector<16x32xf32>
    %cst_3 = arith.constant dense<0.000000e+00> : vector<16xf32>
    %10 = vector.multi_reduction <add>, %9, %cst_3 [1] : vector<16x32xf32> to vector<16xf32>
    %11 = vector.shape_cast %10 : vector<16xf32> to vector<16x1xf32>
    %cst_4 = arith.constant 3.200000e+01 : f32
    %12 = vector.broadcast %cst_4 : f32 to vector<16x1xf32>
    %13 = arith.divf %11, %12 : vector<16x1xf32>
    %14 = vector.broadcast %6 : vector<16x1xf32> to vector<16x32xf32>
    %15 = arith.subf %2, %14 : vector<16x32xf32>
    %cst_5 = arith.constant 9.99999974E-6 : f32
    %16 = vector.broadcast %cst_5 : f32 to vector<16x1xf32>
    %17 = arith.addf %13, %16 : vector<16x1xf32>
    %18 = math.rsqrt %17 : vector<16x1xf32>
    %19 = vector.broadcast %18 : vector<16x1xf32> to vector<16x32xf32>
    %20 = arith.mulf %15, %19 : vector<16x32xf32>
    %c0_6 = arith.constant 0 : index
    %c0_7 = arith.constant 0 : index
    %21 = vector.load %arg2[%c0_6, %c0_7] : memref<1x32xf32, #tpu.memory_space<vmem>>, vector<1x32xf32>
    %22 = vector.broadcast %21 : vector<1x32xf32> to vector<16x32xf32>
    %23 = arith.mulf %20, %22 : vector<16x32xf32>
    %c0_8 = arith.constant 0 : index
    %c0_9 = arith.constant 0 : index
    %24 = vector.load %arg3[%c0_8, %c0_9] : memref<1x32xf32, #tpu.memory_space<vmem>>, vector<1x32xf32>
    %25 = vector.broadcast %24 : vector<1x32xf32> to vector<16x32xf32>
    %26 = arith.addf %23, %25 : vector<16x32xf32>
    %27 = arith.truncf %26 : vector<16x32xf32> to vector<16x32xbf16>
    %c0_10 = arith.constant 0 : index
    %c0_11 = arith.constant 0 : index
    %28 = vector.load %arg4[%c0_10, %c0_11] : memref<32x96xbf16, #tpu.memory_space<vmem>>, vector<32x96xbf16>
    %cst_12 = arith.constant dense<0.000000e+00> : vector<16x96xf32>
    %29 = tpu.matmul %27, %28, %cst_12 {dimension_numbers = #tpu.dot_dimension_numbers<[1], [0], [0], [1], [0, 0, 1, 1], [], []>} : vector<16x32xbf16>, vector<32x96xbf16>, vector<16x96xf32> -> vector<16x96xf32>
    %c0_13 = arith.constant 0 : index
    %c0_14 = arith.constant 0 : index
    %30 = vector.load %arg5[%c0_13, %c0_14] : memref<1x96xf32, #tpu.memory_space<vmem>>, vector<1x96xf32>
    %31 = vector.broadcast %30 : vector<1x96xf32> to vector<16x96xf32>
    %32 = arith.addf %29, %31 : vector<16x96xf32>
    %c0_15 = arith.constant 0 : index
    %c0_16 = arith.constant 0 : index
    %33 = vector.load %arg7[%c0_15, %c0_16] : memref<1x32xf32, #tpu.memory_space<vmem>>, vector<1x32xf32>
    %34 = vector.broadcast %33 : vector<1x32xf32> to vector<16x32xf32>
    %35 = arith.addf %2, %34 : vector<16x32xf32>
    %36 = vector.extract_strided_slice %32 {offsets = [0, 0], sizes = [16, 8], strides = [1, 1]} : vector<16x96xf32> to vector<16x8xf32>
    %cst_17 = arith.constant 0.353553385 : f32
    %37 = vector.broadcast %cst_17 : f32 to vector<16x8xf32>
    %38 = arith.mulf %36, %37 : vector<16x8xf32>
    %39 = arith.truncf %38 : vector<16x8xf32> to vector<16x8xbf16>
    %40 = vector.extract_strided_slice %32 {offsets = [0, 32], sizes = [16, 8], strides = [1, 1]} : vector<16x96xf32> to vector<16x8xf32>
    %41 = arith.truncf %40 : vector<16x8xf32> to vector<16x8xbf16>
    %42 = vector.extract_strided_slice %32 {offsets = [0, 64], sizes = [16, 8], strides = [1, 1]} : vector<16x96xf32> to vector<16x8xf32>
    %43 = arith.truncf %42 : vector<16x8xf32> to vector<16x8xbf16>
    %cst_18 = arith.constant dense<0.000000e+00> : vector<16x16xf32>
    %44 = tpu.matmul %39, %41, %cst_18 {dimension_numbers = #tpu.dot_dimension_numbers<[1], [1], [0], [0], [0, 0, 1, 0], [], []>} : vector<16x8xbf16>, vector<16x8xbf16>, vector<16x16xf32> -> vector<16x16xf32>
    %c0_19 = arith.constant 0 : index
    %c0_20 = arith.constant 0 : index
    %45 = vector.load %arg8[%c0_19, %c0_20] : memref<16x16xf32, #tpu.memory_space<vmem>>, vector<16x16xf32>
    %46 = arith.addf %44, %45 : vector<16x16xf32>
    %cst_21 = arith.constant dense<0xFF800000> : vector<16xf32>
    %47 = vector.multi_reduction <maximumf>, %46, %cst_21 [1] : vector<16x16xf32> to vector<16xf32>
    %48 = vector.shape_cast %47 : vector<16xf32> to vector<16x1xf32>
    %49 = vector.broadcast %48 : vector<16x1xf32> to vector<16x16xf32>
    %50 = arith.subf %46, %49 : vector<16x16xf32>
    %51 = math.exp %50 : vector<16x16xf32>
    %cst_22 = arith.constant dense<0.000000e+00> : vector<16xf32>
    %52 = vector.multi_reduction <add>, %51, %cst_22 [1] : vector<16x16xf32> to vector<16xf32>
    %53 = vector.shape_cast %52 : vector<16xf32> to vector<16x1xf32>
    %54 = tpu.reciprocal %53 {approx = true} : vector<16x1xf32> -> vector<16x1xf32>
    %55 = vector.broadcast %54 : vector<16x1xf32> to vector<16x16xf32>
    %56 = arith.mulf %51, %55 : vector<16x16xf32>
    %57 = arith.truncf %56 : vector<16x16xf32> to vector<16x16xbf16>
    %cst_23 = arith.constant dense<0.000000e+00> : vector<16x8xf32>
    %58 = tpu.matmul %57, %43, %cst_23 {dimension_numbers = #tpu.dot_dimension_numbers<[1], [0], [0], [1], [0, 0, 1, 1], [], []>} : vector<16x16xbf16>, vector<16x8xbf16>, vector<16x8xf32> -> vector<16x8xf32>
    %59 = arith.truncf %58 : vector<16x8xf32> to vector<16x8xbf16>
    %c0_24 = arith.constant 0 : index
    %c0_25 = arith.constant 0 : index
    %60 = vector.load %arg6[%c0_24, %c0_25] : memref<32x32xbf16, #tpu.memory_space<vmem>>, vector<8x32xbf16>
    %cst_26 = arith.constant dense<0.000000e+00> : vector<16x32xf32>
    %61 = tpu.matmul %59, %60, %cst_26 {dimension_numbers = #tpu.dot_dimension_numbers<[1], [0], [0], [1], [0, 0, 1, 1], [], []>} : vector<16x8xbf16>, vector<8x32xbf16>, vector<16x32xf32> -> vector<16x32xf32>
    %62 = arith.addf %35, %61 : vector<16x32xf32>
    %63 = vector.extract_strided_slice %32 {offsets = [0, 8], sizes = [16, 8], strides = [1, 1]} : vector<16x96xf32> to vector<16x8xf32>
    %cst_27 = arith.constant 0.353553385 : f32
    %64 = vector.broadcast %cst_27 : f32 to vector<16x8xf32>
    %65 = arith.mulf %63, %64 : vector<16x8xf32>
    %66 = arith.truncf %65 : vector<16x8xf32> to vector<16x8xbf16>
    %67 = vector.extract_strided_slice %32 {offsets = [0, 40], sizes = [16, 8], strides = [1, 1]} : vector<16x96xf32> to vector<16x8xf32>
    %68 = arith.truncf %67 : vector<16x8xf32> to vector<16x8xbf16>
    %69 = vector.extract_strided_slice %32 {offsets = [0, 72], sizes = [16, 8], strides = [1, 1]} : vector<16x96xf32> to vector<16x8xf32>
    %70 = arith.truncf %69 : vector<16x8xf32> to vector<16x8xbf16>
    %cst_28 = arith.constant dense<0.000000e+00> : vector<16x16xf32>
    %71 = tpu.matmul %66, %68, %cst_28 {dimension_numbers = #tpu.dot_dimension_numbers<[1], [1], [0], [0], [0, 0, 1, 0], [], []>} : vector<16x8xbf16>, vector<16x8xbf16>, vector<16x16xf32> -> vector<16x16xf32>
    %c0_29 = arith.constant 0 : index
    %c0_30 = arith.constant 0 : index
    %72 = vector.load %arg8[%c0_29, %c0_30] : memref<16x16xf32, #tpu.memory_space<vmem>>, vector<16x16xf32>
    %73 = arith.addf %71, %72 : vector<16x16xf32>
    %cst_31 = arith.constant dense<0xFF800000> : vector<16xf32>
    %74 = vector.multi_reduction <maximumf>, %73, %cst_31 [1] : vector<16x16xf32> to vector<16xf32>
    %75 = vector.shape_cast %74 : vector<16xf32> to vector<16x1xf32>
    %76 = vector.broadcast %75 : vector<16x1xf32> to vector<16x16xf32>
    %77 = arith.subf %73, %76 : vector<16x16xf32>
    %78 = math.exp %77 : vector<16x16xf32>
    %cst_32 = arith.constant dense<0.000000e+00> : vector<16xf32>
    %79 = vector.multi_reduction <add>, %78, %cst_32 [1] : vector<16x16xf32> to vector<16xf32>
    %80 = vector.shape_cast %79 : vector<16xf32> to vector<16x1xf32>
    %81 = tpu.reciprocal %80 {approx = true} : vector<16x1xf32> -> vector<16x1xf32>
    %82 = vector.broadcast %81 : vector<16x1xf32> to vector<16x16xf32>
    %83 = arith.mulf %78, %82 : vector<16x16xf32>
    %84 = arith.truncf %83 : vector<16x16xf32> to vector<16x16xbf16>
    %cst_33 = arith.constant dense<0.000000e+00> : vector<16x8xf32>
    %85 = tpu.matmul %84, %70, %cst_33 {dimension_numbers = #tpu.dot_dimension_numbers<[1], [0], [0], [1], [0, 0, 1, 1], [], []>} : vector<16x16xbf16>, vector<16x8xbf16>, vector<16x8xf32> -> vector<16x8xf32>
    %86 = arith.truncf %85 : vector<16x8xf32> to vector<16x8xbf16>
    %c8 = arith.constant 8 : index
    %c0_34 = arith.constant 0 : index
    %87 = vector.load %arg6[%c8, %c0_34] : memref<32x32xbf16, #tpu.memory_space<vmem>>, vector<8x32xbf16>
    %cst_35 = arith.constant dense<0.000000e+00> : vector<16x32xf32>
    %88 = tpu.matmul %86, %87, %cst_35 {dimension_numbers = #tpu.dot_dimension_numbers<[1], [0], [0], [1], [0, 0, 1, 1], [], []>} : vector<16x8xbf16>, vector<8x32xbf16>, vector<16x32xf32> -> vector<16x32xf32>
    %89 = arith.addf %62, %88 : vector<16x32xf32>
    %90 = vector.extract_strided_slice %32 {offsets = [0, 16], sizes = [16, 8], strides = [1, 1]} : vector<16x96xf32> to vector<16x8xf32>
    %cst_36 = arith.constant 0.353553385 : f32
    %91 = vector.broadcast %cst_36 : f32 to vector<16x8xf32>
    %92 = arith.mulf %90, %91 : vector<16x8xf32>
    %93 = arith.truncf %92 : vector<16x8xf32> to vector<16x8xbf16>
    %94 = vector.extract_strided_slice %32 {offsets = [0, 48], sizes = [16, 8], strides = [1, 1]} : vector<16x96xf32> to vector<16x8xf32>
    %95 = arith.truncf %94 : vector<16x8xf32> to vector<16x8xbf16>
    %96 = vector.extract_strided_slice %32 {offsets = [0, 80], sizes = [16, 8], strides = [1, 1]} : vector<16x96xf32> to vector<16x8xf32>
    %97 = arith.truncf %96 : vector<16x8xf32> to vector<16x8xbf16>
    %cst_37 = arith.constant dense<0.000000e+00> : vector<16x16xf32>
    %98 = tpu.matmul %93, %95, %cst_37 {dimension_numbers = #tpu.dot_dimension_numbers<[1], [1], [0], [0], [0, 0, 1, 0], [], []>} : vector<16x8xbf16>, vector<16x8xbf16>, vector<16x16xf32> -> vector<16x16xf32>
    %c0_38 = arith.constant 0 : index
    %c0_39 = arith.constant 0 : index
    %99 = vector.load %arg8[%c0_38, %c0_39] : memref<16x16xf32, #tpu.memory_space<vmem>>, vector<16x16xf32>
    %100 = arith.addf %98, %99 : vector<16x16xf32>
    %cst_40 = arith.constant dense<0xFF800000> : vector<16xf32>
    %101 = vector.multi_reduction <maximumf>, %100, %cst_40 [1] : vector<16x16xf32> to vector<16xf32>
    %102 = vector.shape_cast %101 : vector<16xf32> to vector<16x1xf32>
    %103 = vector.broadcast %102 : vector<16x1xf32> to vector<16x16xf32>
    %104 = arith.subf %100, %103 : vector<16x16xf32>
    %105 = math.exp %104 : vector<16x16xf32>
    %cst_41 = arith.constant dense<0.000000e+00> : vector<16xf32>
    %106 = vector.multi_reduction <add>, %105, %cst_41 [1] : vector<16x16xf32> to vector<16xf32>
    %107 = vector.shape_cast %106 : vector<16xf32> to vector<16x1xf32>
    %108 = tpu.reciprocal %107 {approx = true} : vector<16x1xf32> -> vector<16x1xf32>
    %109 = vector.broadcast %108 : vector<16x1xf32> to vector<16x16xf32>
    %110 = arith.mulf %105, %109 : vector<16x16xf32>
    %111 = arith.truncf %110 : vector<16x16xf32> to vector<16x16xbf16>
    %cst_42 = arith.constant dense<0.000000e+00> : vector<16x8xf32>
    %112 = tpu.matmul %111, %97, %cst_42 {dimension_numbers = #tpu.dot_dimension_numbers<[1], [0], [0], [1], [0, 0, 1, 1], [], []>} : vector<16x16xbf16>, vector<16x8xbf16>, vector<16x8xf32> -> vector<16x8xf32>
    %113 = arith.truncf %112 : vector<16x8xf32> to vector<16x8xbf16>
    %c16 = arith.constant 16 : index
    %c0_43 = arith.constant 0 : index
    %114 = vector.load %arg6[%c16, %c0_43] : memref<32x32xbf16, #tpu.memory_space<vmem>>, vector<8x32xbf16>
    %cst_44 = arith.constant dense<0.000000e+00> : vector<16x32xf32>
    %115 = tpu.matmul %113, %114, %cst_44 {dimension_numbers = #tpu.dot_dimension_numbers<[1], [0], [0], [1], [0, 0, 1, 1], [], []>} : vector<16x8xbf16>, vector<8x32xbf16>, vector<16x32xf32> -> vector<16x32xf32>
    %116 = arith.addf %89, %115 : vector<16x32xf32>
    %117 = vector.extract_strided_slice %32 {offsets = [0, 24], sizes = [16, 8], strides = [1, 1]} : vector<16x96xf32> to vector<16x8xf32>
    %cst_45 = arith.constant 0.353553385 : f32
    %118 = vector.broadcast %cst_45 : f32 to vector<16x8xf32>
    %119 = arith.mulf %117, %118 : vector<16x8xf32>
    %120 = arith.truncf %119 : vector<16x8xf32> to vector<16x8xbf16>
    %121 = vector.extract_strided_slice %32 {offsets = [0, 56], sizes = [16, 8], strides = [1, 1]} : vector<16x96xf32> to vector<16x8xf32>
    %122 = arith.truncf %121 : vector<16x8xf32> to vector<16x8xbf16>
    %123 = vector.extract_strided_slice %32 {offsets = [0, 88], sizes = [16, 8], strides = [1, 1]} : vector<16x96xf32> to vector<16x8xf32>
    %124 = arith.truncf %123 : vector<16x8xf32> to vector<16x8xbf16>
    %cst_46 = arith.constant dense<0.000000e+00> : vector<16x16xf32>
    %125 = tpu.matmul %120, %122, %cst_46 {dimension_numbers = #tpu.dot_dimension_numbers<[1], [1], [0], [0], [0, 0, 1, 0], [], []>} : vector<16x8xbf16>, vector<16x8xbf16>, vector<16x16xf32> -> vector<16x16xf32>
    %c0_47 = arith.constant 0 : index
    %c0_48 = arith.constant 0 : index
    %126 = vector.load %arg8[%c0_47, %c0_48] : memref<16x16xf32, #tpu.memory_space<vmem>>, vector<16x16xf32>
    %127 = arith.addf %125, %126 : vector<16x16xf32>
    %cst_49 = arith.constant dense<0xFF800000> : vector<16xf32>
    %128 = vector.multi_reduction <maximumf>, %127, %cst_49 [1] : vector<16x16xf32> to vector<16xf32>
    %129 = vector.shape_cast %128 : vector<16xf32> to vector<16x1xf32>
    %130 = vector.broadcast %129 : vector<16x1xf32> to vector<16x16xf32>
    %131 = arith.subf %127, %130 : vector<16x16xf32>
    %132 = math.exp %131 : vector<16x16xf32>
    %cst_50 = arith.constant dense<0.000000e+00> : vector<16xf32>
    %133 = vector.multi_reduction <add>, %132, %cst_50 [1] : vector<16x16xf32> to vector<16xf32>
    %134 = vector.shape_cast %133 : vector<16xf32> to vector<16x1xf32>
    %135 = tpu.reciprocal %134 {approx = true} : vector<16x1xf32> -> vector<16x1xf32>
    %136 = vector.broadcast %135 : vector<16x1xf32> to vector<16x16xf32>
    %137 = arith.mulf %132, %136 : vector<16x16xf32>
    %138 = arith.truncf %137 : vector<16x16xf32> to vector<16x16xbf16>
    %cst_51 = arith.constant dense<0.000000e+00> : vector<16x8xf32>
    %139 = tpu.matmul %138, %124, %cst_51 {dimension_numbers = #tpu.dot_dimension_numbers<[1], [0], [0], [1], [0, 0, 1, 1], [], []>} : vector<16x16xbf16>, vector<16x8xbf16>, vector<16x8xf32> -> vector<16x8xf32>
    %140 = arith.truncf %139 : vector<16x8xf32> to vector<16x8xbf16>
    %c24 = arith.constant 24 : index
    %c0_52 = arith.constant 0 : index
    %141 = vector.load %arg6[%c24, %c0_52] : memref<32x32xbf16, #tpu.memory_space<vmem>>, vector<8x32xbf16>
    %cst_53 = arith.constant dense<0.000000e+00> : vector<16x32xf32>
    %142 = tpu.matmul %140, %141, %cst_53 {dimension_numbers = #tpu.dot_dimension_numbers<[1], [0], [0], [1], [0, 0, 1, 1], [], []>} : vector<16x8xbf16>, vector<8x32xbf16>, vector<16x32xf32> -> vector<16x32xf32>
    %143 = arith.addf %116, %142 : vector<16x32xf32>
    %144 = arith.truncf %143 : vector<16x32xf32> to vector<16x32xbf16>
    %c0_54 = arith.constant 0 : index
    %c0_55 = arith.constant 0 : index
    %c0_56 = arith.constant 0 : index
    %145 = vector.load %arg9[%c0_54, %c0_55, %c0_56] : memref<1x16x32xbf16, #tpu.memory_space<vmem>>, vector<1x16x32xbf16>
    %146 = vector.shape_cast %145 : vector<1x16x32xbf16> to vector<16x32xbf16>
    %147 = vector.shape_cast %144 : vector<16x32xbf16> to vector<1x16x32xbf16>
    tpu.vector_store %arg9[%c0_54, %c0_55, %c0_56], %147 {strides = array<i32>} : memref<1x16x32xbf16, #tpu.memory_space<vmem>>, vector<1x16x32xbf16>,
    return
  }
  func.func @transform_0(%arg0: i32) -> (i32, i32, i32) {
    %c0_i32 = arith.constant 0 : i32
    %c0_i32_0 = arith.constant 0 : i32
    %c0_i32_1 = arith.constant 0 : i32
    return %arg0, %c0_i32, %c0_i32_0 : i32, i32, i32
  }
  func.func @transform_1(%arg0: i32) -> (i32, i32) {
    %c0_i32 = arith.constant 0 : i32
    %c0_i32_0 = arith.constant 0 : i32
    %c0_i32_1 = arith.constant 0 : i32
    return %c0_i32, %c0_i32_0 : i32, i32
  }
  func.func @transform_2(%arg0: i32) -> (i32, i32) {
    %c0_i32 = arith.constant 0 : i32
    %c0_i32_0 = arith.constant 0 : i32
    %c0_i32_1 = arith.constant 0 : i32
    return %c0_i32, %c0_i32_0 : i32, i32
  }
  func.func @transform_3(%arg0: i32) -> (i32, i32) {
    %c0_i32 = arith.constant 0 : i32
    %c0_i32_0 = arith.constant 0 : i32
    %c0_i32_1 = arith.constant 0 : i32
    return %c0_i32, %c0_i32_0 : i32, i32
  }
  func.func @transform_4(%arg0: i32) -> (i32, i32) {
    %c0_i32 = arith.constant 0 : i32
    %c0_i32_0 = arith.constant 0 : i32
    %c0_i32_1 = arith.constant 0 : i32
    return %c0_i32, %c0_i32_0 : i32, i32
  }
  func.func @transform_5(%arg0: i32) -> (i32, i32) {
    %c0_i32 = arith.constant 0 : i32
    %c0_i32_0 = arith.constant 0 : i32
    %c0_i32_1 = arith.constant 0 : i32
    return %c0_i32, %c0_i32_0 : i32, i32
  }
  func.func @transform_6(%arg0: i32) -> (i32, i32) {
    %c0_i32 = arith.constant 0 : i32
    %c0_i32_0 = arith.constant 0 : i32
    %c0_i32_1 = arith.constant 0 : i32
    return %c0_i32, %c0_i32_0 : i32, i32
  }
  func.func @transform_7(%arg0: i32) -> (i32, i32) {
    %c0_i32 = arith.constant 0 : i32
    %c0_i32_0 = arith.constant 0 : i32
    %c0_i32_1 = arith.constant 0 : i32
    return %c0_i32, %c0_i32_0 : i32, i32
  }
  func.func @transform_8(%arg0: i32) -> (i32, i32, i32) {
    %c0_i32 = arith.constant 0 : i32
    %c0_i32_0 = arith.constant 0 : i32
    %c0_i32_1 = arith.constant 0 : i32
    return %arg0, %c0_i32, %c0_i32_0 : i32, i32, i32
  }
}

module attributes {stable_mosaic.version = 11 : i64} {
  func.func @_layernorm_kernel(%arg0: i32, %arg1: memref<48x32xbf16, #tpu.memory_space<vmem>>, %arg2: memref<1x32xf32, #tpu.memory_space<vmem>>, %arg3: memref<1x32xf32, #tpu.memory_space<vmem>>, %arg4: memref<48x32xbf16, #tpu.memory_space<vmem>>) attributes {dimension_semantics = [#tpu.dimension_semantics<parallel>], iteration_bounds = array<i64: 1>, scalar_prefetch = 0 : i64, scratch_operands = 0 : i64, tpu.core_type = #tpu.core_type<tc>, window_params = [{transform_indices = @transform_0, window_bounds = array<i64: 48, 32>}, {pipeline_mode = #tpu.pipeline_mode<synchronous>, transform_indices = @transform_1, window_bounds = array<i64: 1, 32>}, {pipeline_mode = #tpu.pipeline_mode<synchronous>, transform_indices = @transform_2, window_bounds = array<i64: 1, 32>}, {transform_indices = @transform_3, window_bounds = array<i64: 48, 32>}]} {
    %c0 = arith.constant 0 : index
    %c0_0 = arith.constant 0 : index
    %0 = vector.load %arg1[%c0, %c0_0] : memref<48x32xbf16, #tpu.memory_space<vmem>>, vector<48x32xbf16>
    %1 = arith.extf %0 : vector<48x32xbf16> to vector<48x32xf32>
    %cst = arith.constant dense<0.000000e+00> : vector<48xf32>
    %2 = vector.multi_reduction <add>, %1, %cst [1] : vector<48x32xf32> to vector<48xf32>
    %3 = vector.shape_cast %2 : vector<48xf32> to vector<48x1xf32>
    %cst_1 = arith.constant 3.200000e+01 : f32
    %4 = vector.broadcast %cst_1 : f32 to vector<48x1xf32>
    %5 = arith.divf %3, %4 : vector<48x1xf32>
    %6 = vector.broadcast %5 : vector<48x1xf32> to vector<48x32xf32>
    %7 = arith.subf %1, %6 : vector<48x32xf32>
    %8 = arith.mulf %7, %7 : vector<48x32xf32>
    %cst_2 = arith.constant dense<0.000000e+00> : vector<48xf32>
    %9 = vector.multi_reduction <add>, %8, %cst_2 [1] : vector<48x32xf32> to vector<48xf32>
    %10 = vector.shape_cast %9 : vector<48xf32> to vector<48x1xf32>
    %cst_3 = arith.constant 3.200000e+01 : f32
    %11 = vector.broadcast %cst_3 : f32 to vector<48x1xf32>
    %12 = arith.divf %10, %11 : vector<48x1xf32>
    %13 = vector.broadcast %5 : vector<48x1xf32> to vector<48x32xf32>
    %14 = arith.subf %1, %13 : vector<48x32xf32>
    %cst_4 = arith.constant 9.99999974E-6 : f32
    %15 = vector.broadcast %cst_4 : f32 to vector<48x1xf32>
    %16 = arith.addf %12, %15 : vector<48x1xf32>
    %17 = math.rsqrt %16 : vector<48x1xf32>
    %18 = vector.broadcast %17 : vector<48x1xf32> to vector<48x32xf32>
    %19 = arith.mulf %14, %18 : vector<48x32xf32>
    %c0_5 = arith.constant 0 : index
    %c0_6 = arith.constant 0 : index
    %20 = vector.load %arg2[%c0_5, %c0_6] : memref<1x32xf32, #tpu.memory_space<vmem>>, vector<1x32xf32>
    %21 = vector.broadcast %20 : vector<1x32xf32> to vector<48x32xf32>
    %22 = arith.mulf %19, %21 : vector<48x32xf32>
    %c0_7 = arith.constant 0 : index
    %c0_8 = arith.constant 0 : index
    %23 = vector.load %arg3[%c0_7, %c0_8] : memref<1x32xf32, #tpu.memory_space<vmem>>, vector<1x32xf32>
    %24 = vector.broadcast %23 : vector<1x32xf32> to vector<48x32xf32>
    %25 = arith.addf %22, %24 : vector<48x32xf32>
    %26 = arith.truncf %25 : vector<48x32xf32> to vector<48x32xbf16>
    %c0_9 = arith.constant 0 : index
    %c0_10 = arith.constant 0 : index
    %27 = vector.load %arg4[%c0_9, %c0_10] : memref<48x32xbf16, #tpu.memory_space<vmem>>, vector<48x32xbf16>
    tpu.vector_store %arg4[%c0_9, %c0_10], %26 {strides = array<i32>} : memref<48x32xbf16, #tpu.memory_space<vmem>>, vector<48x32xbf16>,
    return
  }
  func.func @transform_0(%arg0: i32) -> (i32, i32) {
    %c0_i32 = arith.constant 0 : i32
    %c0_i32_0 = arith.constant 0 : i32
    return %arg0, %c0_i32 : i32, i32
  }
  func.func @transform_1(%arg0: i32) -> (i32, i32) {
    %c0_i32 = arith.constant 0 : i32
    %c0_i32_0 = arith.constant 0 : i32
    %c0_i32_1 = arith.constant 0 : i32
    return %c0_i32, %c0_i32_0 : i32, i32
  }
  func.func @transform_2(%arg0: i32) -> (i32, i32) {
    %c0_i32 = arith.constant 0 : i32
    %c0_i32_0 = arith.constant 0 : i32
    %c0_i32_1 = arith.constant 0 : i32
    return %c0_i32, %c0_i32_0 : i32, i32
  }
  func.func @transform_3(%arg0: i32) -> (i32, i32) {
    %c0_i32 = arith.constant 0 : i32
    %c0_i32_0 = arith.constant 0 : i32
    return %arg0, %c0_i32 : i32, i32
  }
}

module attributes {stable_mosaic.version = 11 : i64} {
  func.func @_logits_kernel(%arg0: i32, %arg1: memref<8x16xf32, #tpu.memory_space<vmem>>, %arg2: memref<128x16xf32, #tpu.memory_space<vmem>>, %arg3: memref<1x1xf32, #tpu.memory_space<vmem>>, %arg4: memref<8x128xf32, #tpu.memory_space<vmem>>) attributes {dimension_semantics = [#tpu.dimension_semantics<arbitrary>], iteration_bounds = array<i64: 1>, scalar_prefetch = 0 : i64, scratch_operands = 0 : i64, tpu.core_type = #tpu.core_type<tc>, window_params = [{pipeline_mode = #tpu.pipeline_mode<synchronous>, transform_indices = @transform_0, window_bounds = array<i64: 8, 16>}, {pipeline_mode = #tpu.pipeline_mode<synchronous>, transform_indices = @transform_1, window_bounds = array<i64: 128, 16>}, {pipeline_mode = #tpu.pipeline_mode<synchronous>, transform_indices = @transform_2, window_bounds = array<i64: 1, 1>}, {pipeline_mode = #tpu.pipeline_mode<synchronous>, transform_indices = @transform_3, window_bounds = array<i64: 8, 128>}]} {
    %c0 = arith.constant 0 : index
    %c0_0 = arith.constant 0 : index
    %0 = vector.load %arg1[%c0, %c0_0] : memref<8x16xf32, #tpu.memory_space<vmem>>, vector<8x16xf32>
    %c0_1 = arith.constant 0 : index
    %c0_2 = arith.constant 0 : index
    %1 = vector.load %arg2[%c0_1, %c0_2] : memref<128x16xf32, #tpu.memory_space<vmem>>, vector<128x16xf32>
    %2 = arith.mulf %0, %0 : vector<8x16xf32>
    %cst = arith.constant dense<0.000000e+00> : vector<8xf32>
    %3 = vector.multi_reduction <add>, %2, %cst [1] : vector<8x16xf32> to vector<8xf32>
    %4 = vector.shape_cast %3 : vector<8xf32> to vector<8x1xf32>
    %cst_3 = arith.constant 9.99999996E-13 : f32
    %5 = vector.broadcast %cst_3 : f32 to vector<8x1xf32>
    %6 = arith.addf %4, %5 : vector<8x1xf32>
    %7 = math.rsqrt %6 : vector<8x1xf32>
    %8 = vector.broadcast %7 : vector<8x1xf32> to vector<8x16xf32>
    %9 = arith.mulf %0, %8 : vector<8x16xf32>
    %10 = arith.mulf %1, %1 : vector<128x16xf32>
    %cst_4 = arith.constant dense<0.000000e+00> : vector<128xf32>
    %11 = vector.multi_reduction <add>, %10, %cst_4 [1] : vector<128x16xf32> to vector<128xf32>
    %12 = vector.shape_cast %11 : vector<128xf32> to vector<128x1xf32>
    %cst_5 = arith.constant 9.99999996E-13 : f32
    %13 = vector.broadcast %cst_5 : f32 to vector<128x1xf32>
    %14 = arith.addf %12, %13 : vector<128x1xf32>
    %15 = math.rsqrt %14 : vector<128x1xf32>
    %16 = vector.broadcast %15 : vector<128x1xf32> to vector<128x16xf32>
    %17 = arith.mulf %1, %16 : vector<128x16xf32>
    %c0_6 = arith.constant 0 : index
    %c0_7 = arith.constant 0 : index
    %18 = vector.load %arg3[%c0_6, %c0_7] : memref<1x1xf32, #tpu.memory_space<vmem>>, vector<1x1xf32>
    %19 = vector.extract %18[0, 0] : f32 from vector<1x1xf32>
    %20 = math.exp %19 : f32
    %cst_8 = arith.constant dense<0.000000e+00> : vector<8x128xf32>
    %21 = tpu.matmul %9, %17, %cst_8 {dimension_numbers = #tpu.dot_dimension_numbers<[1], [1], [0], [0], [0, 0, 1, 0], [], []>} : vector<8x16xf32>, vector<128x16xf32>, vector<8x128xf32> -> vector<8x128xf32>
    %22 = vector.broadcast %20 : f32 to vector<8x128xf32>
    %23 = arith.mulf %22, %21 : vector<8x128xf32>
    %c0_9 = arith.constant 0 : index
    %c0_10 = arith.constant 0 : index
    %24 = vector.load %arg4[%c0_9, %c0_10] : memref<8x128xf32, #tpu.memory_space<vmem>>, vector<8x128xf32>
    tpu.vector_store %arg4[%c0_9, %c0_10], %23 {strides = array<i32>} : memref<8x128xf32, #tpu.memory_space<vmem>>, vector<8x128xf32>,
    return
  }
  func.func @transform_0(%arg0: i32) -> (i32, i32) {
    %c0_i32 = arith.constant 0 : i32
    %c0_i32_0 = arith.constant 0 : i32
    %c0_i32_1 = arith.constant 0 : i32
    return %c0_i32, %c0_i32_0 : i32, i32
  }
  func.func @transform_1(%arg0: i32) -> (i32, i32) {
    %c0_i32 = arith.constant 0 : i32
    %c0_i32_0 = arith.constant 0 : i32
    %c0_i32_1 = arith.constant 0 : i32
    return %c0_i32, %c0_i32_0 : i32, i32
  }
  func.func @transform_2(%arg0: i32) -> (i32, i32) {
    %c0_i32 = arith.constant 0 : i32
    %c0_i32_0 = arith.constant 0 : i32
    %c0_i32_1 = arith.constant 0 : i32
    return %c0_i32, %c0_i32_0 : i32, i32
  }
  func.func @transform_3(%arg0: i32) -> (i32, i32) {
    %c0_i32 = arith.constant 0 : i32
    %c0_i32_0 = arith.constant 0 : i32
    %c0_i32_1 = arith.constant 0 : i32
    return %c0_i32, %c0_i32_0 : i32, i32
  }
}

module attributes {stable_mosaic.version = 11 : i64} {
  func.func @_matmul_kernel(%arg0: i32, %arg1: i32, %arg2: i32, %arg3: memref<8x128xbf16, #tpu.memory_space<vmem>>, %arg4: memref<128x128xbf16, #tpu.memory_space<vmem>>, %arg5: memref<8x128xf32, #tpu.memory_space<vmem>>, %arg6: memref<8x128xf32, #tpu.memory_space<vmem>>) attributes {dimension_semantics = [#tpu.dimension_semantics<parallel>, #tpu.dimension_semantics<parallel>, #tpu.dimension_semantics<arbitrary>], iteration_bounds = array<i64: 1, 1, 1>, scalar_prefetch = 0 : i64, scratch_operands = 1 : i64, tpu.core_type = #tpu.core_type<tc>, window_params = [{transform_indices = @transform_0, window_bounds = array<i64: 8, 128>}, {transform_indices = @transform_1, window_bounds = array<i64: 128, 128>}, {transform_indices = @transform_2, window_bounds = array<i64: 8, 128>}]} {
    %c0_i32 = arith.constant 0 : i32
    %0 = arith.cmpi eq, %arg2, %c0_i32 : i32
    %1 = arith.extui %0 : i1 to i32
    %c0_i32_0 = arith.constant 0 : i32
    %2 = arith.cmpi ne, %1, %c0_i32_0 : i32
    scf.if %2 {
      %cst_10 = arith.constant 0.000000e+00 : f32
      %12 = vector.broadcast %cst_10 : f32 to vector<8x128xf32>
      %c0_11 = arith.constant 0 : index
      %c0_12 = arith.constant 0 : index
      %13 = vector.load %arg6[%c0_11, %c0_12] : memref<8x128xf32, #tpu.memory_space<vmem>>, vector<8x128xf32>
      tpu.vector_store %arg6[%c0_11, %c0_12], %12 {strides = array<i32>} : memref<8x128xf32, #tpu.memory_space<vmem>>, vector<8x128xf32>,
    } else {
    }
    %c0 = arith.constant 0 : index
    %c0_1 = arith.constant 0 : index
    %3 = vector.load %arg6[%c0, %c0_1] : memref<8x128xf32, #tpu.memory_space<vmem>>, vector<8x128xf32>
    %c0_2 = arith.constant 0 : index
    %c0_3 = arith.constant 0 : index
    %4 = vector.load %arg3[%c0_2, %c0_3] : memref<8x128xbf16, #tpu.memory_space<vmem>>, vector<8x128xbf16>
    %c0_4 = arith.constant 0 : index
    %c0_5 = arith.constant 0 : index
    %5 = vector.load %arg4[%c0_4, %c0_5] : memref<128x128xbf16, #tpu.memory_space<vmem>>, vector<128x128xbf16>
    %cst = arith.constant dense<0.000000e+00> : vector<8x128xf32>
    %6 = tpu.matmul %4, %5, %cst {dimension_numbers = #tpu.dot_dimension_numbers<[1], [0], [0], [1], [0, 0, 1, 1], [], []>} : vector<8x128xbf16>, vector<128x128xbf16>, vector<8x128xf32> -> vector<8x128xf32>
    %7 = arith.addf %3, %6 : vector<8x128xf32>
    %c0_6 = arith.constant 0 : index
    %c0_7 = arith.constant 0 : index
    %8 = vector.load %arg6[%c0_6, %c0_7] : memref<8x128xf32, #tpu.memory_space<vmem>>, vector<8x128xf32>
    tpu.vector_store %arg6[%c0_6, %c0_7], %7 {strides = array<i32>} : memref<8x128xf32, #tpu.memory_space<vmem>>, vector<8x128xf32>,
    %c0_i32_8 = arith.constant 0 : i32
    %9 = arith.cmpi eq, %arg2, %c0_i32_8 : i32
    %10 = arith.extui %9 : i1 to i32
    %c0_i32_9 = arith.constant 0 : i32
    %11 = arith.cmpi ne, %10, %c0_i32_9 : i32
    scf.if %11 {
      %c0_10 = arith.constant 0 : index
      %c0_11 = arith.constant 0 : index
      %12 = vector.load %arg6[%c0_10, %c0_11] : memref<8x128xf32, #tpu.memory_space<vmem>>, vector<8x128xf32>
      %c0_12 = arith.constant 0 : index
      %c0_13 = arith.constant 0 : index
      %13 = vector.load %arg5[%c0_12, %c0_13] : memref<8x128xf32, #tpu.memory_space<vmem>>, vector<8x128xf32>
      tpu.vector_store %arg5[%c0_12, %c0_13], %12 {strides = array<i32>} : memref<8x128xf32, #tpu.memory_space<vmem>>, vector<8x128xf32>,
    } else {
    }
    return
  }
  func.func @transform_0(%arg0: i32, %arg1: i32, %arg2: i32) -> (i32, i32) {
    %c0_i32 = arith.constant 0 : i32
    return %arg0, %arg2 : i32, i32
  }
  func.func @transform_1(%arg0: i32, %arg1: i32, %arg2: i32) -> (i32, i32) {
    %c0_i32 = arith.constant 0 : i32
    return %arg2, %arg1 : i32, i32
  }
  func.func @transform_2(%arg0: i32, %arg1: i32, %arg2: i32) -> (i32, i32) {
    %c0_i32 = arith.constant 0 : i32
    return %arg0, %arg1 : i32, i32
  }
}

</mosaic_0001>

<llo_original>
// kernel: _lambda_.20
$region0: #{_lambda_.20}
  #allocation0 [shape = 'u32[]', space=smem, size = 0x4, offset = 0x4, fixed_abs, tag = 'smem constant byte address 0x4 - core index']
  #allocation1 [shape = 'u32[144,128]{1,0:T(1,128)}', space=vmem, size = 0x12000, scoped, tag = 'internal scratch']
  #allocation2 [shape = 'f32[32,128]{1,0:T(8,128)}', space=vmem, size = 0x4000, scoped, tag = 'scratch operand']
  %s0 = inlined_call_operand.vmem [shape: bf16[32,128], index: 0, kind: input, shape index: {}]
  %s1 = inlined_call_operand.vmem [shape: bf16[128,128], index: 1, kind: input, shape index: {}]
  %s2 = inlined_call_operand.vmem [shape: bf16[32,128], index: 2, kind: output, shape index: {}]
  %s3 = sld [smem:[#allocation0]]
  $region26: #{_lambda_.20} parent=0
    _
  %s5 = ssub.s32 1, %s3
  %s6 = scalar_select 0, %s5, %s3
  // Predicated region
  $region2: #{_lambda_.20} parent=0 // pred_check
    _
  $region3: #{_lambda_.20} parent=0 // pred_check_branch
    %8 = sbr.rel (0) target = $region5
  $region4: #{_lambda_.20} parent=0 // pred_region
    _
  $region5: #{_lambda_.20} parent=0 // pred_fallthru
    _
  // Predicated region
  $region6: #{_lambda_.20} parent=0 // pred_check
    _
  $region7: #{_lambda_.20} parent=0 // pred_check_branch
    %10 = sbr.rel (0) target = $region9
  $region8: #{_lambda_.20} parent=0 // pred_region
    _
  $region9: #{_lambda_.20} parent=0 // pred_fallthru
    _
  %p12 = scmp.eq.s32.totalorder 0, 0
  // Predicated region
  $region10: #{_lambda_.20} parent=0 // pred_check
    %p13 = pneg %p12
  $region11: #{_lambda_.20} parent=0 // pred_check_branch
    %15 = sbr.rel (%p13) target = $region13
  $region12: #{_lambda_.20} parent=0 // pred_region
    %16 = vst [vmem:[#allocation2] sm:$0xff] 0.0
    %17 = vst [vmem:[#allocation2 + $0x8] sm:$0xff] 0.0
    %18 = vst [vmem:[#allocation2 + $0x10] sm:$0xff] 0.0
    %19 = vst [vmem:[#allocation2 + $0x18] sm:$0xff] 0.0
  $region13: #{_lambda_.20} parent=0 // pred_fallthru
    _
  %v20 = vld [vmem:[#allocation2] sm:$0xff]
  %v21 = vld [vmem:[#allocation2 + $0x8] sm:$0xff]
  %v22 = vld [vmem:[#allocation2 + $0x10] sm:$0xff]
  %v23 = vld [vmem:[#allocation2 + $0x18] sm:$0xff]
  %v24 = vld [vmem:[%s0] sm:$0xf]
  %v25 = vld [vmem:[%s0 + $0x4] sm:$0xf]
  %v26 = vld [vmem:[%s0 + $0x8] sm:$0xf]
  %v27 = vld [vmem:[%s0 + $0xc] sm:$0xf]
  %v28 = vld [vmem:[%s1] sm:$0xf]
  %v29 = vld [vmem:[%s1 + $0x4] sm:$0xf]
  %v30 = vld [vmem:[%s1 + $0x8] sm:$0xf]
  %v31 = vld [vmem:[%s1 + $0xc] sm:$0xf]
  %v32 = vld [vmem:[%s1 + $0x10] sm:$0xf]
  %v33 = vld [vmem:[%s1 + $0x14] sm:$0xf]
  %v34 = vld [vmem:[%s1 + $0x18] sm:$0xf]
  %v35 = vld [vmem:[%s1 + $0x1c] sm:$0xf]
  %v36 = vld [vmem:[%s1 + $0x20] sm:$0xf]
  %v37 = vld [vmem:[%s1 + $0x24] sm:$0xf]
  %v38 = vld [vmem:[%s1 + $0x28] sm:$0xf]
  %v39 = vld [vmem:[%s1 + $0x2c] sm:$0xf]
  %v40 = vld [vmem:[%s1 + $0x30] sm:$0xf]
  %v41 = vld [vmem:[%s1 + $0x34] sm:$0xf]
  %v42 = vld [vmem:[%s1 + $0x38] sm:$0xf]
  %v43 = vld [vmem:[%s1 + $0x3c] sm:$0xf]
  %v48 = vunpack.c.l.b16 %v24
  %v49 = vunpack.c.l.b16 %v25
  %v50 = vunpack.c.l.b16 %v26
  %v51 = vunpack.c.l.b16 %v27
  %v52 = vpack.c.b16 %v49, %v48
  %v53 = vpack.c.b16 %v51, %v50
  %v72 = vunpack.c.l.b16 %v28
  %v73 = vunpack.c.l.b16 %v29
  %v74 = vunpack.c.l.b16 %v30
  %v75 = vunpack.c.l.b16 %v31
  %v76 = vunpack.c.l.b16 %v32
  %v77 = vunpack.c.l.b16 %v33
  %v78 = vunpack.c.l.b16 %v34
  %v79 = vunpack.c.l.b16 %v35
  %v80 = vunpack.c.l.b16 %v36
  %v81 = vunpack.c.l.b16 %v37
  %v82 = vunpack.c.l.b16 %v38
  %v83 = vunpack.c.l.b16 %v39
  %v84 = vunpack.c.l.b16 %v40
  %v85 = vunpack.c.l.b16 %v41
  %v86 = vunpack.c.l.b16 %v42
  %v87 = vunpack.c.l.b16 %v43
  %v88 = vpack.c.b16 %v73, %v72
  %v89 = vpack.c.b16 %v75, %v74
  %v90 = vpack.c.b16 %v77, %v76
  %v91 = vpack.c.b16 %v79, %v78
  %v92 = vpack.c.b16 %v81, %v80
  %v93 = vpack.c.b16 %v83, %v82
  %v94 = vpack.c.b16 %v85, %v84
  %v95 = vpack.c.b16 %v87, %v86
  %104 = vmatprep.subr.bf16.mxu0 0
  %105 = vmatpush1.bf16.msra.mxu0 %v88
  %106 = vmatprep.subr.bf16.mxu0 0
  %107 = vmatpush1.bf16.msra.mxu0 %v89
  %108 = vmatprep.subr.bf16.mxu0 0
  %109 = vmatpush1.bf16.msra.mxu0 %v90
  %110 = vmatprep.subr.bf16.mxu0 0
  %111 = vmatpush1.bf16.msra.mxu0 %v91
  %112 = vmatprep.subr.bf16.mxu0 0
  %113 = vmatpush1.bf16.msra.mxu0 %v92
  %114 = vmatprep.subr.bf16.mxu0 0
  %115 = vmatpush1.bf16.msra.mxu0 %v93
  %116 = vmatprep.subr.bf16.mxu0 0
  %117 = vmatpush1.bf16.msra.mxu0 %v94
  %118 = vmatprep.subr.bf16.mxu0 0
  %119 = vmatpush1.bf16.msra.mxu0 %v95
  %120 = vmatprep.subr.bf16.mxu0 0
  %121 = vmatpush1.bf16.msra.mxu0 0
  %122 = vmatprep.subr.bf16.mxu0 0
  %123 = vmatpush1.bf16.msra.mxu0 0
  %124 = vmatprep.subr.bf16.mxu0 0
  %125 = vmatpush1.bf16.msra.mxu0 0
  %126 = vmatprep.subr.bf16.mxu0 0
  %127 = vmatpush1.bf16.msra.mxu0 0
  %128 = vmatprep.subr.bf16.mxu0 0
  %129 = vmatpush1.bf16.msra.mxu0 0
  %130 = vmatprep.subr.bf16.mxu0 0
  %131 = vmatpush1.bf16.msra.mxu0 0
  %132 = vmatprep.subr.bf16.mxu0 0
  %133 = vmatpush1.bf16.msra.mxu0 0
  %134 = vmatprep.subr.bf16.mxu0 0
  %135 = vmatpush1.bf16.msra.mxu0 0
  %136 = vmatprep.mubr.bf16.mxu0 0
  %137 = vmatmul.mubr.bf16.gmra.mrb[0].mxu0 %v52
  %v138 = vpop.f32.mrb[0].mxu0
  %v139 = vadd.f32 0.0, %v138
  %v140 = vpop.f32.mrb[0].mxu0
  %v141 = vpop.f32.mrb[0].mxu0
  %v142 = vadd.f32 0.0, %v141
  %v143 = vpop.f32.mrb[0].mxu0
  %144 = vmatprep.mubr.bf16.mxu0 0
  %145 = vmatmul.mubr.bf16.gmra.mrb[0].mxu0 %v53
  %v146 = vpop.f32.mrb[0].mxu0
  %v147 = vadd.f32 0.0, %v146
  %v148 = vpop.f32.mrb[0].mxu0
  %v149 = vpop.f32.mrb[0].mxu0
  %v150 = vadd.f32 0.0, %v149
  %v151 = vpop.f32.mrb[0].mxu0
  %152 = vdwg.mxu0
  %v153 = vadd.f32 %v20, %v139
  %v154 = vadd.f32 %v21, %v142
  %v155 = vadd.f32 %v22, %v147
  %v156 = vadd.f32 %v23, %v150
  %157 = vst [vmem:[#allocation2] sm:$0xff] %v153
  %158 = vst [vmem:[#allocation2 + $0x8] sm:$0xff] %v154
  %159 = vst [vmem:[#allocation2 + $0x10] sm:$0xff] %v155
  %160 = vst [vmem:[#allocation2 + $0x18] sm:$0xff] %v156
  // Predicated region
  $region14: #{_lambda_.20} parent=0 // pred_check
    %p161 = pneg %p12
  $region15: #{_lambda_.20} parent=0 // pred_check_branch
    %163 = sbr.rel (%p161) target = $region17
  $region16: #{_lambda_.20} parent=0 // pred_region
    %v164 = vld [vmem:[#allocation2] sm:$0xff]
    %v165 = vld [vmem:[#allocation2 + $0x8] sm:$0xff]
    %v166 = vld [vmem:[#allocation2 + $0x10] sm:$0xff]
    %v167 = vld [vmem:[#allocation2 + $0x18] sm:$0xff]
    %v168 = vpack.c.bf16 %v165, %v164
    %v169 = vpack.c.bf16 %v167, %v166
    %v172 = vunpack.c.l.b16 %v168
    %v173 = vunpack.c.h.b16 %v168
    %v174 = vunpack.c.l.b16 %v169
    %v175 = vunpack.c.h.b16 %v169
    %v176 = vpack.c.b16 %v172, %v172
    %v177 = vpack.c.b16 %v173, %v173
    %v178 = vpack.c.b16 %v174, %v174
    %v179 = vpack.c.b16 %v175, %v175
    %184 = vst [vmem:[%s2] sm:$0xf] %v176
    %185 = vst [vmem:[%s2 + $0x4] sm:$0xf] %v177
    %186 = vst [vmem:[%s2 + $0x8] sm:$0xf] %v178
    %187 = vst [vmem:[%s2 + $0xc] sm:$0xf] %v179
  $region17: #{_lambda_.20} parent=0 // pred_fallthru
    _
  // Predicated region
  $region18: #{_lambda_.20} parent=0 // pred_check
    _
  $region19: #{_lambda_.20} parent=0 // pred_check_branch
    %189 = sbr.rel (0) target = $region21
  $region20: #{_lambda_.20} parent=0 // pred_region
    _
  $region21: #{_lambda_.20} parent=0 // pred_fallthru
    _
  // Predicated region
  $region22: #{_lambda_.20} parent=0 // pred_check
    _
  $region23: #{_lambda_.20} parent=0 // pred_check_branch
    %191 = sbr.rel (0) target = $region25
  $region24: #{_lambda_.20} parent=0 // pred_region
    _
  $region25: #{_lambda_.20} parent=0 // pred_fallthru
    _

// kernel: _lambda_.21
$region0: #{_lambda_.21}
  #allocation0 [shape = 'u32[]', space=smem, size = 0x4, offset = 0x4, fixed_abs, tag = 'smem constant byte address 0x4 - core index']
  #allocation1 [shape = 'u32[144,128]{1,0:T(1,128)}', space=vmem, size = 0x12000, scoped, tag = 'internal scratch']
  %s0 = inlined_call_operand.vmem [shape: f32[38,32], index: 0, kind: input, shape index: {}]
  %s1 = inlined_call_operand.vmem [shape: f32[1,32], index: 1, kind: input, shape index: {}]
  %s2 = inlined_call_operand.vmem [shape: f32[1,32], index: 2, kind: input, shape index: {}]
  %s3 = inlined_call_operand.vmem [shape: bf16[38,32], index: 3, kind: output, shape index: {}]
  %s4 = sld [smem:[#allocation0]]
  $region22: #{_lambda_.21} parent=0
    _
  %s6 = ssub.s32 1, %s4
  %s7 = scalar_select 0, %s6, %s4
  // Predicated region
  $region2: #{_lambda_.21} parent=0 // pred_check
    _
  $region3: #{_lambda_.21} parent=0 // pred_check_branch
    %9 = sbr.rel (0) target = $region5
  $region4: #{_lambda_.21} parent=0 // pred_region
    _
  $region5: #{_lambda_.21} parent=0 // pred_fallthru
    _
  // Predicated region
  $region6: #{_lambda_.21} parent=0 // pred_check
    _
  $region7: #{_lambda_.21} parent=0 // pred_check_branch
    %11 = sbr.rel (0) target = $region9
  $region8: #{_lambda_.21} parent=0 // pred_region
    _
  $region9: #{_lambda_.21} parent=0 // pred_fallthru
    _
  // Predicated region
  $region10: #{_lambda_.21} parent=0 // pred_check
    _
  $region11: #{_lambda_.21} parent=0 // pred_check_branch
    %13 = sbr.rel (0) target = $region13
  $region12: #{_lambda_.21} parent=0 // pred_region
    _
  $region13: #{_lambda_.21} parent=0 // pred_fallthru
    _
  %v14 = vld [vmem:[%s0] sm:$0xff]
  %v15 = vld [vmem:[%s0 + $0x8] sm:$0xff]
  %v16 = vld [vmem:[%s0 + $0x10] sm:$0xff]
  %v17 = vld [vmem:[%s0 + $0x18] sm:$0xff]
  %v18 = vld [vmem:[%s0 + $0x20] sm:$0x3f]
  %vm19 = vcmask 261120
  %v20 = vsel %vm19, %v14, 0.0
  %21 = vadd.xlane.f32.xlu0 %v20
  %v22 = vpop.xlane.xlu0 %21
  %v23 = vsel %vm19, %v15, 0.0
  %24 = vadd.xlane.f32.xlu0 %v23
  %v25 = vpop.xlane.xlu0 %24
  %v26 = vsel %vm19, %v16, 0.0
  %27 = vadd.xlane.f32.xlu0 %v26
  %v28 = vpop.xlane.xlu0 %27
  %v29 = vsel %vm19, %v17, 0.0
  %30 = vadd.xlane.f32.xlu0 %v29
  %v31 = vpop.xlane.xlu0 %30
  %vm32 = vcmask 259072
  %v33 = vsel %vm32, %v18, 0.0
  %34 = vadd.xlane.f32.xlu0 %v33
  %v35 = vpop.xlane.xlu0 %34
  %v36 = vrcp.pop 32.0
  %v37 = vmul.f32 %v22, %v36
  %v38 = vmul.f32 %v25, %v36
  %v39 = vmul.f32 %v28, %v36
  %v40 = vmul.f32 %v31, %v36
  %v41 = vmul.f32 %v35, %v36
  %v42 = vsub.f32 %v14, %v37
  %v43 = vsub.f32 %v15, %v38
  %v44 = vsub.f32 %v16, %v39
  %v45 = vsub.f32 %v17, %v40
  %v46 = vsub.f32 %v18, %v41
  %v47 = vmul.f32 %v42, %v42
  %v48 = vmul.f32 %v43, %v43
  %v49 = vmul.f32 %v44, %v44
  %v50 = vmul.f32 %v45, %v45
  %v51 = vmul.f32 %v46, %v46
  %v52 = vsel %vm19, %v47, 0.0
  %53 = vadd.xlane.f32.xlu0 %v52
  %v54 = vpop.xlane.xlu0 %53
  %v55 = vsel %vm19, %v48, 0.0
  %56 = vadd.xlane.f32.xlu0 %v55
  %v57 = vpop.xlane.xlu0 %56
  %v58 = vsel %vm19, %v49, 0.0
  %59 = vadd.xlane.f32.xlu0 %v58
  %v60 = vpop.xlane.xlu0 %59
  %v61 = vsel %vm19, %v50, 0.0
  %62 = vadd.xlane.f32.xlu0 %v61
  %v63 = vpop.xlane.xlu0 %62
  %v64 = vsel %vm32, %v51, 0.0
  %65 = vadd.xlane.f32.xlu0 %v64
  %v66 = vpop.xlane.xlu0 %65
  %v67 = vmul.f32 %v54, %v36
  %v68 = vmul.f32 %v57, %v36
  %v69 = vmul.f32 %v60, %v36
  %v70 = vmul.f32 %v63, %v36
  %v71 = vmul.f32 %v66, %v36
  %v72 = vadd.f32 %v67, 1e-05
  %v73 = vadd.f32 %v68, 1e-05
  %v74 = vadd.f32 %v69, 1e-05
  %v75 = vadd.f32 %v70, 1e-05
  %v76 = vadd.f32 %v71, 1e-05
  %v77 = vrsqrt.pop %v72
  %v78 = vrsqrt.pop %v73
  %v79 = vrsqrt.pop %v74
  %v80 = vrsqrt.pop %v75
  %v81 = vrsqrt.pop %v76
  %v82 = vmul.f32 %v42, %v77
  %v83 = vmul.f32 %v43, %v78
  %v84 = vmul.f32 %v44, %v79
  %v85 = vmul.f32 %v45, %v80
  %v86 = vmul.f32 %v46, %v81
  %v87 = vld [vmem:[%s1] sm:$0x1]
  %v89 = vlaneseq
  %v90 = vshrl.u32 %v89, 7
  %v91 = vsub.s32 0, %v90
  %v92 = vrot.slane %v87, %v91
  %v94 = vmul.f32 %v82, %v92
  %v95 = vmul.f32 %v83, %v92
  %v96 = vmul.f32 %v84, %v92
  %v97 = vmul.f32 %v85, %v92
  %v98 = vmul.f32 %v86, %v92
  %v99 = vld [vmem:[%s2] sm:$0x1]
  %v101 = vlaneseq
  %v102 = vshrl.u32 %v101, 7
  %v103 = vsub.s32 0, %v102
  %v104 = vrot.slane %v99, %v103
  %v106 = vadd.f32 %v94, %v104
  %v107 = vadd.f32 %v95, %v104
  %v108 = vadd.f32 %v96, %v104
  %v109 = vadd.f32 %v97, %v104
  %v110 = vadd.f32 %v98, %v104
  %v111 = vpack.c.bf16 %v107, %v106
  %v112 = vpack.c.bf16 %v109, %v108
  %v113 = vpack.c.bf16 %v110, %v110
  %v117 = vunpack.c.l.b16 %v111
  %v118 = vunpack.c.h.b16 %v111
  %v119 = vunpack.c.l.b16 %v112
  %v120 = vunpack.c.h.b16 %v112
  %v121 = vunpack.c.l.b16 %v113
  %v122 = vpack.c.b16 %v117, %v117
  %v123 = vpack.c.b16 %v118, %v118
  %v124 = vpack.c.b16 %v119, %v119
  %v125 = vpack.c.b16 %v120, %v120
  %v126 = vpack.c.b16 %v121, %v121
  %vm132 = vcmask 257024
  %133 = vst.msk [vmem:[%s3] sm:$0xf] %vm132, %v122
  %134 = vst.msk [vmem:[%s3 + $0x4] sm:$0xf] %vm132, %v123
  %135 = vst.msk [vmem:[%s3 + $0x8] sm:$0xf] %vm132, %v124
  %136 = vst.msk [vmem:[%s3 + $0xc] sm:$0xf] %vm132, %v125
  %vm137 = vcmask 256000
  %138 = vst.msk [vmem:[%s3 + $0x10] sm:$0x7] %vm137, %v126
  // Predicated region
  $region14: #{_lambda_.21} parent=0 // pred_check
    _
  $region15: #{_lambda_.21} parent=0 // pred_check_branch
    %140 = sbr.rel (0) target = $region17
  $region16: #{_lambda_.21} parent=0 // pred_region
    _
  $region17: #{_lambda_.21} parent=0 // pred_fallthru
    _
  // Predicated region
  $region18: #{_lambda_.21} parent=0 // pred_check
    _
  $region19: #{_lambda_.21} parent=0 // pred_check_branch
    %142 = sbr.rel (0) target = $region21
  $region20: #{_lambda_.21} parent=0 // pred_region
    _
  $region21: #{_lambda_.21} parent=0 // pred_fallthru
    _

// kernel: _lambda_.23
$region0: #{_lambda_.23}
  #allocation0 [shape = 'u32[]', space=smem, size = 0x4, offset = 0x4, fixed_abs, tag = 'smem constant byte address 0x4 - core index']
  #allocation1 [shape = 'u32[144,128]{1,0:T(1,128)}', space=vmem, size = 0x12000, scoped, tag = 'internal scratch']
  %s0 = inlined_call_operand.vmem [shape: bf16[38,32], index: 0, kind: input, shape index: {}]
  %s1 = inlined_call_operand.vmem [shape: f32[1,32], index: 1, kind: input, shape index: {}]
  %s2 = inlined_call_operand.vmem [shape: f32[1,32], index: 2, kind: input, shape index: {}]
  %s3 = inlined_call_operand.vmem [shape: bf16[32,128], index: 3, kind: input, shape index: {}]
  %s4 = inlined_call_operand.vmem [shape: f32[1,128], index: 4, kind: input, shape index: {}]
  %s5 = inlined_call_operand.vmem [shape: bf16[128,32], index: 5, kind: input, shape index: {}]
  %s6 = inlined_call_operand.vmem [shape: f32[1,32], index: 6, kind: input, shape index: {}]
  %s7 = inlined_call_operand.vmem [shape: bf16[38,32], index: 7, kind: output, shape index: {}]
  %s8 = sld [smem:[#allocation0]]
  $region38: #{_lambda_.23} parent=0
    _
  %s10 = ssub.s32 1, %s8
  %s11 = scalar_select 0, %s10, %s8
  // Predicated region
  $region2: #{_lambda_.23} parent=0 // pred_check
    _
  $region3: #{_lambda_.23} parent=0 // pred_check_branch
    %13 = sbr.rel (0) target = $region5
  $region4: #{_lambda_.23} parent=0 // pred_region
    _
  $region5: #{_lambda_.23} parent=0 // pred_fallthru
    _
  // Predicated region
  $region6: #{_lambda_.23} parent=0 // pred_check
    _
  $region7: #{_lambda_.23} parent=0 // pred_check_branch
    %15 = sbr.rel (0) target = $region9
  $region8: #{_lambda_.23} parent=0 // pred_region
    _
  $region9: #{_lambda_.23} parent=0 // pred_fallthru
    _
  // Predicated region
  $region10: #{_lambda_.23} parent=0 // pred_check
    _
  $region11: #{_lambda_.23} parent=0 // pred_check_branch
    %17 = sbr.rel (0) target = $region13
  $region12: #{_lambda_.23} parent=0 // pred_region
    _
  $region13: #{_lambda_.23} parent=0 // pred_fallthru
    _
  // Predicated region
  $region14: #{_lambda_.23} parent=0 // pred_check
    _
  $region15: #{_lambda_.23} parent=0 // pred_check_branch
    %19 = sbr.rel (0) target = $region17
  $region16: #{_lambda_.23} parent=0 // pred_region
    _
  $region17: #{_lambda_.23} parent=0 // pred_fallthru
    _
  // Predicated region
  $region18: #{_lambda_.23} parent=0 // pred_check
    _
  $region19: #{_lambda_.23} parent=0 // pred_check_branch
    %21 = sbr.rel (0) target = $region21
  $region20: #{_lambda_.23} parent=0 // pred_region
    _
  $region21: #{_lambda_.23} parent=0 // pred_fallthru
    _
  // Predicated region
  $region22: #{_lambda_.23} parent=0 // pred_check
    _
  $region23: #{_lambda_.23} parent=0 // pred_check_branch
    %23 = sbr.rel (0) target = $region25
  $region24: #{_lambda_.23} parent=0 // pred_region
    _
  $region25: #{_lambda_.23} parent=0 // pred_fallthru
    _
  // Predicated region
  $region26: #{_lambda_.23} parent=0 // pred_check
    _
  $region27: #{_lambda_.23} parent=0 // pred_check_branch
    %25 = sbr.rel (0) target = $region29
  $region28: #{_lambda_.23} parent=0 // pred_region
    _
  $region29: #{_lambda_.23} parent=0 // pred_fallthru
    _
  %v27 = vld [vmem:[%s0] sm:$0xf]
  %v28 = vld [vmem:[%s0 + $0x4] sm:$0xf]
  %v29 = vld [vmem:[%s0 + $0x8] sm:$0xf]
  %v30 = vld [vmem:[%s0 + $0xc] sm:$0xf]
  %v31 = vld [vmem:[%s0 + $0x10] sm:$0x7]
  %v32 = vunpack.c.l.bf16 %v27
  %v33 = vunpack.c.l.bf16 %v28
  %v34 = vunpack.c.l.bf16 %v29
  %v35 = vunpack.c.l.bf16 %v30
  %v36 = vunpack.c.l.bf16 %v31
  %vm37 = vcmask 261120
  %v38 = vsel %vm37, %v32, 0.0
  %39 = vadd.xlane.f32.xlu0 %v38
  %v40 = vpop.xlane.xlu0 %39
  %v41 = vsel %vm37, %v33, 0.0
  %42 = vadd.xlane.f32.xlu0 %v41
  %v43 = vpop.xlane.xlu0 %42
  %v44 = vsel %vm37, %v34, 0.0
  %45 = vadd.xlane.f32.xlu0 %v44
  %v46 = vpop.xlane.xlu0 %45
  %v47 = vsel %vm37, %v35, 0.0
  %48 = vadd.xlane.f32.xlu0 %v47
  %v49 = vpop.xlane.xlu0 %48
  %vm50 = vcmask 259072
  %v51 = vsel %vm50, %v36, 0.0
  %52 = vadd.xlane.f32.xlu0 %v51
  %v53 = vpop.xlane.xlu0 %52
  %v54 = vrcp.pop 32.0
  %v55 = vmul.f32 %v40, %v54
  %v56 = vmul.f32 %v43, %v54
  %v57 = vmul.f32 %v46, %v54
  %v58 = vmul.f32 %v49, %v54
  %v59 = vmul.f32 %v53, %v54
  %v60 = vsub.f32 %v32, %v55
  %v61 = vsub.f32 %v33, %v56
  %v62 = vsub.f32 %v34, %v57
  %v63 = vsub.f32 %v35, %v58
  %v64 = vsub.f32 %v36, %v59
  %v65 = vmul.f32 %v60, %v60
  %v66 = vmul.f32 %v61, %v61
  %v67 = vmul.f32 %v62, %v62
  %v68 = vmul.f32 %v63, %v63
  %v69 = vmul.f32 %v64, %v64
  %v70 = vsel %vm37, %v65, 0.0
  %71 = vadd.xlane.f32.xlu0 %v70
  %v72 = vpop.xlane.xlu0 %71
  %v73 = vsel %vm37, %v66, 0.0
  %74 = vadd.xlane.f32.xlu0 %v73
  %v75 = vpop.xlane.xlu0 %74
  %v76 = vsel %vm37, %v67, 0.0
  %77 = vadd.xlane.f32.xlu0 %v76
  %v78 = vpop.xlane.xlu0 %77
  %v79 = vsel %vm37, %v68, 0.0
  %80 = vadd.xlane.f32.xlu0 %v79
  %v81 = vpop.xlane.xlu0 %80
  %v82 = vsel %vm50, %v69, 0.0
  %83 = vadd.xlane.f32.xlu0 %v82
  %v84 = vpop.xlane.xlu0 %83
  %v85 = vmul.f32 %v72, %v54
  %v86 = vmul.f32 %v75, %v54
  %v87 = vmul.f32 %v78, %v54
  %v88 = vmul.f32 %v81, %v54
  %v89 = vmul.f32 %v84, %v54
  %v90 = vadd.f32 %v85, 1e-05
  %v91 = vadd.f32 %v86, 1e-05
  %v92 = vadd.f32 %v87, 1e-05
  %v93 = vadd.f32 %v88, 1e-05
  %v94 = vadd.f32 %v89, 1e-05
  %v95 = vrsqrt.pop %v90
  %v96 = vrsqrt.pop %v91
  %v97 = vrsqrt.pop %v92
  %v98 = vrsqrt.pop %v93
  %v99 = vrsqrt.pop %v94
  %v100 = vmul.f32 %v60, %v95
  %v101 = vmul.f32 %v61, %v96
  %v102 = vmul.f32 %v62, %v97
  %v103 = vmul.f32 %v63, %v98
  %v104 = vmul.f32 %v64, %v99
  %v105 = vld [vmem:[%s1] sm:$0x1]
  %v107 = vlaneseq
  %v108 = vshrl.u32 %v107, 7
  %v109 = vsub.s32 0, %v108
  %v110 = vrot.slane %v105, %v109
  %v112 = vmul.f32 %v100, %v110
  %v113 = vmul.f32 %v101, %v110
  %v114 = vmul.f32 %v102, %v110
  %v115 = vmul.f32 %v103, %v110
  %v116 = vmul.f32 %v104, %v110
  %v117 = vld [vmem:[%s2] sm:$0x1]
  %v119 = vlaneseq
  %v120 = vshrl.u32 %v119, 7
  %v121 = vsub.s32 0, %v120
  %v122 = vrot.slane %v117, %v121
  %v124 = vadd.f32 %v112, %v122
  %v125 = vadd.f32 %v113, %v122
  %v126 = vadd.f32 %v114, %v122
  %v127 = vadd.f32 %v115, %v122
  %v128 = vadd.f32 %v116, %v122
  %v129 = vpack.c.bf16 %v125, %v124
  %v130 = vpack.c.bf16 %v127, %v126
  %v131 = vpack.c.bf16 %v128, %v128
  %v132 = vld [vmem:[%s3] sm:$0xf]
  %v133 = vld [vmem:[%s3 + $0x4] sm:$0xf]
  %v134 = vld [vmem:[%s3 + $0x8] sm:$0xf]
  %v135 = vld [vmem:[%s3 + $0xc] sm:$0xf]
  %v136 = vld [vmem:[%s4] sm:$0x1]
  %v138 = vlaneseq
  %v139 = vshrl.u32 %v138, 7
  %v140 = vsub.s32 0, %v139
  %v141 = vrot.slane %v136, %v140
  %v147 = vunpack.c.l.b16 %v132
  %v148 = vunpack.c.l.b16 %v133
  %v149 = vunpack.c.l.b16 %v134
  %v150 = vunpack.c.l.b16 %v135
  %v151 = vpack.c.b16 %v148, %v147
  %v152 = vpack.c.b16 %v150, %v149
  %v156 = vsel %vm37, %v129, 0
  %v159 = vsel %vm37, %v130, 0
  %v162 = vsel %vm37, %v131, 0
  %164 = vmatprep.subr.bf16.mxu0 0
  %165 = vmatpush1.bf16.msra.mxu0 %v151
  %166 = vmatprep.subr.bf16.mxu0 0
  %167 = vmatpush1.bf16.msra.mxu0 %v152
  %168 = vmatprep.subr.bf16.mxu0 0
  %169 = vmatpush1.bf16.msra.mxu0 0
  %170 = vmatprep.subr.bf16.mxu0 0
  %171 = vmatpush1.bf16.msra.mxu0 0
  %172 = vmatprep.subr.bf16.mxu0 0
  %173 = vmatpush1.bf16.msra.mxu0 0
  %174 = vmatprep.subr.bf16.mxu0 0
  %175 = vmatpush1.bf16.msra.mxu0 0
  %176 = vmatprep.subr.bf16.mxu0 0
  %177 = vmatpush1.bf16.msra.mxu0 0
  %178 = vmatprep.subr.bf16.mxu0 0
  %179 = vmatpush1.bf16.msra.mxu0 0
  %180 = vmatprep.subr.bf16.mxu0 0
  %181 = vmatpush1.bf16.msra.mxu0 0
  %182 = vmatprep.subr.bf16.mxu0 0
  %183 = vmatpush1.bf16.msra.mxu0 0
  %184 = vmatprep.subr.bf16.mxu0 0
  %185 = vmatpush1.bf16.msra.mxu0 0
  %186 = vmatprep.subr.bf16.mxu0 0
  %187 = vmatpush1.bf16.msra.mxu0 0
  %188 = vmatprep.subr.bf16.mxu0 0
  %189 = vmatpush1.bf16.msra.mxu0 0
  %190 = vmatprep.subr.bf16.mxu0 0
  %191 = vmatpush1.bf16.msra.mxu0 0
  %192 = vmatprep.subr.bf16.mxu0 0
  %193 = vmatpush1.bf16.msra.mxu0 0
  %194 = vmatprep.subr.bf16.mxu0 0
  %195 = vmatpush1.bf16.msra.mxu0 0
  %196 = vmatprep.mubr.bf16.mxu0 0
  %197 = vmatmul.mubr.bf16.gmra.mrb[0].mxu0 %v156
  %v198 = vpop.f32.mrb[0].mxu0
  %v199 = vadd.f32 %v141, %v198
  %v200 = vpop.f32.mrb[0].mxu0
  %v201 = vpop.f32.mrb[0].mxu0
  %v202 = vadd.f32 %v141, %v201
  %v203 = vpop.f32.mrb[0].mxu0
  %204 = vmatprep.mubr.bf16.mxu0 0
  %205 = vmatmul.mubr.bf16.gmra.mrb[0].mxu0 %v159
  %v206 = vpop.f32.mrb[0].mxu0
  %v207 = vadd.f32 %v141, %v206
  %v208 = vpop.f32.mrb[0].mxu0
  %v209 = vpop.f32.mrb[0].mxu0
  %v210 = vadd.f32 %v141, %v209
  %v211 = vpop.f32.mrb[0].mxu0
  %212 = vmatprep.mubr.bf16.mxu0 0
  %213 = vmatmul.mubr.bf16.gmra.mrb[0].mxu0 %v162
  %v214 = vpop.f32.mrb[0].mxu0
  %v215 = vadd.f32 %v141, %v214
  %v216 = vpop.f32.mrb[0].mxu0
  %v217 = vpop.f32.mrb[0].mxu0
  %v218 = vpop.f32.mrb[0].mxu0
  %219 = vdwg.mxu0
  %v220 = vmul.f32 %v199, 0.5
  %v221 = vmul.f32 %v202, 0.5
  %v222 = vmul.f32 %v207, 0.5
  %v223 = vmul.f32 %v210, 0.5
  %v224 = vmul.f32 %v215, 0.5
  %v225 = vmul.f32 %v199, 0.851
  %v226 = vmul.f32 %v202, 0.851
  %v227 = vmul.f32 %v207, 0.851
  %v228 = vmul.f32 %v210, 0.851
  %v229 = vmul.f32 %v215, 0.851
  %v230 = vtanh.pop %v225
  %v231 = vtanh.pop %v226
  %v232 = vtanh.pop %v227
  %v233 = vtanh.pop %v228
  %v234 = vtanh.pop %v229
  %v235 = vadd.f32 %v230, 1.0
  %v236 = vadd.f32 %v231, 1.0
  %v237 = vadd.f32 %v232, 1.0
  %v238 = vadd.f32 %v233, 1.0
  %v239 = vadd.f32 %v234, 1.0
  %v240 = vmul.f32 %v220, %v235
  %v241 = vmul.f32 %v221, %v236
  %v242 = vmul.f32 %v222, %v237
  %v243 = vmul.f32 %v223, %v238
  %v244 = vmul.f32 %v224, %v239
  %v245 = vpack.c.bf16 %v241, %v240
  %v246 = vpack.c.bf16 %v243, %v242
  %v247 = vpack.c.bf16 %v244, %v244
  %v248 = vld [vmem:[%s5] sm:$0xf]
  %v249 = vld [vmem:[%s5 + $0x4] sm:$0xf]
  %v250 = vld [vmem:[%s5 + $0x8] sm:$0xf]
  %v251 = vld [vmem:[%s5 + $0xc] sm:$0xf]
  %v252 = vld [vmem:[%s5 + $0x10] sm:$0xf]
  %v253 = vld [vmem:[%s5 + $0x14] sm:$0xf]
  %v254 = vld [vmem:[%s5 + $0x18] sm:$0xf]
  %v255 = vld [vmem:[%s5 + $0x1c] sm:$0xf]
  %v256 = vld [vmem:[%s5 + $0x20] sm:$0xf]
  %v257 = vld [vmem:[%s5 + $0x24] sm:$0xf]
  %v258 = vld [vmem:[%s5 + $0x28] sm:$0xf]
  %v259 = vld [vmem:[%s5 + $0x2c] sm:$0xf]
  %v260 = vld [vmem:[%s5 + $0x30] sm:$0xf]
  %v261 = vld [vmem:[%s5 + $0x34] sm:$0xf]
  %v262 = vld [vmem:[%s5 + $0x38] sm:$0xf]
  %v263 = vld [vmem:[%s5 + $0x3c] sm:$0xf]
  %v264 = vld [vmem:[%s6] sm:$0x1]
  %v266 = vlaneseq
  %v267 = vshrl.u32 %v266, 7
  %v268 = vsub.s32 0, %v267
  %v269 = vrot.slane %v264, %v268
  %v287 = vunpack.c.l.b16 %v248
  %v288 = vunpack.c.l.b16 %v249
  %v289 = vunpack.c.l.b16 %v250
  %v290 = vunpack.c.l.b16 %v251
  %v291 = vunpack.c.l.b16 %v252
  %v292 = vunpack.c.l.b16 %v253
  %v293 = vunpack.c.l.b16 %v254
  %v294 = vunpack.c.l.b16 %v255
  %v295 = vunpack.c.l.b16 %v256
  %v296 = vunpack.c.l.b16 %v257
  %v297 = vunpack.c.l.b16 %v258
  %v298 = vunpack.c.l.b16 %v259
  %v299 = vunpack.c.l.b16 %v260
  %v300 = vunpack.c.l.b16 %v261
  %v301 = vunpack.c.l.b16 %v262
  %v302 = vunpack.c.l.b16 %v263
  %v303 = vpack.c.b16 %v288, %v287
  %v304 = vpack.c.b16 %v290, %v289
  %v305 = vpack.c.b16 %v292, %v291
  %v306 = vpack.c.b16 %v294, %v293
  %v307 = vpack.c.b16 %v296, %v295
  %v308 = vpack.c.b16 %v298, %v297
  %v309 = vpack.c.b16 %v300, %v299
  %v310 = vpack.c.b16 %v302, %v301
  %319 = vmatprep.subr.bf16.mxu0 0
  %320 = vmatpush1.bf16.msra.mxu0 %v303
  %321 = vmatprep.subr.bf16.mxu0 0
  %322 = vmatpush1.bf16.msra.mxu0 %v304
  %323 = vmatprep.subr.bf16.mxu0 0
  %324 = vmatpush1.bf16.msra.mxu0 %v305
  %325 = vmatprep.subr.bf16.mxu0 0
  %326 = vmatpush1.bf16.msra.mxu0 %v306
  %327 = vmatprep.subr.bf16.mxu0 0
  %328 = vmatpush1.bf16.msra.mxu0 %v307
  %329 = vmatprep.subr.bf16.mxu0 0
  %330 = vmatpush1.bf16.msra.mxu0 %v308
  %331 = vmatprep.subr.bf16.mxu0 0
  %332 = vmatpush1.bf16.msra.mxu0 %v309
  %333 = vmatprep.subr.bf16.mxu0 0
  %334 = vmatpush1.bf16.msra.mxu0 %v310
  %335 = vmatprep.subr.bf16.mxu0 0
  %336 = vmatpush1.bf16.msra.mxu0 0
  %337 = vmatprep.subr.bf16.mxu0 0
  %338 = vmatpush1.bf16.msra.mxu0 0
  %339 = vmatprep.subr.bf16.mxu0 0
  %340 = vmatpush1.bf16.msra.mxu0 0
  %341 = vmatprep.subr.bf16.mxu0 0
  %342 = vmatpush1.bf16.msra.mxu0 0
  %343 = vmatprep.subr.bf16.mxu0 0
  %344 = vmatpush1.bf16.msra.mxu0 0
  %345 = vmatprep.subr.bf16.mxu0 0
  %346 = vmatpush1.bf16.msra.mxu0 0
  %347 = vmatprep.subr.bf16.mxu0 0
  %348 = vmatpush1.bf16.msra.mxu0 0
  %349 = vmatprep.subr.bf16.mxu0 0
  %350 = vmatpush1.bf16.msra.mxu0 0
  %351 = vmatprep.mubr.bf16.mxu0 0
  %352 = vmatmul.mubr.bf16.gmra.mrb[0].mxu0 %v245
  %v353 = vpop.f32.mrb[0].mxu0
  %v354 = vadd.f32 %v269, %v353
  %v355 = vpop.f32.mrb[0].mxu0
  %v356 = vpop.f32.mrb[0].mxu0
  %v357 = vadd.f32 %v269, %v356
  %v358 = vpop.f32.mrb[0].mxu0
  %359 = vmatprep.mubr.bf16.mxu0 0
  %360 = vmatmul.mubr.bf16.gmra.mrb[0].mxu0 %v246
  %v361 = vpop.f32.mrb[0].mxu0
  %v362 = vadd.f32 %v269, %v361
  %v363 = vpop.f32.mrb[0].mxu0
  %v364 = vpop.f32.mrb[0].mxu0
  %v365 = vadd.f32 %v269, %v364
  %v366 = vpop.f32.mrb[0].mxu0
  %367 = vmatprep.mubr.bf16.mxu0 0
  %368 = vmatmul.mubr.bf16.gmra.mrb[0].mxu0 %v247
  %v369 = vpop.f32.mrb[0].mxu0
  %v370 = vadd.f32 %v269, %v369
  %v371 = vpop.f32.mrb[0].mxu0
  %v372 = vpop.f32.mrb[0].mxu0
  %v373 = vpop.f32.mrb[0].mxu0
  %374 = vdwg.mxu0
  %v375 = vadd.f32 %v354, %v32
  %v376 = vadd.f32 %v357, %v33
  %v377 = vadd.f32 %v362, %v34
  %v378 = vadd.f32 %v365, %v35
  %v379 = vadd.f32 %v370, %v36
  %v380 = vpack.c.bf16 %v376, %v375
  %v381 = vpack.c.bf16 %v378, %v377
  %v382 = vpack.c.bf16 %v379, %v379
  %v386 = vunpack.c.l.b16 %v380
  %v387 = vunpack.c.h.b16 %v380
  %v388 = vunpack.c.l.b16 %v381
  %v389 = vunpack.c.h.b16 %v381
  %v390 = vunpack.c.l.b16 %v382
  %v391 = vpack.c.b16 %v386, %v386
  %v392 = vpack.c.b16 %v387, %v387
  %v393 = vpack.c.b16 %v388, %v388
  %v394 = vpack.c.b16 %v389, %v389
  %v395 = vpack.c.b16 %v390, %v390
  %vm401 = vcmask 257024
  %402 = vst.msk [vmem:[%s7] sm:$0xf] %vm401, %v391
  %403 = vst.msk [vmem:[%s7 + $0x4] sm:$0xf] %vm401, %v392
  %404 = vst.msk [vmem:[%s7 + $0x8] sm:$0xf] %vm401, %v393
  %405 = vst.msk [vmem:[%s7 + $0xc] sm:$0xf] %vm401, %v394
  %vm406 = vcmask 256000
  %407 = vst.msk [vmem:[%s7 + $0x10] sm:$0x7] %vm406, %v395
  // Predicated region
  $region30: #{_lambda_.23} parent=0 // pred_check
    _
  $region31: #{_lambda_.23} parent=0 // pred_check_branch
    %409 = sbr.rel (0) target = $region33
  $region32: #{_lambda_.23} parent=0 // pred_region
    _
  $region33: #{_lambda_.23} parent=0 // pred_fallthru
    _
  // Predicated region
  $region34: #{_lambda_.23} parent=0 // pred_check
    _
  $region35: #{_lambda_.23} parent=0 // pred_check_branch
    %411 = sbr.rel (0) target = $region37
  $region36: #{_lambda_.23} parent=0 // pred_region
    _
  $region37: #{_lambda_.23} parent=0 // pred_fallthru
    _

// kernel: _lambda_.22
$region0: #{_lambda_.22}
  #allocation0 [shape = 'u32[]', space=smem, size = 0x4, offset = 0x4, fixed_abs, tag = 'smem constant byte address 0x4 - core index']
  #allocation1 [shape = 'u32[144,128]{1,0:T(1,128)}', space=vmem, size = 0x12000, scoped, tag = 'internal scratch']
  %s0 = inlined_call_operand.vmem [shape: bf16[2,19,32], index: 0, kind: input, shape index: {}]
  %s1 = inlined_call_operand.vmem [shape: f32[1,32], index: 1, kind: input, shape index: {}]
  %s2 = inlined_call_operand.vmem [shape: f32[1,32], index: 2, kind: input, shape index: {}]
  %s3 = inlined_call_operand.vmem [shape: bf16[32,96], index: 3, kind: input, shape index: {}]
  %s4 = inlined_call_operand.vmem [shape: f32[1,96], index: 4, kind: input, shape index: {}]
  %s5 = inlined_call_operand.vmem [shape: bf16[32,32], index: 5, kind: input, shape index: {}]
  %s6 = inlined_call_operand.vmem [shape: f32[1,32], index: 6, kind: input, shape index: {}]
  %s7 = inlined_call_operand.vmem [shape: bf16[2,19,32], index: 7, kind: output, shape index: {}]
  %s8 = sld [smem:[#allocation0]]
  $region61: #{_lambda_.22} parent=0
    _
  %s10 = ssub.s32 1, %s8
  %s11 = scalar_select 0, %s10, %s8
  loop: start=0, step=1, limit=4
  $region2: #{_lambda_.22} parent=0 // loop_pre_header
    _
  $region3: #{_lambda_.22} parent=0 // loop_header
    %s13 = sphi 0, %s17
    %p14 = scmp.ge.s32.totalorder %s13, 4
    %s23 = sphi 0, %s25
    %s26 = sphi 0, %s23
    %s27 = sphi 0, %s26
    %s43 = sphi 0, %s27
    %s47 = sphi 0, %s47
    %s49 = sphi 0, %s47
    %s50 = sphi 0, %s49
    %s64 = sphi 0, %s50
    %s68 = sphi 0, %s68
    %s70 = sphi 0, %s68
    %s71 = sphi 0, %s70
    %s85 = sphi 0, %s71
    %s89 = sphi 0, %s89
    %s91 = sphi 0, %s89
    %s92 = sphi 0, %s91
    %s106 = sphi 0, %s92
    %s110 = sphi 0, %s110
    %s112 = sphi 0, %s110
    %s113 = sphi 0, %s112
    %s127 = sphi 0, %s113
    %s131 = sphi 0, %s131
    %s133 = sphi 0, %s131
    %s134 = sphi 0, %s133
    %s148 = sphi 0, %s134
    %s152 = sphi 0, %s152
    %s154 = sphi 0, %s152
    %s155 = sphi 0, %s154
    %s169 = sphi 0, %s155
    %s175 = sphi 0, %s177
    %s178 = sphi 0, %s175
    %s179 = sphi 0, %s178
    %s195 = sphi 0, %s179
  $region4: #{_lambda_.22} parent=0 // loop_header_branch
    %16 = sbr.rel (%p14) target = $region8
  $region5: #{_lambda_.22} parent=0 // loop_body
    %s18 = ssub.s32 %s13, 1
    %s19 = ssub.s32 %s13, 2
    %s20 = sadd.s32 %s13, 1
    %s21 = ssub.s32 %s13, %s20
    %p22 = scmp.eq.s32.totalorder %s21, 0
    %s24 = sadd.s32 %s23, 1
    %s25 = scalar_select %p22, %s23, %s24
    %p28 = pneg %p22
    %p29 = scmp.eq.s32.totalorder %s13, 1
    %p30 = por %p28, %p29
    %p31 = scmp.ne.s32.totalorder %s23, %s26
    %p32 = scmp.eq.s32.totalorder %s13, 0
    %p33 = por %p31, %p32
    %p34 = scmp.ne.s32.totalorder %s23, %s26
    %p35 = scmp.eq.s32.totalorder %s18, 1
    %p36 = por %p34, %p35
    %p37 = scmp.ne.s32.totalorder %s26, %s27
    %p38 = scmp.eq.s32.totalorder %s18, 0
    %p39 = por %p37, %p38
    %p40 = scmp.ne.s32.totalorder %s26, %s27
    %p41 = scmp.eq.s32.totalorder %s19, 1
    %p42 = por %p40, %p41
    %p44 = scmp.ne.s32.totalorder %s27, %s43
    %p45 = scmp.eq.s32.totalorder %s19, 0
    %p46 = por %p44, %p45
    %s48 = sadd.s32 %s47, 1
    %p51 = scmp.eq.s32.totalorder %s13, 1
    %p52 = scmp.ne.s32.totalorder %s47, %s49
    %p53 = scmp.eq.s32.totalorder %s13, 0
    %p54 = por %p52, %p53
    %p55 = scmp.ne.s32.totalorder %s47, %s49
    %p56 = scmp.eq.s32.totalorder %s18, 1
    %p57 = por %p55, %p56
    %p58 = scmp.ne.s32.totalorder %s49, %s50
    %p59 = scmp.eq.s32.totalorder %s18, 0
    %p60 = por %p58, %p59
    %p61 = scmp.ne.s32.totalorder %s49, %s50
    %p62 = scmp.eq.s32.totalorder %s19, 1
    %p63 = por %p61, %p62
    %p65 = scmp.ne.s32.totalorder %s50, %s64
    %p66 = scmp.eq.s32.totalorder %s19, 0
    %p67 = por %p65, %p66
    %s69 = sadd.s32 %s68, 1
    %p72 = scmp.eq.s32.totalorder %s13, 1
    %p73 = scmp.ne.s32.totalorder %s68, %s70
    %p74 = scmp.eq.s32.totalorder %s13, 0
    %p75 = por %p73, %p74
    %p76 = scmp.ne.s32.totalorder %s68, %s70
    %p77 = scmp.eq.s32.totalorder %s18, 1
    %p78 = por %p76, %p77
    %p79 = scmp.ne.s32.totalorder %s70, %s71
    %p80 = scmp.eq.s32.totalorder %s18, 0
    %p81 = por %p79, %p80
    %p82 = scmp.ne.s32.totalorder %s70, %s71
    %p83 = scmp.eq.s32.totalorder %s19, 1
    %p84 = por %p82, %p83
    %p86 = scmp.ne.s32.totalorder %s71, %s85
    %p87 = scmp.eq.s32.totalorder %s19, 0
    %p88 = por %p86, %p87
    %s90 = sadd.s32 %s89, 1
    %p93 = scmp.eq.s32.totalorder %s13, 1
    %p94 = scmp.ne.s32.totalorder %s89, %s91
    %p95 = scmp.eq.s32.totalorder %s13, 0
    %p96 = por %p94, %p95
    %p97 = scmp.ne.s32.totalorder %s89, %s91
    %p98 = scmp.eq.s32.totalorder %s18, 1
    %p99 = por %p97, %p98
    %p100 = scmp.ne.s32.totalorder %s91, %s92
    %p101 = scmp.eq.s32.totalorder %s18, 0
    %p102 = por %p100, %p101
    %p103 = scmp.ne.s32.totalorder %s91, %s92
    %p104 = scmp.eq.s32.totalorder %s19, 1
    %p105 = por %p103, %p104
    %p107 = scmp.ne.s32.totalorder %s92, %s106
    %p108 = scmp.eq.s32.totalorder %s19, 0
    %p109 = por %p107, %p108
    %s111 = sadd.s32 %s110, 1
    %p114 = scmp.eq.s32.totalorder %s13, 1
    %p115 = scmp.ne.s32.totalorder %s110, %s112
    %p116 = scmp.eq.s32.totalorder %s13, 0
    %p117 = por %p115, %p116
    %p118 = scmp.ne.s32.totalorder %s110, %s112
    %p119 = scmp.eq.s32.totalorder %s18, 1
    %p120 = por %p118, %p119
    %p121 = scmp.ne.s32.totalorder %s112, %s113
    %p122 = scmp.eq.s32.totalorder %s18, 0
    %p123 = por %p121, %p122
    %p124 = scmp.ne.s32.totalorder %s112, %s113
    %p125 = scmp.eq.s32.totalorder %s19, 1
    %p126 = por %p124, %p125
    %p128 = scmp.ne.s32.totalorder %s113, %s127
    %p129 = scmp.eq.s32.totalorder %s19, 0
    %p130 = por %p128, %p129
    %s132 = sadd.s32 %s131, 1
    %p135 = scmp.eq.s32.totalorder %s13, 1
    %p136 = scmp.ne.s32.totalorder %s131, %s133
    %p137 = scmp.eq.s32.totalorder %s13, 0
    %p138 = por %p136, %p137
    %p139 = scmp.ne.s32.totalorder %s131, %s133
    %p140 = scmp.eq.s32.totalorder %s18, 1
    %p141 = por %p139, %p140
    %p142 = scmp.ne.s32.totalorder %s133, %s134
    %p143 = scmp.eq.s32.totalorder %s18, 0
    %p144 = por %p142, %p143
    %p145 = scmp.ne.s32.totalorder %s133, %s134
    %p146 = scmp.eq.s32.totalorder %s19, 1
    %p147 = por %p145, %p146
    %p149 = scmp.ne.s32.totalorder %s134, %s148
    %p150 = scmp.eq.s32.totalorder %s19, 0
    %p151 = por %p149, %p150
    %s153 = sadd.s32 %s152, 1
    %p156 = scmp.eq.s32.totalorder %s13, 1
    %p157 = scmp.ne.s32.totalorder %s152, %s154
    %p158 = scmp.eq.s32.totalorder %s13, 0
    %p159 = por %p157, %p158
    %p160 = scmp.ne.s32.totalorder %s152, %s154
    %p161 = scmp.eq.s32.totalorder %s18, 1
    %p162 = por %p160, %p161
    %p163 = scmp.ne.s32.totalorder %s154, %s155
    %p164 = scmp.eq.s32.totalorder %s18, 0
    %p165 = por %p163, %p164
    %p166 = scmp.ne.s32.totalorder %s154, %s155
    %p167 = scmp.eq.s32.totalorder %s19, 1
    %p168 = por %p166, %p167
    %p170 = scmp.ne.s32.totalorder %s155, %s169
    %p171 = scmp.eq.s32.totalorder %s19, 0
    %p172 = por %p170, %p171
    %s173 = ssub.s32 %s13, %s20
    %p174 = scmp.eq.s32.totalorder %s173, 0
    %s176 = sadd.s32 %s175, 1
    %s177 = scalar_select %p174, %s175, %s176
    %p180 = pneg %p174
    %p181 = scmp.eq.s32.totalorder %s13, 1
    %p182 = por %p180, %p181
    %p183 = scmp.ne.s32.totalorder %s175, %s178
    %p184 = scmp.eq.s32.totalorder %s13, 0
    %p185 = por %p183, %p184
    %p186 = scmp.ne.s32.totalorder %s175, %s178
    %p187 = scmp.eq.s32.totalorder %s18, 1
    %p188 = por %p186, %p187
    %p189 = scmp.ne.s32.totalorder %s178, %s179
    %p190 = scmp.eq.s32.totalorder %s18, 0
    %p191 = por %p189, %p190
    %p192 = scmp.ne.s32.totalorder %s178, %s179
    %p193 = scmp.eq.s32.totalorder %s19, 1
    %p194 = por %p192, %p193
    %p196 = scmp.ne.s32.totalorder %s179, %s195
    %p197 = scmp.eq.s32.totalorder %s19, 0
    %p198 = por %p196, %p197
    %p199 = scmp.le.s32.totalorder 1, %s13
    %p200 = scmp.lt.s32.totalorder %s13, 3
    %p201 = pnand %p199, %p200
    %p202 = pneg %p201
    // Predicated region
    $region9: #{_lambda_.22} parent=5 // pred_check
      _
    $region10: #{_lambda_.22} parent=5 // pred_check_branch
      %204 = sbr.rel (%p201) target = $region12
    $region11: #{_lambda_.22} parent=5 // pred_region
      %s205 = ssub.s32 %s13, 1
      // Predicated region
      $region13: #{_lambda_.22} parent=11 // pred_check
        %p206 = pneg %p60
      $region14: #{_lambda_.22} parent=11 // pred_check_branch
        %208 = sbr.rel (%p206) target = $region16
      $region15: #{_lambda_.22} parent=11 // pred_region
        _
      $region16: #{_lambda_.22} parent=11 // pred_fallthru
        _
      // Predicated region
      $region17: #{_lambda_.22} parent=11 // pred_check
        %p209 = pneg %p81
      $region18: #{_lambda_.22} parent=11 // pred_check_branch
        %211 = sbr.rel (%p209) target = $region20
      $region19: #{_lambda_.22} parent=11 // pred_region
        _
      $region20: #{_lambda_.22} parent=11 // pred_fallthru
        _
      // Predicated region
      $region21: #{_lambda_.22} parent=11 // pred_check
        %p212 = pneg %p102
      $region22: #{_lambda_.22} parent=11 // pred_check_branch
        %214 = sbr.rel (%p212) target = $region24
      $region23: #{_lambda_.22} parent=11 // pred_region
        _
      $region24: #{_lambda_.22} parent=11 // pred_fallthru
        _
      // Predicated region
      $region25: #{_lambda_.22} parent=11 // pred_check
        %p215 = pneg %p123
      $region26: #{_lambda_.22} parent=11 // pred_check_branch
        %217 = sbr.rel (%p215) target = $region28
      $region27: #{_lambda_.22} parent=11 // pred_region
        _
      $region28: #{_lambda_.22} parent=11 // pred_fallthru
        _
      // Predicated region
      $region29: #{_lambda_.22} parent=11 // pred_check
        %p218 = pneg %p144
      $region30: #{_lambda_.22} parent=11 // pred_check_branch
        %220 = sbr.rel (%p218) target = $region32
      $region31: #{_lambda_.22} parent=11 // pred_region
        _
      $region32: #{_lambda_.22} parent=11 // pred_fallthru
        _
      // Predicated region
      $region33: #{_lambda_.22} parent=11 // pred_check
        %p221 = pneg %p165
      $region34: #{_lambda_.22} parent=11 // pred_check_branch
        %223 = sbr.rel (%p221) target = $region36
      $region35: #{_lambda_.22} parent=11 // pred_region
        _
      $region36: #{_lambda_.22} parent=11 // pred_fallthru
        _
    $region12: #{_lambda_.22} parent=5 // pred_fallthru
      _
    %p224 = scmp.lt.s32.totalorder %s13, 2
    // Predicated region
    $region37: #{_lambda_.22} parent=5 // pred_check
      %p225 = pneg %p224
    $region38: #{_lambda_.22} parent=5 // pred_check_branch
      %227 = sbr.rel (%p225) target = $region40
    $region39: #{_lambda_.22} parent=5 // pred_region
      // Predicated region
      $region41: #{_lambda_.22} parent=39 // pred_check
        %p228 = pneg %p33
      $region42: #{_lambda_.22} parent=39 // pred_check_branch
        %230 = sbr.rel (%p228) target = $region44
      $region43: #{_lambda_.22} parent=39 // pred_region
        %p231 = scmp.lt.s32.totalorder %s13, 1
        %s232 = scalar_select %p231, %s13, 1
        %s233 = smul.addr %s232, 3
        %s234 = smul.addr %s233, 4
        %s235 = scalar_lea.vmem %s0, %s234
      $region44: #{_lambda_.22} parent=39 // pred_fallthru
        _
    $region40: #{_lambda_.22} parent=5 // pred_fallthru
      _
    %p236 = scmp.le.s32.totalorder 1, %s13
    %p237 = scmp.lt.s32.totalorder %s13, 3
    %p238 = pnand %p236, %p237
    %p239 = pneg %p238
    // Predicated region
    $region45: #{_lambda_.22} parent=5 // pred_check
      _
    $region46: #{_lambda_.22} parent=5 // pred_check_branch
      %241 = sbr.rel (%p238) target = $region48
    $region47: #{_lambda_.22} parent=5 // pred_region
      %s242 = ssub.s32 %s13, 1
      %p243 = scmp.lt.s32.totalorder %s18, 1
      %s244 = scalar_select %p243, %s18, 1
      %s245 = smul.addr %s244, 3
      %s246 = smul.addr %s245, 4
      %s247 = scalar_lea.vmem %s0, %s246
      %p248 = pneg %p39
      %p249 = pneg %p36
      %p250 = pneg %p60
      %p251 = pneg %p57
      %p252 = pneg %p81
      %p253 = pneg %p78
      %p254 = pneg %p102
      %p255 = pneg %p99
      %p256 = pneg %p123
      %p257 = pneg %p120
      %p258 = pneg %p144
      %p259 = pneg %p141
      %p260 = pneg %p165
      %p261 = pneg %p162
      %p262 = pneg %p191
      %p263 = pneg %p188
      %p264 = scmp.lt.s32.totalorder %s18, 1
      %s265 = scalar_select %p264, %s18, 1
      %s266 = smul.addr %s265, 3
      %s267 = smul.addr %s266, 4
      %s268 = scalar_lea.vmem %s7, %s267
      %p269 = scmp.lt.s32.totalorder %s18, 1
      %s270 = scalar_select %p269, %s18, 1
      %s271 = smul.addr %s270, 3
      %s272 = smul.addr %s271, 4
      %s273 = scalar_lea.vmem %s0, %s272
      %p274 = scmp.lt.s32.totalorder %s18, 1
      %s275 = scalar_select %p274, %s18, 1
      %s276 = smul.addr %s275, 3
      %s277 = smul.addr %s276, 4
      %s278 = scalar_lea.vmem %s7, %s277
      %v280 = vld [vmem:[%s273] sm:$0xf]
      %v281 = vld [vmem:[%s273 + $0x4] sm:$0xf]
      %v282 = vld [vmem:[%s273 + $0x8] sm:$0x3]
      %v283 = vunpack.c.l.bf16 %v280
      %v284 = vunpack.c.l.bf16 %v281
      %v285 = vunpack.c.l.bf16 %v282
      %vm286 = vcmask 261120
      %v287 = vsel %vm286, %v283, 0.0
      %288 = vadd.xlane.f32.xlu0 %v287
      %v289 = vpop.xlane.xlu0 %288
      %v290 = vsel %vm286, %v284, 0.0
      %291 = vadd.xlane.f32.xlu0 %v290
      %v292 = vpop.xlane.xlu0 %291
      %vm293 = vcmask 256000
      %v294 = vsel %vm293, %v285, 0.0
      %295 = vadd.xlane.f32.xlu0 %v294
      %v296 = vpop.xlane.xlu0 %295
      %v297 = vrcp.pop 32.0
      %v298 = vmul.f32 %v289, %v297
      %v299 = vmul.f32 %v292, %v297
      %v300 = vmul.f32 %v296, %v297
      %v301 = vsub.f32 %v283, %v298
      %v302 = vsub.f32 %v284, %v299
      %v303 = vsub.f32 %v285, %v300
      %v304 = vmul.f32 %v301, %v301
      %v305 = vmul.f32 %v302, %v302
      %v306 = vmul.f32 %v303, %v303
      %v307 = vsel %vm286, %v304, 0.0
      %308 = vadd.xlane.f32.xlu0 %v307
      %v309 = vpop.xlane.xlu0 %308
      %v310 = vsel %vm286, %v305, 0.0
      %311 = vadd.xlane.f32.xlu0 %v310
      %v312 = vpop.xlane.xlu0 %311
      %v313 = vsel %vm293, %v306, 0.0
      %314 = vadd.xlane.f32.xlu0 %v313
      %v315 = vpop.xlane.xlu0 %314
      %v316 = vmul.f32 %v309, %v297
      %v317 = vmul.f32 %v312, %v297
      %v318 = vmul.f32 %v315, %v297
      %v319 = vadd.f32 %v316, 1e-05
      %v320 = vadd.f32 %v317, 1e-05
      %v321 = vadd.f32 %v318, 1e-05
      %v322 = vrsqrt.pop %v319
      %v323 = vrsqrt.pop %v320
      %v324 = vrsqrt.pop %v321
      %v325 = vmul.f32 %v301, %v322
      %v326 = vmul.f32 %v302, %v323
      %v327 = vmul.f32 %v303, %v324
      %v328 = vld [vmem:[%s1] sm:$0x1]
      %v330 = vlaneseq
      %v331 = vshrl.u32 %v330, 7
      %v332 = vsub.s32 0, %v331
      %v333 = vrot.slane %v328, %v332
      %v335 = vmul.f32 %v325, %v333
      %v336 = vmul.f32 %v326, %v333
      %v337 = vmul.f32 %v327, %v333
      %v338 = vld [vmem:[%s2] sm:$0x1]
      %v340 = vlaneseq
      %v341 = vshrl.u32 %v340, 7
      %v342 = vsub.s32 0, %v341
      %v343 = vrot.slane %v338, %v342
      %v345 = vadd.f32 %v335, %v343
      %v346 = vadd.f32 %v336, %v343
      %v347 = vadd.f32 %v337, %v343
      %v348 = vpack.c.bf16 %v346, %v345
      %v349 = vpack.c.bf16 %v347, %v347
      %v350 = vld [vmem:[%s3] sm:$0xf]
      %v351 = vld [vmem:[%s3 + $0x4] sm:$0xf]
      %v352 = vld [vmem:[%s3 + $0x8] sm:$0xf]
      %v353 = vld [vmem:[%s3 + $0xc] sm:$0xf]
      %v354 = vld [vmem:[%s4] sm:$0x1]
      %v356 = vlaneseq
      %v357 = vshrl.u32 %v356, 7
      %v358 = vsub.s32 0, %v357
      %v359 = vrot.slane %v354, %v358
      %v365 = vunpack.c.l.b16 %v350
      %v366 = vunpack.c.l.b16 %v351
      %v367 = vunpack.c.l.b16 %v352
      %v368 = vunpack.c.l.b16 %v353
      %v369 = vpack.c.b16 %v366, %v365
      %v370 = vpack.c.b16 %v368, %v367
      %v374 = vsel %vm286, %v348, 0
      %v377 = vsel %vm286, %v349, 0
      %379 = vmatprep.subr.bf16.mxu0 0
      %380 = vmatpush1.bf16.msra.mxu0 %v369
      %381 = vmatprep.subr.bf16.mxu0 0
      %382 = vmatpush1.bf16.msra.mxu0 %v370
      %383 = vmatprep.subr.bf16.mxu0 0
      %384 = vmatpush1.bf16.msra.mxu0 0
      %385 = vmatprep.subr.bf16.mxu0 0
      %386 = vmatpush1.bf16.msra.mxu0 0
      %387 = vmatprep.subr.bf16.mxu0 0
      %388 = vmatpush1.bf16.msra.mxu0 0
      %389 = vmatprep.subr.bf16.mxu0 0
      %390 = vmatpush1.bf16.msra.mxu0 0
      %391 = vmatprep.subr.bf16.mxu0 0
      %392 = vmatpush1.bf16.msra.mxu0 0
      %393 = vmatprep.subr.bf16.mxu0 0
      %394 = vmatpush1.bf16.msra.mxu0 0
      %395 = vmatprep.subr.bf16.mxu0 0
      %396 = vmatpush1.bf16.msra.mxu0 0
      %397 = vmatprep.subr.bf16.mxu0 0
      %398 = vmatpush1.bf16.msra.mxu0 0
      %399 = vmatprep.subr.bf16.mxu0 0
      %400 = vmatpush1.bf16.msra.mxu0 0
      %401 = vmatprep.subr.bf16.mxu0 0
      %402 = vmatpush1.bf16.msra.mxu0 0
      %403 = vmatprep.subr.bf16.mxu0 0
      %404 = vmatpush1.bf16.msra.mxu0 0
      %405 = vmatprep.subr.bf16.mxu0 0
      %406 = vmatpush1.bf16.msra.mxu0 0
      %407 = vmatprep.subr.bf16.mxu0 0
      %408 = vmatpush1.bf16.msra.mxu0 0
      %409 = vmatprep.subr.bf16.mxu0 0
      %410 = vmatpush1.bf16.msra.mxu0 0
      %411 = vmatprep.mubr.bf16.mxu0 0
      %412 = vmatmul.mubr.bf16.gmra.mrb[0].mxu0 %v374
      %v413 = vpop.f32.mrb[0].mxu0
      %v414 = vadd.f32 %v359, %v413
      %v415 = vpop.f32.mrb[0].mxu0
      %v416 = vpop.f32.mrb[0].mxu0
      %v417 = vadd.f32 %v359, %v416
      %v418 = vpop.f32.mrb[0].mxu0
      %419 = vmatprep.mubr.bf16.mxu0 0
      %420 = vmatmul.mubr.bf16.gmra.mrb[0].mxu0 %v377
      %v421 = vpop.f32.mrb[0].mxu0
      %v422 = vadd.f32 %v359, %v421
      %v423 = vpop.f32.mrb[0].mxu0
      %v424 = vpop.f32.mrb[0].mxu0
      %v425 = vpop.f32.mrb[0].mxu0
      %426 = vdwg.mxu0
      %v427 = vld [vmem:[%s6] sm:$0x1]
      %v429 = vlaneseq
      %v430 = vshrl.u32 %v429, 7
      %v431 = vsub.s32 0, %v430
      %v432 = vrot.slane %v427, %v431
      %v434 = vadd.f32 %v283, %v432
      %v435 = vadd.f32 %v284, %v432
      %v436 = vadd.f32 %v285, %v432
      %v437 = vmul.f32 %v414, 0.35355338
      %v438 = vmul.f32 %v417, 0.35355338
      %v439 = vmul.f32 %v422, 0.35355338
      %v440 = vpack.c.bf16 %v438, %v437
      %v441 = vpack.c.bf16 %v439, %v439
      %v442 = vpack.c.bf16 %v417, %v414
      %v443 = vpack.c.bf16 %v422, %v422
      %446 = vrot.lane.b32.xlu0 %v442, 96
      %v447 = vpop.permute.xlu0 %446
      %448 = vrot.lane.b32.xlu0 %v443, 96
      %v449 = vpop.permute.xlu0 %448
      %vm450 = vcmask 64512
      %v452 = vsel %vm450, %v440, 0
      %v455 = vsel %vm450, %v441, 0
      %v458 = vsel %vm450, %v447, 0
      %v461 = vsel %vm450, %v449, 0
      %463 = vmatprep.subr.bf16.mxu0 0
      %464 = vmatpush1.bf16.xpose.msra.mxu0 %v458
      %465 = vmatprep.subr.bf16.mxu0 0
      %466 = vmatpush1.bf16.xpose.msra.mxu0 %v461
      %467 = vmatprep.subr.bf16.mxu0 0
      %468 = vmatpush1.bf16.xpose.msra.mxu0 0
      %469 = vmatprep.subr.bf16.mxu0 0
      %470 = vmatpush1.bf16.xpose.msra.mxu0 0
      %471 = vmatprep.subr.bf16.mxu0 0
      %472 = vmatpush1.bf16.xpose.msra.mxu0 0
      %473 = vmatprep.subr.bf16.mxu0 0
      %474 = vmatpush1.bf16.xpose.msra.mxu0 0
      %475 = vmatprep.subr.bf16.mxu0 0
      %476 = vmatpush1.bf16.xpose.msra.mxu0 0
      %477 = vmatprep.subr.bf16.mxu0 0
      %478 = vmatpush1.bf16.xpose.msra.mxu0 0
      %479 = vmatprep.subr.bf16.mxu0 0
      %480 = vmatpush1.bf16.xpose.msra.mxu0 0
      %481 = vmatprep.subr.bf16.mxu0 0
      %482 = vmatpush1.bf16.xpose.msra.mxu0 0
      %483 = vmatprep.subr.bf16.mxu0 0
      %484 = vmatpush1.bf16.xpose.msra.mxu0 0
      %485 = vmatprep.subr.bf16.mxu0 0
      %486 = vmatpush1.bf16.xpose.msra.mxu0 0
      %487 = vmatprep.subr.bf16.mxu0 0
      %488 = vmatpush1.bf16.xpose.msra.mxu0 0
      %489 = vmatprep.subr.bf16.mxu0 0
      %490 = vmatpush1.bf16.xpose.msra.mxu0 0
      %491 = vmatprep.subr.bf16.mxu0 0
      %492 = vmatpush1.bf16.xpose.msra.mxu0 0
      %493 = vmatprep.subr.bf16.mxu0 0
      %494 = vmatpush1.bf16.xpose.msra.mxu0 0
      %495 = vmatprep.mubr.bf16.mxu0 0
      %496 = vmatmul.mubr.bf16.gmra.mrb[0].mxu0 %v452
      %v497 = vpop.f32.mrb[0].mxu0
      %v498 = vadd.f32 0.0, %v497
      %v499 = vpop.f32.mrb[0].mxu0
      %v500 = vpop.f32.mrb[0].mxu0
      %v501 = vadd.f32 0.0, %v500
      %v502 = vpop.f32.mrb[0].mxu0
      %503 = vmatprep.mubr.bf16.mxu0 0
      %504 = vmatmul.mubr.bf16.gmra.mrb[0].mxu0 %v455
      %v505 = vpop.f32.mrb[0].mxu0
      %v506 = vadd.f32 0.0, %v505
      %v507 = vpop.f32.mrb[0].mxu0
      %v508 = vpop.f32.mrb[0].mxu0
      %v509 = vpop.f32.mrb[0].mxu0
      %510 = vdwg.mxu0
      %vm511 = vcmask 154624
      %v512 = vsel %vm511, %v498, -inf
      %513 = vmax.xlane.f32.xlu0 %v512
      %v514 = vpop.xlane.xlu0 %513
      %v515 = vsel %vm511, %v501, -inf
      %516 = vmax.xlane.f32.xlu0 %v515
      %v517 = vpop.xlane.xlu0 %516
      %vm518 = vcmask 149504
      %v519 = vsel %vm518, %v506, -inf
      %520 = vmax.xlane.f32.xlu0 %v519
      %v521 = vpop.xlane.xlu0 %520
      %v522 = vsub.f32 %v498, %v514
      %v523 = vsub.f32 %v501, %v517
      %v524 = vsub.f32 %v506, %v521
      %v525 = vmul.f32 %v522, 1.442695
      %v526 = vpow.pop %v525
      %v527 = vmul.f32 %v523, 1.442695
      %v528 = vpow.pop %v527
      %v529 = vmul.f32 %v524, 1.442695
      %v530 = vpow.pop %v529
      %v531 = vsel %vm511, %v526, 0.0
      %532 = vadd.xlane.f32.xlu0 %v531
      %v533 = vpop.xlane.xlu0 %532
      %v534 = vsel %vm511, %v528, 0.0
      %535 = vadd.xlane.f32.xlu0 %v534
      %v536 = vpop.xlane.xlu0 %535
      %v537 = vsel %vm518, %v530, 0.0
      %538 = vadd.xlane.f32.xlu0 %v537
      %v539 = vpop.xlane.xlu0 %538
      %v540 = vrcp.pop %v533
      %v541 = vrcp.pop %v536
      %v542 = vrcp.pop %v539
      %v543 = vmul.f32 %v526, %v540
      %v544 = vmul.f32 %v528, %v541
      %v545 = vmul.f32 %v530, %v542
      %v546 = vpack.c.bf16 %v544, %v543
      %v547 = vpack.c.bf16 %v545, %v545
      %548 = vrot.lane.b32.xlu0 %v442, 64
      %v549 = vpop.permute.xlu0 %548
      %550 = vrot.lane.b32.xlu0 %v443, 64
      %v551 = vpop.permute.xlu0 %550
      %v554 = vsel %vm511, %v546, 0
      %v557 = vsel %vm511, %v547, 0
      %vm559 = vcmask 1040384
      %vm560 = vcmask 1041408
      %v561 = vsel %vm559, 4294967295, 65535
      %v562 = vsel %vm560, %v561, 0
      %v564 = vand.u32 %v551, %v562
      %566 = vmatprep.subr.bf16.mxu0 0
      %567 = vmatpush1.bf16.msra.mxu0 %v549
      %568 = vmatprep.subr.bf16.mxu0 0
      %569 = vmatpush1.bf16.msra.mxu0 %v564
      %570 = vmatprep.subr.bf16.mxu0 0
      %571 = vmatpush1.bf16.msra.mxu0 0
      %572 = vmatprep.subr.bf16.mxu0 0
      %573 = vmatpush1.bf16.msra.mxu0 0
      %574 = vmatprep.subr.bf16.mxu0 0
      %575 = vmatpush1.bf16.msra.mxu0 0
      %576 = vmatprep.subr.bf16.mxu0 0
      %577 = vmatpush1.bf16.msra.mxu0 0
      %578 = vmatprep.subr.bf16.mxu0 0
      %579 = vmatpush1.bf16.msra.mxu0 0
      %580 = vmatprep.subr.bf16.mxu0 0
      %581 = vmatpush1.bf16.msra.mxu0 0
      %582 = vmatprep.subr.bf16.mxu0 0
      %583 = vmatpush1.bf16.msra.mxu0 0
      %584 = vmatprep.subr.bf16.mxu0 0
      %585 = vmatpush1.bf16.msra.mxu0 0
      %586 = vmatprep.subr.bf16.mxu0 0
      %587 = vmatpush1.bf16.msra.mxu0 0
      %588 = vmatprep.subr.bf16.mxu0 0
      %589 = vmatpush1.bf16.msra.mxu0 0
      %590 = vmatprep.subr.bf16.mxu0 0
      %591 = vmatpush1.bf16.msra.mxu0 0
      %592 = vmatprep.subr.bf16.mxu0 0
      %593 = vmatpush1.bf16.msra.mxu0 0
      %594 = vmatprep.subr.bf16.mxu0 0
      %595 = vmatpush1.bf16.msra.mxu0 0
      %596 = vmatprep.subr.bf16.mxu0 0
      %597 = vmatpush1.bf16.msra.mxu0 0
      %598 = vmatprep.mubr.bf16.mxu0 0
      %599 = vmatmul.mubr.bf16.gmra.mrb[0].mxu0 %v554
      %v600 = vpop.f32.mrb[0].mxu0
      %v601 = vadd.f32 0.0, %v600
      %v602 = vpop.f32.mrb[0].mxu0
      %v603 = vpop.f32.mrb[0].mxu0
      %v604 = vadd.f32 0.0, %v603
      %v605 = vpop.f32.mrb[0].mxu0
      %606 = vmatprep.mubr.bf16.mxu0 0
      %607 = vmatmul.mubr.bf16.gmra.mrb[0].mxu0 %v557
      %v608 = vpop.f32.mrb[0].mxu0
      %v609 = vadd.f32 0.0, %v608
      %v610 = vpop.f32.mrb[0].mxu0
      %v611 = vpop.f32.mrb[0].mxu0
      %v612 = vpop.f32.mrb[0].mxu0
      %613 = vdwg.mxu0
      %v614 = vpack.c.bf16 %v604, %v601
      %v615 = vpack.c.bf16 %v609, %v609
      %v616 = vld [vmem:[%s5] sm:$0xf]
      %v618 = vsel %vm450, %v614, 0
      %v621 = vsel %vm450, %v615, 0
      %vm623 = vcmask 1043456
      %v625 = vsel %vm623, %v616, 0
      %627 = vmatprep.subr.bf16.mxu0 0
      %628 = vmatpush1.bf16.msra.mxu0 %v625
      %629 = vmatprep.subr.bf16.mxu0 0
      %630 = vmatpush1.bf16.msra.mxu0 0
      %631 = vmatprep.subr.bf16.mxu0 0
      %632 = vmatpush1.bf16.msra.mxu0 0
      %633 = vmatprep.subr.bf16.mxu0 0
      %634 = vmatpush1.bf16.msra.mxu0 0
      %635 = vmatprep.subr.bf16.mxu0 0
      %636 = vmatpush1.bf16.msra.mxu0 0
      %637 = vmatprep.subr.bf16.mxu0 0
      %638 = vmatpush1.bf16.msra.mxu0 0
      %639 = vmatprep.subr.bf16.mxu0 0
      %640 = vmatpush1.bf16.msra.mxu0 0
      %641 = vmatprep.subr.bf16.mxu0 0
      %642 = vmatpush1.bf16.msra.mxu0 0
      %643 = vmatprep.subr.bf16.mxu0 0
      %644 = vmatpush1.bf16.msra.mxu0 0
      %645 = vmatprep.subr.bf16.mxu0 0
      %646 = vmatpush1.bf16.msra.mxu0 0
      %647 = vmatprep.subr.bf16.mxu0 0
      %648 = vmatpush1.bf16.msra.mxu0 0
      %649 = vmatprep.subr.bf16.mxu0 0
      %650 = vmatpush1.bf16.msra.mxu0 0
      %651 = vmatprep.subr.bf16.mxu0 0
      %652 = vmatpush1.bf16.msra.mxu0 0
      %653 = vmatprep.subr.bf16.mxu0 0
      %654 = vmatpush1.bf16.msra.mxu0 0
      %655 = vmatprep.subr.bf16.mxu0 0
      %656 = vmatpush1.bf16.msra.mxu0 0
      %657 = vmatprep.subr.bf16.mxu0 0
      %658 = vmatpush1.bf16.msra.mxu0 0
      %659 = vmatprep.mubr.bf16.mxu0 0
      %660 = vmatmul.mubr.bf16.gmra.mrb[0].mxu0 %v618
      %v661 = vpop.f32.mrb[0].mxu0
      %v662 = vadd.f32 0.0, %v661
      %v663 = vpop.f32.mrb[0].mxu0
      %v664 = vpop.f32.mrb[0].mxu0
      %v665 = vadd.f32 0.0, %v664
      %v666 = vpop.f32.mrb[0].mxu0
      %667 = vmatprep.mubr.bf16.mxu0 0
      %668 = vmatmul.mubr.bf16.gmra.mrb[0].mxu0 %v621
      %v669 = vpop.f32.mrb[0].mxu0
      %v670 = vadd.f32 0.0, %v669
      %v671 = vpop.f32.mrb[0].mxu0
      %v672 = vpop.f32.mrb[0].mxu0
      %v673 = vpop.f32.mrb[0].mxu0
      %674 = vdwg.mxu0
      %v675 = vadd.f32 %v434, %v662
      %v676 = vadd.f32 %v435, %v665
      %v677 = vadd.f32 %v436, %v670
      %680 = vrot.lane.b32.xlu0 %v440, 120
      %v681 = vpop.permute.xlu0 %680
      %682 = vrot.lane.b32.xlu0 %v441, 120
      %v683 = vpop.permute.xlu0 %682
      %684 = vrot.lane.b32.xlu0 %v442, 88
      %v685 = vpop.permute.xlu0 %684
      %686 = vrot.lane.b32.xlu0 %v443, 88
      %v687 = vpop.permute.xlu0 %686
      %v689 = vsel %vm450, %v681, 0
      %v692 = vsel %vm450, %v683, 0
      %v695 = vsel %vm450, %v685, 0
      %v698 = vsel %vm450, %v687, 0
      %700 = vmatprep.subr.bf16.mxu0 0
      %701 = vmatpush1.bf16.xpose.msra.mxu0 %v695
      %702 = vmatprep.subr.bf16.mxu0 0
      %703 = vmatpush1.bf16.xpose.msra.mxu0 %v698
      %704 = vmatprep.subr.bf16.mxu0 0
      %705 = vmatpush1.bf16.xpose.msra.mxu0 0
      %706 = vmatprep.subr.bf16.mxu0 0
      %707 = vmatpush1.bf16.xpose.msra.mxu0 0
      %708 = vmatprep.subr.bf16.mxu0 0
      %709 = vmatpush1.bf16.xpose.msra.mxu0 0
      %710 = vmatprep.subr.bf16.mxu0 0
      %711 = vmatpush1.bf16.xpose.msra.mxu0 0
      %712 = vmatprep.subr.bf16.mxu0 0
      %713 = vmatpush1.bf16.xpose.msra.mxu0 0
      %714 = vmatprep.subr.bf16.mxu0 0
      %715 = vmatpush1.bf16.xpose.msra.mxu0 0
      %716 = vmatprep.subr.bf16.mxu0 0
      %717 = vmatpush1.bf16.xpose.msra.mxu0 0
      %718 = vmatprep.subr.bf16.mxu0 0
      %719 = vmatpush1.bf16.xpose.msra.mxu0 0
      %720 = vmatprep.subr.bf16.mxu0 0
      %721 = vmatpush1.bf16.xpose.msra.mxu0 0
      %722 = vmatprep.subr.bf16.mxu0 0
      %723 = vmatpush1.bf16.xpose.msra.mxu0 0
      %724 = vmatprep.subr.bf16.mxu0 0
      %725 = vmatpush1.bf16.xpose.msra.mxu0 0
      %726 = vmatprep.subr.bf16.mxu0 0
      %727 = vmatpush1.bf16.xpose.msra.mxu0 0
      %728 = vmatprep.subr.bf16.mxu0 0
      %729 = vmatpush1.bf16.xpose.msra.mxu0 0
      %730 = vmatprep.subr.bf16.mxu0 0
      %731 = vmatpush1.bf16.xpose.msra.mxu0 0
      %732 = vmatprep.mubr.bf16.mxu0 0
      %733 = vmatmul.mubr.bf16.gmra.mrb[0].mxu0 %v689
      %v734 = vpop.f32.mrb[0].mxu0
      %v735 = vadd.f32 0.0, %v734
      %v736 = vpop.f32.mrb[0].mxu0
      %v737 = vpop.f32.mrb[0].mxu0
      %v738 = vadd.f32 0.0, %v737
      %v739 = vpop.f32.mrb[0].mxu0
      %740 = vmatprep.mubr.bf16.mxu0 0
      %741 = vmatmul.mubr.bf16.gmra.mrb[0].mxu0 %v692
      %v742 = vpop.f32.mrb[0].mxu0
      %v743 = vadd.f32 0.0, %v742
      %v744 = vpop.f32.mrb[0].mxu0
      %v745 = vpop.f32.mrb[0].mxu0
      %v746 = vpop.f32.mrb[0].mxu0
      %747 = vdwg.mxu0
      %v748 = vsel %vm511, %v735, -inf
      %749 = vmax.xlane.f32.xlu0 %v748
      %v750 = vpop.xlane.xlu0 %749
      %v751 = vsel %vm511, %v738, -inf
      %752 = vmax.xlane.f32.xlu0 %v751
      %v753 = vpop.xlane.xlu0 %752
      %v754 = vsel %vm518, %v743, -inf
      %755 = vmax.xlane.f32.xlu0 %v754
      %v756 = vpop.xlane.xlu0 %755
      %v757 = vsub.f32 %v735, %v750
      %v758 = vsub.f32 %v738, %v753
      %v759 = vsub.f32 %v743, %v756
      %v760 = vmul.f32 %v757, 1.442695
      %v761 = vpow.pop %v760
      %v762 = vmul.f32 %v758, 1.442695
      %v763 = vpow.pop %v762
      %v764 = vmul.f32 %v759, 1.442695
      %v765 = vpow.pop %v764
      %v766 = vsel %vm511, %v761, 0.0
      %767 = vadd.xlane.f32.xlu0 %v766
      %v768 = vpop.xlane.xlu0 %767
      %v769 = vsel %vm511, %v763, 0.0
      %770 = vadd.xlane.f32.xlu0 %v769
      %v771 = vpop.xlane.xlu0 %770
      %v772 = vsel %vm518, %v765, 0.0
      %773 = vadd.xlane.f32.xlu0 %v772
      %v774 = vpop.xlane.xlu0 %773
      %v775 = vrcp.pop %v768
      %v776 = vrcp.pop %v771
      %v777 = vrcp.pop %v774
      %v778 = vmul.f32 %v761, %v775
      %v779 = vmul.f32 %v763, %v776
      %v780 = vmul.f32 %v765, %v777
      %v781 = vpack.c.bf16 %v779, %v778
      %v782 = vpack.c.bf16 %v780, %v780
      %783 = vrot.lane.b32.xlu0 %v442, 56
      %v784 = vpop.permute.xlu0 %783
      %785 = vrot.lane.b32.xlu0 %v443, 56
      %v786 = vpop.permute.xlu0 %785
      %v789 = vsel %vm511, %v781, 0
      %v792 = vsel %vm511, %v782, 0
      %v795 = vand.u32 %v786, %v562
      %797 = vmatprep.subr.bf16.mxu0 0
      %798 = vmatpush1.bf16.msra.mxu0 %v784
      %799 = vmatprep.subr.bf16.mxu0 0
      %800 = vmatpush1.bf16.msra.mxu0 %v795
      %801 = vmatprep.subr.bf16.mxu0 0
      %802 = vmatpush1.bf16.msra.mxu0 0
      %803 = vmatprep.subr.bf16.mxu0 0
      %804 = vmatpush1.bf16.msra.mxu0 0
      %805 = vmatprep.subr.bf16.mxu0 0
      %806 = vmatpush1.bf16.msra.mxu0 0
      %807 = vmatprep.subr.bf16.mxu0 0
      %808 = vmatpush1.bf16.msra.mxu0 0
      %809 = vmatprep.subr.bf16.mxu0 0
      %810 = vmatpush1.bf16.msra.mxu0 0
      %811 = vmatprep.subr.bf16.mxu0 0
      %812 = vmatpush1.bf16.msra.mxu0 0
      %813 = vmatprep.subr.bf16.mxu0 0
      %814 = vmatpush1.bf16.msra.mxu0 0
      %815 = vmatprep.subr.bf16.mxu0 0
      %816 = vmatpush1.bf16.msra.mxu0 0
      %817 = vmatprep.subr.bf16.mxu0 0
      %818 = vmatpush1.bf16.msra.mxu0 0
      %819 = vmatprep.subr.bf16.mxu0 0
      %820 = vmatpush1.bf16.msra.mxu0 0
      %821 = vmatprep.subr.bf16.mxu0 0
      %822 = vmatpush1.bf16.msra.mxu0 0
      %823 = vmatprep.subr.bf16.mxu0 0
      %824 = vmatpush1.bf16.msra.mxu0 0
      %825 = vmatprep.subr.bf16.mxu0 0
      %826 = vmatpush1.bf16.msra.mxu0 0
      %827 = vmatprep.subr.bf16.mxu0 0
      %828 = vmatpush1.bf16.msra.mxu0 0
      %829 = vmatprep.mubr.bf16.mxu0 0
      %830 = vmatmul.mubr.bf16.gmra.mrb[0].mxu0 %v789
      %v831 = vpop.f32.mrb[0].mxu0
      %v832 = vadd.f32 0.0, %v831
      %v833 = vpop.f32.mrb[0].mxu0
      %v834 = vpop.f32.mrb[0].mxu0
      %v835 = vadd.f32 0.0, %v834
      %v836 = vpop.f32.mrb[0].mxu0
      %837 = vmatprep.mubr.bf16.mxu0 0
      %838 = vmatmul.mubr.bf16.gmra.mrb[0].mxu0 %v792
      %v839 = vpop.f32.mrb[0].mxu0
      %v840 = vadd.f32 0.0, %v839
      %v841 = vpop.f32.mrb[0].mxu0
      %v842 = vpop.f32.mrb[0].mxu0
      %v843 = vpop.f32.mrb[0].mxu0
      %844 = vdwg.mxu0
      %v845 = vpack.c.bf16 %v835, %v832
      %v846 = vpack.c.bf16 %v840, %v840
      %v847 = vld [vmem:[%s5 + $0x4] sm:$0xf]
      %v849 = vsel %vm450, %v845, 0
      %v852 = vsel %vm450, %v846, 0
      %v855 = vsel %vm623, %v847, 0
      %857 = vmatprep.subr.bf16.mxu0 0
      %858 = vmatpush1.bf16.msra.mxu0 %v855
      %859 = vmatprep.subr.bf16.mxu0 0
      %860 = vmatpush1.bf16.msra.mxu0 0
      %861 = vmatprep.subr.bf16.mxu0 0
      %862 = vmatpush1.bf16.msra.mxu0 0
      %863 = vmatprep.subr.bf16.mxu0 0
      %864 = vmatpush1.bf16.msra.mxu0 0
      %865 = vmatprep.subr.bf16.mxu0 0
      %866 = vmatpush1.bf16.msra.mxu0 0
      %867 = vmatprep.subr.bf16.mxu0 0
      %868 = vmatpush1.bf16.msra.mxu0 0
      %869 = vmatprep.subr.bf16.mxu0 0
      %870 = vmatpush1.bf16.msra.mxu0 0
      %871 = vmatprep.subr.bf16.mxu0 0
      %872 = vmatpush1.bf16.msra.mxu0 0
      %873 = vmatprep.subr.bf16.mxu0 0
      %874 = vmatpush1.bf16.msra.mxu0 0
      %875 = vmatprep.subr.bf16.mxu0 0
      %876 = vmatpush1.bf16.msra.mxu0 0
      %877 = vmatprep.subr.bf16.mxu0 0
      %878 = vmatpush1.bf16.msra.mxu0 0
      %879 = vmatprep.subr.bf16.mxu0 0
      %880 = vmatpush1.bf16.msra.mxu0 0
      %881 = vmatprep.subr.bf16.mxu0 0
      %882 = vmatpush1.bf16.msra.mxu0 0
      %883 = vmatprep.subr.bf16.mxu0 0
      %884 = vmatpush1.bf16.msra.mxu0 0
      %885 = vmatprep.subr.bf16.mxu0 0
      %886 = vmatpush1.bf16.msra.mxu0 0
      %887 = vmatprep.subr.bf16.mxu0 0
      %888 = vmatpush1.bf16.msra.mxu0 0
      %889 = vmatprep.mubr.bf16.mxu0 0
      %890 = vmatmul.mubr.bf16.gmra.mrb[0].mxu0 %v849
      %v891 = vpop.f32.mrb[0].mxu0
      %v892 = vadd.f32 0.0, %v891
      %v893 = vpop.f32.mrb[0].mxu0
      %v894 = vpop.f32.mrb[0].mxu0
      %v895 = vadd.f32 0.0, %v894
      %v896 = vpop.f32.mrb[0].mxu0
      %897 = vmatprep.mubr.bf16.mxu0 0
      %898 = vmatmul.mubr.bf16.gmra.mrb[0].mxu0 %v852
      %v899 = vpop.f32.mrb[0].mxu0
      %v900 = vadd.f32 0.0, %v899
      %v901 = vpop.f32.mrb[0].mxu0
      %v902 = vpop.f32.mrb[0].mxu0
      %v903 = vpop.f32.mrb[0].mxu0
      %904 = vdwg.mxu0
      %v905 = vadd.f32 %v675, %v892
      %v906 = vadd.f32 %v676, %v895
      %v907 = vadd.f32 %v677, %v900
      %908 = vrot.lane.b32.xlu0 %v440, 112
      %v909 = vpop.permute.xlu0 %908
      %910 = vrot.lane.b32.xlu0 %v441, 112
      %v911 = vpop.permute.xlu0 %910
      %912 = vrot.lane.b32.xlu0 %v442, 80
      %v913 = vpop.permute.xlu0 %912
      %914 = vrot.lane.b32.xlu0 %v443, 80
      %v915 = vpop.permute.xlu0 %914
      %v917 = vsel %vm450, %v909, 0
      %v920 = vsel %vm450, %v911, 0
      %v923 = vsel %vm450, %v913, 0
      %v926 = vsel %vm450, %v915, 0
      %928 = vmatprep.subr.bf16.mxu0 0
      %929 = vmatpush1.bf16.xpose.msra.mxu0 %v923
      %930 = vmatprep.subr.bf16.mxu0 0
      %931 = vmatpush1.bf16.xpose.msra.mxu0 %v926
      %932 = vmatprep.subr.bf16.mxu0 0
      %933 = vmatpush1.bf16.xpose.msra.mxu0 0
      %934 = vmatprep.subr.bf16.mxu0 0
      %935 = vmatpush1.bf16.xpose.msra.mxu0 0
      %936 = vmatprep.subr.bf16.mxu0 0
      %937 = vmatpush1.bf16.xpose.msra.mxu0 0
      %938 = vmatprep.subr.bf16.mxu0 0
      %939 = vmatpush1.bf16.xpose.msra.mxu0 0
      %940 = vmatprep.subr.bf16.mxu0 0
      %941 = vmatpush1.bf16.xpose.msra.mxu0 0
      %942 = vmatprep.subr.bf16.mxu0 0
      %943 = vmatpush1.bf16.xpose.msra.mxu0 0
      %944 = vmatprep.subr.bf16.mxu0 0
      %945 = vmatpush1.bf16.xpose.msra.mxu0 0
      %946 = vmatprep.subr.bf16.mxu0 0
      %947 = vmatpush1.bf16.xpose.msra.mxu0 0
      %948 = vmatprep.subr.bf16.mxu0 0
      %949 = vmatpush1.bf16.xpose.msra.mxu0 0
      %950 = vmatprep.subr.bf16.mxu0 0
      %951 = vmatpush1.bf16.xpose.msra.mxu0 0
      %952 = vmatprep.subr.bf16.mxu0 0
      %953 = vmatpush1.bf16.xpose.msra.mxu0 0
      %954 = vmatprep.subr.bf16.mxu0 0
      %955 = vmatpush1.bf16.xpose.msra.mxu0 0
      %956 = vmatprep.subr.bf16.mxu0 0
      %957 = vmatpush1.bf16.xpose.msra.mxu0 0
      %958 = vmatprep.subr.bf16.mxu0 0
      %959 = vmatpush1.bf16.xpose.msra.mxu0 0
      %960 = vmatprep.mubr.bf16.mxu0 0
      %961 = vmatmul.mubr.bf16.gmra.mrb[0].mxu0 %v917
      %v962 = vpop.f32.mrb[0].mxu0
      %v963 = vadd.f32 0.0, %v962
      %v964 = vpop.f32.mrb[0].mxu0
      %v965 = vpop.f32.mrb[0].mxu0
      %v966 = vadd.f32 0.0, %v965
      %v967 = vpop.f32.mrb[0].mxu0
      %968 = vmatprep.mubr.bf16.mxu0 0
      %969 = vmatmul.mubr.bf16.gmra.mrb[0].mxu0 %v920
      %v970 = vpop.f32.mrb[0].mxu0
      %v971 = vadd.f32 0.0, %v970
      %v972 = vpop.f32.mrb[0].mxu0
      %v973 = vpop.f32.mrb[0].mxu0
      %v974 = vpop.f32.mrb[0].mxu0
      %975 = vdwg.mxu0
      %v976 = vsel %vm511, %v963, -inf
      %977 = vmax.xlane.f32.xlu0 %v976
      %v978 = vpop.xlane.xlu0 %977
      %v979 = vsel %vm511, %v966, -inf
      %980 = vmax.xlane.f32.xlu0 %v979
      %v981 = vpop.xlane.xlu0 %980
      %v982 = vsel %vm518, %v971, -inf
      %983 = vmax.xlane.f32.xlu0 %v982
      %v984 = vpop.xlane.xlu0 %983
      %v985 = vsub.f32 %v963, %v978
      %v986 = vsub.f32 %v966, %v981
      %v987 = vsub.f32 %v971, %v984
      %v988 = vmul.f32 %v985, 1.442695
      %v989 = vpow.pop %v988
      %v990 = vmul.f32 %v986, 1.442695
      %v991 = vpow.pop %v990
      %v992 = vmul.f32 %v987, 1.442695
      %v993 = vpow.pop %v992
      %v994 = vsel %vm511, %v989, 0.0
      %995 = vadd.xlane.f32.xlu0 %v994
      %v996 = vpop.xlane.xlu0 %995
      %v997 = vsel %vm511, %v991, 0.0
      %998 = vadd.xlane.f32.xlu0 %v997
      %v999 = vpop.xlane.xlu0 %998
      %v1000 = vsel %vm518, %v993, 0.0
      %1001 = vadd.xlane.f32.xlu0 %v1000
      %v1002 = vpop.xlane.xlu0 %1001
      %v1003 = vrcp.pop %v996
      %v1004 = vrcp.pop %v999
      %v1005 = vrcp.pop %v1002
      %v1006 = vmul.f32 %v989, %v1003
      %v1007 = vmul.f32 %v991, %v1004
      %v1008 = vmul.f32 %v993, %v1005
      %v1009 = vpack.c.bf16 %v1007, %v1006
      %v1010 = vpack.c.bf16 %v1008, %v1008
      %1011 = vrot.lane.b32.xlu0 %v442, 48
      %v1012 = vpop.permute.xlu0 %1011
      %1013 = vrot.lane.b32.xlu0 %v443, 48
      %v1014 = vpop.permute.xlu0 %1013
      %v1017 = vsel %vm511, %v1009, 0
      %v1020 = vsel %vm511, %v1010, 0
      %v1023 = vand.u32 %v1014, %v562
      %1025 = vmatprep.subr.bf16.mxu0 0
      %1026 = vmatpush1.bf16.msra.mxu0 %v1012
      %1027 = vmatprep.subr.bf16.mxu0 0
      %1028 = vmatpush1.bf16.msra.mxu0 %v1023
      %1029 = vmatprep.subr.bf16.mxu0 0
      %1030 = vmatpush1.bf16.msra.mxu0 0
      %1031 = vmatprep.subr.bf16.mxu0 0
      %1032 = vmatpush1.bf16.msra.mxu0 0
      %1033 = vmatprep.subr.bf16.mxu0 0
      %1034 = vmatpush1.bf16.msra.mxu0 0
      %1035 = vmatprep.subr.bf16.mxu0 0
      %1036 = vmatpush1.bf16.msra.mxu0 0
      %1037 = vmatprep.subr.bf16.mxu0 0
      %1038 = vmatpush1.bf16.msra.mxu0 0
      %1039 = vmatprep.subr.bf16.mxu0 0
      %1040 = vmatpush1.bf16.msra.mxu0 0
      %1041 = vmatprep.subr.bf16.mxu0 0
      %1042 = vmatpush1.bf16.msra.mxu0 0
      %1043 = vmatprep.subr.bf16.mxu0 0
      %1044 = vmatpush1.bf16.msra.mxu0 0
      %1045 = vmatprep.subr.bf16.mxu0 0
      %1046 = vmatpush1.bf16.msra.mxu0 0
      %1047 = vmatprep.subr.bf16.mxu0 0
      %1048 = vmatpush1.bf16.msra.mxu0 0
      %1049 = vmatprep.subr.bf16.mxu0 0
      %1050 = vmatpush1.bf16.msra.mxu0 0
      %1051 = vmatprep.subr.bf16.mxu0 0
      %1052 = vmatpush1.bf16.msra.mxu0 0
      %1053 = vmatprep.subr.bf16.mxu0 0
      %1054 = vmatpush1.bf16.msra.mxu0 0
      %1055 = vmatprep.subr.bf16.mxu0 0
      %1056 = vmatpush1.bf16.msra.mxu0 0
      %1057 = vmatprep.mubr.bf16.mxu0 0
      %1058 = vmatmul.mubr.bf16.gmra.mrb[0].mxu0 %v1017
      %v1059 = vpop.f32.mrb[0].mxu0
      %v1060 = vadd.f32 0.0, %v1059
      %v1061 = vpop.f32.mrb[0].mxu0
      %v1062 = vpop.f32.mrb[0].mxu0
      %v1063 = vadd.f32 0.0, %v1062
      %v1064 = vpop.f32.mrb[0].mxu0
      %1065 = vmatprep.mubr.bf16.mxu0 0
      %1066 = vmatmul.mubr.bf16.gmra.mrb[0].mxu0 %v1020
      %v1067 = vpop.f32.mrb[0].mxu0
      %v1068 = vadd.f32 0.0, %v1067
      %v1069 = vpop.f32.mrb[0].mxu0
      %v1070 = vpop.f32.mrb[0].mxu0
      %v1071 = vpop.f32.mrb[0].mxu0
      %1072 = vdwg.mxu0
      %v1073 = vpack.c.bf16 %v1063, %v1060
      %v1074 = vpack.c.bf16 %v1068, %v1068
      %v1075 = vld [vmem:[%s5 + $0x8] sm:$0xf]
      %v1077 = vsel %vm450, %v1073, 0
      %v1080 = vsel %vm450, %v1074, 0
      %v1083 = vsel %vm623, %v1075, 0
      %1085 = vmatprep.subr.bf16.mxu0 0
      %1086 = vmatpush1.bf16.msra.mxu0 %v1083
      %1087 = vmatprep.subr.bf16.mxu0 0
      %1088 = vmatpush1.bf16.msra.mxu0 0
      %1089 = vmatprep.subr.bf16.mxu0 0
      %1090 = vmatpush1.bf16.msra.mxu0 0
      %1091 = vmatprep.subr.bf16.mxu0 0
      %1092 = vmatpush1.bf16.msra.mxu0 0
      %1093 = vmatprep.subr.bf16.mxu0 0
      %1094 = vmatpush1.bf16.msra.mxu0 0
      %1095 = vmatprep.subr.bf16.mxu0 0
      %1096 = vmatpush1.bf16.msra.mxu0 0
      %1097 = vmatprep.subr.bf16.mxu0 0
      %1098 = vmatpush1.bf16.msra.mxu0 0
      %1099 = vmatprep.subr.bf16.mxu0 0
      %1100 = vmatpush1.bf16.msra.mxu0 0
      %1101 = vmatprep.subr.bf16.mxu0 0
      %1102 = vmatpush1.bf16.msra.mxu0 0
      %1103 = vmatprep.subr.bf16.mxu0 0
      %1104 = vmatpush1.bf16.msra.mxu0 0
      %1105 = vmatprep.subr.bf16.mxu0 0
      %1106 = vmatpush1.bf16.msra.mxu0 0
      %1107 = vmatprep.subr.bf16.mxu0 0
      %1108 = vmatpush1.bf16.msra.mxu0 0
      %1109 = vmatprep.subr.bf16.mxu0 0
      %1110 = vmatpush1.bf16.msra.mxu0 0
      %1111 = vmatprep.subr.bf16.mxu0 0
      %1112 = vmatpush1.bf16.msra.mxu0 0
      %1113 = vmatprep.subr.bf16.mxu0 0
      %1114 = vmatpush1.bf16.msra.mxu0 0
      %1115 = vmatprep.subr.bf16.mxu0 0
      %1116 = vmatpush1.bf16.msra.mxu0 0
      %1117 = vmatprep.mubr.bf16.mxu0 0
      %1118 = vmatmul.mubr.bf16.gmra.mrb[0].mxu0 %v1077
      %v1119 = vpop.f32.mrb[0].mxu0
      %v1120 = vadd.f32 0.0, %v1119
      %v1121 = vpop.f32.mrb[0].mxu0
      %v1122 = vpop.f32.mrb[0].mxu0
      %v1123 = vadd.f32 0.0, %v1122
      %v1124 = vpop.f32.mrb[0].mxu0
      %1125 = vmatprep.mubr.bf16.mxu0 0
      %1126 = vmatmul.mubr.bf16.gmra.mrb[0].mxu0 %v1080
      %v1127 = vpop.f32.mrb[0].mxu0
      %v1128 = vadd.f32 0.0, %v1127
      %v1129 = vpop.f32.mrb[0].mxu0
      %v1130 = vpop.f32.mrb[0].mxu0
      %v1131 = vpop.f32.mrb[0].mxu0
      %1132 = vdwg.mxu0
      %v1133 = vadd.f32 %v905, %v1120
      %v1134 = vadd.f32 %v906, %v1123
      %v1135 = vadd.f32 %v907, %v1128
      %1136 = vrot.lane.b32.xlu0 %v440, 104
      %v1137 = vpop.permute.xlu0 %1136
      %1138 = vrot.lane.b32.xlu0 %v441, 104
      %v1139 = vpop.permute.xlu0 %1138
      %1140 = vrot.lane.b32.xlu0 %v442, 72
      %v1141 = vpop.permute.xlu0 %1140
      %1142 = vrot.lane.b32.xlu0 %v443, 72
      %v1143 = vpop.permute.xlu0 %1142
      %v1145 = vsel %vm450, %v1137, 0
      %v1148 = vsel %vm450, %v1139, 0
      %v1151 = vsel %vm450, %v1141, 0
      %v1154 = vsel %vm450, %v1143, 0
      %1156 = vmatprep.subr.bf16.mxu0 0
      %1157 = vmatpush1.bf16.xpose.msra.mxu0 %v1151
      %1158 = vmatprep.subr.bf16.mxu0 0
      %1159 = vmatpush1.bf16.xpose.msra.mxu0 %v1154
      %1160 = vmatprep.subr.bf16.mxu0 0
      %1161 = vmatpush1.bf16.xpose.msra.mxu0 0
      %1162 = vmatprep.subr.bf16.mxu0 0
      %1163 = vmatpush1.bf16.xpose.msra.mxu0 0
      %1164 = vmatprep.subr.bf16.mxu0 0
      %1165 = vmatpush1.bf16.xpose.msra.mxu0 0
      %1166 = vmatprep.subr.bf16.mxu0 0
      %1167 = vmatpush1.bf16.xpose.msra.mxu0 0
      %1168 = vmatprep.subr.bf16.mxu0 0
      %1169 = vmatpush1.bf16.xpose.msra.mxu0 0
      %1170 = vmatprep.subr.bf16.mxu0 0
      %1171 = vmatpush1.bf16.xpose.msra.mxu0 0
      %1172 = vmatprep.subr.bf16.mxu0 0
      %1173 = vmatpush1.bf16.xpose.msra.mxu0 0
      %1174 = vmatprep.subr.bf16.mxu0 0
      %1175 = vmatpush1.bf16.xpose.msra.mxu0 0
      %1176 = vmatprep.subr.bf16.mxu0 0
      %1177 = vmatpush1.bf16.xpose.msra.mxu0 0
      %1178 = vmatprep.subr.bf16.mxu0 0
      %1179 = vmatpush1.bf16.xpose.msra.mxu0 0
      %1180 = vmatprep.subr.bf16.mxu0 0
      %1181 = vmatpush1.bf16.xpose.msra.mxu0 0
      %1182 = vmatprep.subr.bf16.mxu0 0
      %1183 = vmatpush1.bf16.xpose.msra.mxu0 0
      %1184 = vmatprep.subr.bf16.mxu0 0
      %1185 = vmatpush1.bf16.xpose.msra.mxu0 0
      %1186 = vmatprep.subr.bf16.mxu0 0
      %1187 = vmatpush1.bf16.xpose.msra.mxu0 0
      %1188 = vmatprep.mubr.bf16.mxu0 0
      %1189 = vmatmul.mubr.bf16.gmra.mrb[0].mxu0 %v1145
      %v1190 = vpop.f32.mrb[0].mxu0
      %v1191 = vadd.f32 0.0, %v1190
      %v1192 = vpop.f32.mrb[0].mxu0
      %v1193 = vpop.f32.mrb[0].mxu0
      %v1194 = vadd.f32 0.0, %v1193
      %v1195 = vpop.f32.mrb[0].mxu0
      %1196 = vmatprep.mubr.bf16.mxu0 0
      %1197 = vmatmul.mubr.bf16.gmra.mrb[0].mxu0 %v1148
      %v1198 = vpop.f32.mrb[0].mxu0
      %v1199 = vadd.f32 0.0, %v1198
      %v1200 = vpop.f32.mrb[0].mxu0
      %v1201 = vpop.f32.mrb[0].mxu0
      %v1202 = vpop.f32.mrb[0].mxu0
      %1203 = vdwg.mxu0
      %v1204 = vsel %vm511, %v1191, -inf
      %1205 = vmax.xlane.f32.xlu0 %v1204
      %v1206 = vpop.xlane.xlu0 %1205
      %v1207 = vsel %vm511, %v1194, -inf
      %1208 = vmax.xlane.f32.xlu0 %v1207
      %v1209 = vpop.xlane.xlu0 %1208
      %v1210 = vsel %vm518, %v1199, -inf
      %1211 = vmax.xlane.f32.xlu0 %v1210
      %v1212 = vpop.xlane.xlu0 %1211
      %v1213 = vsub.f32 %v1191, %v1206
      %v1214 = vsub.f32 %v1194, %v1209
      %v1215 = vsub.f32 %v1199, %v1212
      %v1216 = vmul.f32 %v1213, 1.442695
      %v1217 = vpow.pop %v1216
      %v1218 = vmul.f32 %v1214, 1.442695
      %v1219 = vpow.pop %v1218
      %v1220 = vmul.f32 %v1215, 1.442695
      %v1221 = vpow.pop %v1220
      %v1222 = vsel %vm511, %v1217, 0.0
      %1223 = vadd.xlane.f32.xlu0 %v1222
      %v1224 = vpop.xlane.xlu0 %1223
      %v1225 = vsel %vm511, %v1219, 0.0
      %1226 = vadd.xlane.f32.xlu0 %v1225
      %v1227 = vpop.xlane.xlu0 %1226
      %v1228 = vsel %vm518, %v1221, 0.0
      %1229 = vadd.xlane.f32.xlu0 %v1228
      %v1230 = vpop.xlane.xlu0 %1229
      %v1231 = vrcp.pop %v1224
      %v1232 = vrcp.pop %v1227
      %v1233 = vrcp.pop %v1230
      %v1234 = vmul.f32 %v1217, %v1231
      %v1235 = vmul.f32 %v1219, %v1232
      %v1236 = vmul.f32 %v1221, %v1233
      %v1237 = vpack.c.bf16 %v1235, %v1234
      %v1238 = vpack.c.bf16 %v1236, %v1236
      %1239 = vrot.lane.b32.xlu0 %v442, 40
      %v1240 = vpop.permute.xlu0 %1239
      %1241 = vrot.lane.b32.xlu0 %v443, 40
      %v1242 = vpop.permute.xlu0 %1241
      %v1245 = vsel %vm511, %v1237, 0
      %v1248 = vsel %vm511, %v1238, 0
      %v1251 = vand.u32 %v1242, %v562
      %1253 = vmatprep.subr.bf16.mxu0 0
      %1254 = vmatpush1.bf16.msra.mxu0 %v1240
      %1255 = vmatprep.subr.bf16.mxu0 0
      %1256 = vmatpush1.bf16.msra.mxu0 %v1251
      %1257 = vmatprep.subr.bf16.mxu0 0
      %1258 = vmatpush1.bf16.msra.mxu0 0
      %1259 = vmatprep.subr.bf16.mxu0 0
      %1260 = vmatpush1.bf16.msra.mxu0 0
      %1261 = vmatprep.subr.bf16.mxu0 0
      %1262 = vmatpush1.bf16.msra.mxu0 0
      %1263 = vmatprep.subr.bf16.mxu0 0
      %1264 = vmatpush1.bf16.msra.mxu0 0
      %1265 = vmatprep.subr.bf16.mxu0 0
      %1266 = vmatpush1.bf16.msra.mxu0 0
      %1267 = vmatprep.subr.bf16.mxu0 0
      %1268 = vmatpush1.bf16.msra.mxu0 0
      %1269 = vmatprep.subr.bf16.mxu0 0
      %1270 = vmatpush1.bf16.msra.mxu0 0
      %1271 = vmatprep.subr.bf16.mxu0 0
      %1272 = vmatpush1.bf16.msra.mxu0 0
      %1273 = vmatprep.subr.bf16.mxu0 0
      %1274 = vmatpush1.bf16.msra.mxu0 0
      %1275 = vmatprep.subr.bf16.mxu0 0
      %1276 = vmatpush1.bf16.msra.mxu0 0
      %1277 = vmatprep.subr.bf16.mxu0 0
      %1278 = vmatpush1.bf16.msra.mxu0 0
      %1279 = vmatprep.subr.bf16.mxu0 0
      %1280 = vmatpush1.bf16.msra.mxu0 0
      %1281 = vmatprep.subr.bf16.mxu0 0
      %1282 = vmatpush1.bf16.msra.mxu0 0
      %1283 = vmatprep.subr.bf16.mxu0 0
      %1284 = vmatpush1.bf16.msra.mxu0 0
      %1285 = vmatprep.mubr.bf16.mxu0 0
      %1286 = vmatmul.mubr.bf16.gmra.mrb[0].mxu0 %v1245
      %v1287 = vpop.f32.mrb[0].mxu0
      %v1288 = vadd.f32 0.0, %v1287
      %v1289 = vpop.f32.mrb[0].mxu0
      %v1290 = vpop.f32.mrb[0].mxu0
      %v1291 = vadd.f32 0.0, %v1290
      %v1292 = vpop.f32.mrb[0].mxu0
      %1293 = vmatprep.mubr.bf16.mxu0 0
      %1294 = vmatmul.mubr.bf16.gmra.mrb[0].mxu0 %v1248
      %v1295 = vpop.f32.mrb[0].mxu0
      %v1296 = vadd.f32 0.0, %v1295
      %v1297 = vpop.f32.mrb[0].mxu0
      %v1298 = vpop.f32.mrb[0].mxu0
      %v1299 = vpop.f32.mrb[0].mxu0
      %1300 = vdwg.mxu0
      %v1301 = vpack.c.bf16 %v1291, %v1288
      %v1302 = vpack.c.bf16 %v1296, %v1296
      %v1303 = vld [vmem:[%s5 + $0xc] sm:$0xf]
      %v1305 = vsel %vm450, %v1301, 0
      %v1308 = vsel %vm450, %v1302, 0
      %v1311 = vsel %vm623, %v1303, 0
      %1313 = vmatprep.subr.bf16.mxu0 0
      %1314 = vmatpush1.bf16.msra.mxu0 %v1311
      %1315 = vmatprep.subr.bf16.mxu0 0
      %1316 = vmatpush1.bf16.msra.mxu0 0
      %1317 = vmatprep.subr.bf16.mxu0 0
      %1318 = vmatpush1.bf16.msra.mxu0 0
      %1319 = vmatprep.subr.bf16.mxu0 0
      %1320 = vmatpush1.bf16.msra.mxu0 0
      %1321 = vmatprep.subr.bf16.mxu0 0
      %1322 = vmatpush1.bf16.msra.mxu0 0
      %1323 = vmatprep.subr.bf16.mxu0 0
      %1324 = vmatpush1.bf16.msra.mxu0 0
      %1325 = vmatprep.subr.bf16.mxu0 0
      %1326 = vmatpush1.bf16.msra.mxu0 0
      %1327 = vmatprep.subr.bf16.mxu0 0
      %1328 = vmatpush1.bf16.msra.mxu0 0
      %1329 = vmatprep.subr.bf16.mxu0 0
      %1330 = vmatpush1.bf16.msra.mxu0 0
      %1331 = vmatprep.subr.bf16.mxu0 0
      %1332 = vmatpush1.bf16.msra.mxu0 0
      %1333 = vmatprep.subr.bf16.mxu0 0
      %1334 = vmatpush1.bf16.msra.mxu0 0
      %1335 = vmatprep.subr.bf16.mxu0 0
      %1336 = vmatpush1.bf16.msra.mxu0 0
      %1337 = vmatprep.subr.bf16.mxu0 0
      %1338 = vmatpush1.bf16.msra.mxu0 0
      %1339 = vmatprep.subr.bf16.mxu0 0
      %1340 = vmatpush1.bf16.msra.mxu0 0
      %1341 = vmatprep.subr.bf16.mxu0 0
      %1342 = vmatpush1.bf16.msra.mxu0 0
      %1343 = vmatprep.subr.bf16.mxu0 0
      %1344 = vmatpush1.bf16.msra.mxu0 0
      %1345 = vmatprep.mubr.bf16.mxu0 0
      %1346 = vmatmul.mubr.bf16.gmra.mrb[0].mxu0 %v1305
      %v1347 = vpop.f32.mrb[0].mxu0
      %v1348 = vadd.f32 0.0, %v1347
      %v1349 = vpop.f32.mrb[0].mxu0
      %v1350 = vpop.f32.mrb[0].mxu0
      %v1351 = vadd.f32 0.0, %v1350
      %v1352 = vpop.f32.mrb[0].mxu0
      %1353 = vmatprep.mubr.bf16.mxu0 0
      %1354 = vmatmul.mubr.bf16.gmra.mrb[0].mxu0 %v1308
      %v1355 = vpop.f32.mrb[0].mxu0
      %v1356 = vadd.f32 0.0, %v1355
      %v1357 = vpop.f32.mrb[0].mxu0
      %v1358 = vpop.f32.mrb[0].mxu0
      %v1359 = vpop.f32.mrb[0].mxu0
      %1360 = vdwg.mxu0
      %v1361 = vadd.f32 %v1133, %v1348
      %v1362 = vadd.f32 %v1134, %v1351
      %v1363 = vadd.f32 %v1135, %v1356
      %v1364 = vpack.c.bf16 %v1362, %v1361
      %v1365 = vpack.c.bf16 %v1363, %v1363
      %v1368 = vunpack.c.l.b16 %v1364
      %v1369 = vunpack.c.h.b16 %v1364
      %v1370 = vunpack.c.l.b16 %v1365
      %v1371 = vpack.c.b16 %v1368, %v1368
      %v1372 = vpack.c.b16 %v1369, %v1369
      %v1373 = vpack.c.b16 %v1370, %v1370
      %vm1377 = vcmask 257024
      %1378 = vst.msk [vmem:[%s278] sm:$0xf] %vm1377, %v1371
      %1379 = vst.msk [vmem:[%s278 + $0x4] sm:$0xf] %vm1377, %v1372
      %vm1380 = vcmask 254976
      %vm1381 = vsmask.f32 1280
      %vm1382 = vmand %vm1380, %vm1381
      %v1383 = vld [vmem:[%s278 + $0x8] sm:$0x3]
      %v1384 = vsel %vm1382, %v1373, %v1383
      %1385 = vst [vmem:[%s278 + $0x8] sm:$0x3] %v1384
      %p1386 = scmp.lt.s32.totalorder %s18, 1
      %s1387 = scalar_select %p1386, %s18, 1
      %s1388 = smul.addr %s1387, 3
      %s1389 = smul.addr %s1388, 4
      %s1390 = scalar_lea.vmem %s7, %s1389
      // Predicated region
      $region49: #{_lambda_.22} parent=47 // pred_check
        %p1391 = pneg %p188
      $region50: #{_lambda_.22} parent=47 // pred_check_branch
        %1393 = sbr.rel (%p1391) target = $region52
      $region51: #{_lambda_.22} parent=47 // pred_region
        _
      $region52: #{_lambda_.22} parent=47 // pred_fallthru
        _
    $region48: #{_lambda_.22} parent=5 // pred_fallthru
      _
    %p1394 = scmp.le.s32.totalorder 2, %s13
    // Predicated region
    $region53: #{_lambda_.22} parent=5 // pred_check
      %p1395 = pneg %p1394
    $region54: #{_lambda_.22} parent=5 // pred_check_branch
      %1397 = sbr.rel (%p1395) target = $region56
    $region55: #{_lambda_.22} parent=5 // pred_region
      %s1398 = ssub.s32 %s13, 2
      // Predicated region
      $region57: #{_lambda_.22} parent=55 // pred_check
        %p1399 = pneg %p194
      $region58: #{_lambda_.22} parent=55 // pred_check_branch
        %1401 = sbr.rel (%p1399) target = $region60
      $region59: #{_lambda_.22} parent=55 // pred_region
        %p1402 = scmp.lt.s32.totalorder %s19, 1
        %s1403 = scalar_select %p1402, %s19, 1
        %s1404 = smul.addr %s1403, 3
        %s1405 = smul.addr %s1404, 4
        %s1406 = scalar_lea.vmem %s7, %s1405
      $region60: #{_lambda_.22} parent=55 // pred_fallthru
        _
    $region56: #{_lambda_.22} parent=5 // pred_fallthru
      _
  $region6: #{_lambda_.22} parent=0 // loop_footer
    %s17 = sadd.s32 1, %s13
  $region7: #{_lambda_.22} parent=0 // loop_footer_branch
    %12 = sbr.rel target = $region3
  $region8: #{_lambda_.22} parent=0 // loop_exit
    _

// kernel: _lambda_.26
$region0: #{_lambda_.26}
  #allocation0 [shape = 'u32[]', space=smem, size = 0x4, offset = 0x4, fixed_abs, tag = 'smem constant byte address 0x4 - core index']
  #allocation1 [shape = 'u32[144,128]{1,0:T(1,128)}', space=vmem, size = 0x12000, scoped, tag = 'internal scratch']
  #allocation2 [shape = 'bf16[2,32]{1,0:T(2,128)(2,1)}', space=vmem, size = 0x200, scoped, tag = 'scratch operand']
  %s0 = inlined_call_operand.vmem [shape: bf16[2,32], index: 0, kind: input, shape index: {}]
  %s1 = inlined_call_operand.vmem [shape: f32[1,32], index: 1, kind: input, shape index: {}]
  %s2 = inlined_call_operand.vmem [shape: f32[1,32], index: 2, kind: input, shape index: {}]
  %s3 = inlined_call_operand.vmem [shape: bf16[32,16], index: 3, kind: input, shape index: {}]
  %s4 = inlined_call_operand.vmem [shape: f32[1,16], index: 4, kind: input, shape index: {}]
  %s5 = inlined_call_operand.vmem [shape: f32[2,16], index: 5, kind: output, shape index: {}]
  %s6 = sld [smem:[#allocation0]]
  $region34: #{_lambda_.26} parent=0
    _
  %s8 = ssub.s32 1, %s6
  %s9 = scalar_select 0, %s8, %s6
  // Predicated region
  $region2: #{_lambda_.26} parent=0 // pred_check
    _
  $region3: #{_lambda_.26} parent=0 // pred_check_branch
    %11 = sbr.rel (0) target = $region5
  $region4: #{_lambda_.26} parent=0 // pred_region
    _
  $region5: #{_lambda_.26} parent=0 // pred_fallthru
    _
  // Predicated region
  $region6: #{_lambda_.26} parent=0 // pred_check
    _
  $region7: #{_lambda_.26} parent=0 // pred_check_branch
    %13 = sbr.rel (0) target = $region9
  $region8: #{_lambda_.26} parent=0 // pred_region
    _
  $region9: #{_lambda_.26} parent=0 // pred_fallthru
    _
  // Predicated region
  $region10: #{_lambda_.26} parent=0 // pred_check
    _
  $region11: #{_lambda_.26} parent=0 // pred_check_branch
    %15 = sbr.rel (0) target = $region13
  $region12: #{_lambda_.26} parent=0 // pred_region
    _
  $region13: #{_lambda_.26} parent=0 // pred_fallthru
    _
  // Predicated region
  $region14: #{_lambda_.26} parent=0 // pred_check
    _
  $region15: #{_lambda_.26} parent=0 // pred_check_branch
    %17 = sbr.rel (0) target = $region17
  $region16: #{_lambda_.26} parent=0 // pred_region
    _
  $region17: #{_lambda_.26} parent=0 // pred_fallthru
    _
  // Predicated region
  $region18: #{_lambda_.26} parent=0 // pred_check
    _
  $region19: #{_lambda_.26} parent=0 // pred_check_branch
    %19 = sbr.rel (0) target = $region21
  $region20: #{_lambda_.26} parent=0 // pred_region
    _
  $region21: #{_lambda_.26} parent=0 // pred_fallthru
    _
  %p21 = scmp.eq.s32.totalorder 0, 0
  // Predicated region
  $region22: #{_lambda_.26} parent=0 // pred_check
    %p22 = pneg %p21
  $region23: #{_lambda_.26} parent=0 // pred_check_branch
    %24 = sbr.rel (%p22) target = $region25
  $region24: #{_lambda_.26} parent=0 // pred_region
    %v25 = vld [vmem:[%s0] sm:$0x1]
    %v26 = vunpack.c.l.bf16 %v25
    %vm27 = vcmask 254976
    %v28 = vsel %vm27, %v26, 0.0
    %29 = vadd.xlane.f32.xlu0 %v28
    %v30 = vpop.xlane.xlu0 %29
    %v31 = vrcp.pop 32.0
    %v32 = vmul.f32 %v30, %v31
    %v33 = vsub.f32 %v26, %v32
    %v34 = vmul.f32 %v33, %v33
    %v35 = vsel %vm27, %v34, 0.0
    %36 = vadd.xlane.f32.xlu0 %v35
    %v37 = vpop.xlane.xlu0 %36
    %v38 = vmul.f32 %v37, %v31
    %v39 = vadd.f32 %v38, 1e-05
    %v40 = vrsqrt.pop %v39
    %v41 = vmul.f32 %v33, %v40
    %v42 = vld [vmem:[%s1] sm:$0x1]
    %v44 = vlaneseq
    %v45 = vshrl.u32 %v44, 7
    %v46 = vsub.s32 0, %v45
    %v47 = vrot.slane %v42, %v46
    %v49 = vmul.f32 %v41, %v47
    %v50 = vld [vmem:[%s2] sm:$0x1]
    %v52 = vlaneseq
    %v53 = vshrl.u32 %v52, 7
    %v54 = vsub.s32 0, %v53
    %v55 = vrot.slane %v50, %v54
    %v57 = vadd.f32 %v49, %v55
    %v58 = vpack.c.bf16 %v57, %v57
    %vm59 = vcmask 253952
    %60 = vst.msk [vmem:[#allocation2] sm:$0x1] %vm59, %v58
  $region25: #{_lambda_.26} parent=0 // pred_fallthru
    _
  %v61 = vld [vmem:[#allocation2] sm:$0x1]
  %v62 = vld [vmem:[%s3] sm:$0xf]
  %v63 = vld [vmem:[%s3 + $0x4] sm:$0xf]
  %v64 = vld [vmem:[%s3 + $0x8] sm:$0xf]
  %v65 = vld [vmem:[%s3 + $0xc] sm:$0xf]
  %v66 = vld [vmem:[%s4] sm:$0x1]
  %v68 = vlaneseq
  %v69 = vshrl.u32 %v68, 7
  %v70 = vsub.s32 0, %v69
  %v71 = vrot.slane %v66, %v70
  %v77 = vunpack.c.l.b16 %v62
  %v78 = vunpack.c.l.b16 %v63
  %v79 = vunpack.c.l.b16 %v64
  %v80 = vunpack.c.l.b16 %v65
  %v81 = vpack.c.b16 %v78, %v77
  %v82 = vpack.c.b16 %v80, %v79
  %vm85 = vcmask 261120
  %v87 = vsel %vm85, %v61, 0
  %89 = vmatprep.subr.bf16.mxu0 0
  %90 = vmatpush1.bf16.msra.mxu0 %v81
  %91 = vmatprep.subr.bf16.mxu0 0
  %92 = vmatpush1.bf16.msra.mxu0 %v82
  %93 = vmatprep.subr.bf16.mxu0 0
  %94 = vmatpush1.bf16.msra.mxu0 0
  %95 = vmatprep.subr.bf16.mxu0 0
  %96 = vmatpush1.bf16.msra.mxu0 0
  %97 = vmatprep.subr.bf16.mxu0 0
  %98 = vmatpush1.bf16.msra.mxu0 0
  %99 = vmatprep.subr.bf16.mxu0 0
  %100 = vmatpush1.bf16.msra.mxu0 0
  %101 = vmatprep.subr.bf16.mxu0 0
  %102 = vmatpush1.bf16.msra.mxu0 0
  %103 = vmatprep.subr.bf16.mxu0 0
  %104 = vmatpush1.bf16.msra.mxu0 0
  %105 = vmatprep.subr.bf16.mxu0 0
  %106 = vmatpush1.bf16.msra.mxu0 0
  %107 = vmatprep.subr.bf16.mxu0 0
  %108 = vmatpush1.bf16.msra.mxu0 0
  %109 = vmatprep.subr.bf16.mxu0 0
  %110 = vmatpush1.bf16.msra.mxu0 0
  %111 = vmatprep.subr.bf16.mxu0 0
  %112 = vmatpush1.bf16.msra.mxu0 0
  %113 = vmatprep.subr.bf16.mxu0 0
  %114 = vmatpush1.bf16.msra.mxu0 0
  %115 = vmatprep.subr.bf16.mxu0 0
  %116 = vmatpush1.bf16.msra.mxu0 0
  %117 = vmatprep.subr.bf16.mxu0 0
  %118 = vmatpush1.bf16.msra.mxu0 0
  %119 = vmatprep.subr.bf16.mxu0 0
  %120 = vmatpush1.bf16.msra.mxu0 0
  %121 = vmatprep.mubr.bf16.mxu0 0
  %122 = vmatmul.mubr.bf16.gmra.mrb[0].mxu0 %v87
  %v123 = vpop.f32.mrb[0].mxu0
  %v124 = vadd.f32 %v71, %v123
  %v125 = vpop.f32.mrb[0].mxu0
  %v126 = vpop.f32.mrb[0].mxu0
  %v127 = vpop.f32.mrb[0].mxu0
  %128 = vdwg.mxu0
  %vm129 = vcmask 123904
  %130 = vst.msk [vmem:[%s5] sm:$0x3] %vm129, %v124
  // Predicated region
  $region26: #{_lambda_.26} parent=0 // pred_check
    _
  $region27: #{_lambda_.26} parent=0 // pred_check_branch
    %132 = sbr.rel (0) target = $region29
  $region28: #{_lambda_.26} parent=0 // pred_region
    _
  $region29: #{_lambda_.26} parent=0 // pred_fallthru
    _
  // Predicated region
  $region30: #{_lambda_.26} parent=0 // pred_check
    _
  $region31: #{_lambda_.26} parent=0 // pred_check_branch
    %134 = sbr.rel (0) target = $region33
  $region32: #{_lambda_.26} parent=0 // pred_region
    _
  $region33: #{_lambda_.26} parent=0 // pred_fallthru
    _

// kernel: _lambda_.15
$region0: #{_lambda_.15}
  #allocation0 [shape = 'u32[]', space=smem, size = 0x4, offset = 0x4, fixed_abs, tag = 'smem constant byte address 0x4 - core index']
  #allocation1 [shape = 'u32[144,128]{1,0:T(1,128)}', space=vmem, size = 0x12000, scoped, tag = 'internal scratch']
  %s0 = inlined_call_operand.vmem [shape: bf16[48,32], index: 0, kind: input, shape index: {}]
  %s1 = inlined_call_operand.vmem [shape: f32[1,32], index: 1, kind: input, shape index: {}]
  %s2 = inlined_call_operand.vmem [shape: f32[1,32], index: 2, kind: input, shape index: {}]
  %s3 = inlined_call_operand.vmem [shape: bf16[32,128], index: 3, kind: input, shape index: {}]
  %s4 = inlined_call_operand.vmem [shape: f32[1,128], index: 4, kind: input, shape index: {}]
  %s5 = inlined_call_operand.vmem [shape: bf16[128,32], index: 5, kind: input, shape index: {}]
  %s6 = inlined_call_operand.vmem [shape: f32[1,32], index: 6, kind: input, shape index: {}]
  %s7 = inlined_call_operand.vmem [shape: bf16[48,32], index: 7, kind: output, shape index: {}]
  %s8 = sld [smem:[#allocation0]]
  $region38: #{_lambda_.15} parent=0
    _
  %s10 = ssub.s32 1, %s8
  %s11 = scalar_select 0, %s10, %s8
  // Predicated region
  $region2: #{_lambda_.15} parent=0 // pred_check
    _
  $region3: #{_lambda_.15} parent=0 // pred_check_branch
    %13 = sbr.rel (0) target = $region5
  $region4: #{_lambda_.15} parent=0 // pred_region
    _
  $region5: #{_lambda_.15} parent=0 // pred_fallthru
    _
  // Predicated region
  $region6: #{_lambda_.15} parent=0 // pred_check
    _
  $region7: #{_lambda_.15} parent=0 // pred_check_branch
    %15 = sbr.rel (0) target = $region9
  $region8: #{_lambda_.15} parent=0 // pred_region
    _
  $region9: #{_lambda_.15} parent=0 // pred_fallthru
    _
  // Predicated region
  $region10: #{_lambda_.15} parent=0 // pred_check
    _
  $region11: #{_lambda_.15} parent=0 // pred_check_branch
    %17 = sbr.rel (0) target = $region13
  $region12: #{_lambda_.15} parent=0 // pred_region
    _
  $region13: #{_lambda_.15} parent=0 // pred_fallthru
    _
  // Predicated region
  $region14: #{_lambda_.15} parent=0 // pred_check
    _
  $region15: #{_lambda_.15} parent=0 // pred_check_branch
    %19 = sbr.rel (0) target = $region17
  $region16: #{_lambda_.15} parent=0 // pred_region
    _
  $region17: #{_lambda_.15} parent=0 // pred_fallthru
    _
  // Predicated region
  $region18: #{_lambda_.15} parent=0 // pred_check
    _
  $region19: #{_lambda_.15} parent=0 // pred_check_branch
    %21 = sbr.rel (0) target = $region21
  $region20: #{_lambda_.15} parent=0 // pred_region
    _
  $region21: #{_lambda_.15} parent=0 // pred_fallthru
    _
  // Predicated region
  $region22: #{_lambda_.15} parent=0 // pred_check
    _
  $region23: #{_lambda_.15} parent=0 // pred_check_branch
    %23 = sbr.rel (0) target = $region25
  $region24: #{_lambda_.15} parent=0 // pred_region
    _
  $region25: #{_lambda_.15} parent=0 // pred_fallthru
    _
  // Predicated region
  $region26: #{_lambda_.15} parent=0 // pred_check
    _
  $region27: #{_lambda_.15} parent=0 // pred_check_branch
    %25 = sbr.rel (0) target = $region29
  $region28: #{_lambda_.15} parent=0 // pred_region
    _
  $region29: #{_lambda_.15} parent=0 // pred_fallthru
    _
  %v27 = vld [vmem:[%s0] sm:$0xf]
  %v28 = vld [vmem:[%s0 + $0x4] sm:$0xf]
  %v29 = vld [vmem:[%s0 + $0x8] sm:$0xf]
  %v30 = vld [vmem:[%s0 + $0xc] sm:$0xf]
  %v31 = vld [vmem:[%s0 + $0x10] sm:$0xf]
  %v32 = vld [vmem:[%s0 + $0x14] sm:$0xf]
  %v33 = vunpack.c.l.bf16 %v27
  %v34 = vunpack.c.l.bf16 %v28
  %v35 = vunpack.c.l.bf16 %v29
  %v36 = vunpack.c.l.bf16 %v30
  %v37 = vunpack.c.l.bf16 %v31
  %v38 = vunpack.c.l.bf16 %v32
  %vm39 = vcmask 261120
  %v40 = vsel %vm39, %v33, 0.0
  %41 = vadd.xlane.f32.xlu0 %v40
  %v42 = vpop.xlane.xlu0 %41
  %v43 = vsel %vm39, %v34, 0.0
  %44 = vadd.xlane.f32.xlu0 %v43
  %v45 = vpop.xlane.xlu0 %44
  %v46 = vsel %vm39, %v35, 0.0
  %47 = vadd.xlane.f32.xlu0 %v46
  %v48 = vpop.xlane.xlu0 %47
  %v49 = vsel %vm39, %v36, 0.0
  %50 = vadd.xlane.f32.xlu0 %v49
  %v51 = vpop.xlane.xlu0 %50
  %v52 = vsel %vm39, %v37, 0.0
  %53 = vadd.xlane.f32.xlu0 %v52
  %v54 = vpop.xlane.xlu0 %53
  %v55 = vsel %vm39, %v38, 0.0
  %56 = vadd.xlane.f32.xlu0 %v55
  %v57 = vpop.xlane.xlu0 %56
  %v58 = vrcp.pop 32.0
  %v59 = vmul.f32 %v42, %v58
  %v60 = vmul.f32 %v45, %v58
  %v61 = vmul.f32 %v48, %v58
  %v62 = vmul.f32 %v51, %v58
  %v63 = vmul.f32 %v54, %v58
  %v64 = vmul.f32 %v57, %v58
  %v65 = vsub.f32 %v33, %v59
  %v66 = vsub.f32 %v34, %v60
  %v67 = vsub.f32 %v35, %v61
  %v68 = vsub.f32 %v36, %v62
  %v69 = vsub.f32 %v37, %v63
  %v70 = vsub.f32 %v38, %v64
  %v71 = vmul.f32 %v65, %v65
  %v72 = vmul.f32 %v66, %v66
  %v73 = vmul.f32 %v67, %v67
  %v74 = vmul.f32 %v68, %v68
  %v75 = vmul.f32 %v69, %v69
  %v76 = vmul.f32 %v70, %v70
  %v77 = vsel %vm39, %v71, 0.0
  %78 = vadd.xlane.f32.xlu0 %v77
  %v79 = vpop.xlane.xlu0 %78
  %v80 = vsel %vm39, %v72, 0.0
  %81 = vadd.xlane.f32.xlu0 %v80
  %v82 = vpop.xlane.xlu0 %81
  %v83 = vsel %vm39, %v73, 0.0
  %84 = vadd.xlane.f32.xlu0 %v83
  %v85 = vpop.xlane.xlu0 %84
  %v86 = vsel %vm39, %v74, 0.0
  %87 = vadd.xlane.f32.xlu0 %v86
  %v88 = vpop.xlane.xlu0 %87
  %v89 = vsel %vm39, %v75, 0.0
  %90 = vadd.xlane.f32.xlu0 %v89
  %v91 = vpop.xlane.xlu0 %90
  %v92 = vsel %vm39, %v76, 0.0
  %93 = vadd.xlane.f32.xlu0 %v92
  %v94 = vpop.xlane.xlu0 %93
  %v95 = vmul.f32 %v79, %v58
  %v96 = vmul.f32 %v82, %v58
  %v97 = vmul.f32 %v85, %v58
  %v98 = vmul.f32 %v88, %v58
  %v99 = vmul.f32 %v91, %v58
  %v100 = vmul.f32 %v94, %v58
  %v101 = vadd.f32 %v95, 1e-05
  %v102 = vadd.f32 %v96, 1e-05
  %v103 = vadd.f32 %v97, 1e-05
  %v104 = vadd.f32 %v98, 1e-05
  %v105 = vadd.f32 %v99, 1e-05
  %v106 = vadd.f32 %v100, 1e-05
  %v107 = vrsqrt.pop %v101
  %v108 = vrsqrt.pop %v102
  %v109 = vrsqrt.pop %v103
  %v110 = vrsqrt.pop %v104
  %v111 = vrsqrt.pop %v105
  %v112 = vrsqrt.pop %v106
  %v113 = vmul.f32 %v65, %v107
  %v114 = vmul.f32 %v66, %v108
  %v115 = vmul.f32 %v67, %v109
  %v116 = vmul.f32 %v68, %v110
  %v117 = vmul.f32 %v69, %v111
  %v118 = vmul.f32 %v70, %v112
  %v119 = vld [vmem:[%s1] sm:$0x1]
  %v121 = vlaneseq
  %v122 = vshrl.u32 %v121, 7
  %v123 = vsub.s32 0, %v122
  %v124 = vrot.slane %v119, %v123
  %v126 = vmul.f32 %v113, %v124
  %v127 = vmul.f32 %v114, %v124
  %v128 = vmul.f32 %v115, %v124
  %v129 = vmul.f32 %v116, %v124
  %v130 = vmul.f32 %v117, %v124
  %v131 = vmul.f32 %v118, %v124
  %v132 = vld [vmem:[%s2] sm:$0x1]
  %v134 = vlaneseq
  %v135 = vshrl.u32 %v134, 7
  %v136 = vsub.s32 0, %v135
  %v137 = vrot.slane %v132, %v136
  %v139 = vadd.f32 %v126, %v137
  %v140 = vadd.f32 %v127, %v137
  %v141 = vadd.f32 %v128, %v137
  %v142 = vadd.f32 %v129, %v137
  %v143 = vadd.f32 %v130, %v137
  %v144 = vadd.f32 %v131, %v137
  %v145 = vpack.c.bf16 %v140, %v139
  %v146 = vpack.c.bf16 %v142, %v141
  %v147 = vpack.c.bf16 %v144, %v143
  %v148 = vld [vmem:[%s3] sm:$0xf]
  %v149 = vld [vmem:[%s3 + $0x4] sm:$0xf]
  %v150 = vld [vmem:[%s3 + $0x8] sm:$0xf]
  %v151 = vld [vmem:[%s3 + $0xc] sm:$0xf]
  %v152 = vld [vmem:[%s4] sm:$0x1]
  %v154 = vlaneseq
  %v155 = vshrl.u32 %v154, 7
  %v156 = vsub.s32 0, %v155
  %v157 = vrot.slane %v152, %v156
  %v163 = vunpack.c.l.b16 %v148
  %v164 = vunpack.c.l.b16 %v149
  %v165 = vunpack.c.l.b16 %v150
  %v166 = vunpack.c.l.b16 %v151
  %v167 = vpack.c.b16 %v164, %v163
  %v168 = vpack.c.b16 %v166, %v165
  %v172 = vsel %vm39, %v145, 0
  %v175 = vsel %vm39, %v146, 0
  %v178 = vsel %vm39, %v147, 0
  %180 = vmatprep.subr.bf16.mxu0 0
  %181 = vmatpush1.bf16.msra.mxu0 %v167
  %182 = vmatprep.subr.bf16.mxu0 0
  %183 = vmatpush1.bf16.msra.mxu0 %v168
  %184 = vmatprep.subr.bf16.mxu0 0
  %185 = vmatpush1.bf16.msra.mxu0 0
  %186 = vmatprep.subr.bf16.mxu0 0
  %187 = vmatpush1.bf16.msra.mxu0 0
  %188 = vmatprep.subr.bf16.mxu0 0
  %189 = vmatpush1.bf16.msra.mxu0 0
  %190 = vmatprep.subr.bf16.mxu0 0
  %191 = vmatpush1.bf16.msra.mxu0 0
  %192 = vmatprep.subr.bf16.mxu0 0
  %193 = vmatpush1.bf16.msra.mxu0 0
  %194 = vmatprep.subr.bf16.mxu0 0
  %195 = vmatpush1.bf16.msra.mxu0 0
  %196 = vmatprep.subr.bf16.mxu0 0
  %197 = vmatpush1.bf16.msra.mxu0 0
  %198 = vmatprep.subr.bf16.mxu0 0
  %199 = vmatpush1.bf16.msra.mxu0 0
  %200 = vmatprep.subr.bf16.mxu0 0
  %201 = vmatpush1.bf16.msra.mxu0 0
  %202 = vmatprep.subr.bf16.mxu0 0
  %203 = vmatpush1.bf16.msra.mxu0 0
  %204 = vmatprep.subr.bf16.mxu0 0
  %205 = vmatpush1.bf16.msra.mxu0 0
  %206 = vmatprep.subr.bf16.mxu0 0
  %207 = vmatpush1.bf16.msra.mxu0 0
  %208 = vmatprep.subr.bf16.mxu0 0
  %209 = vmatpush1.bf16.msra.mxu0 0
  %210 = vmatprep.subr.bf16.mxu0 0
  %211 = vmatpush1.bf16.msra.mxu0 0
  %212 = vmatprep.mubr.bf16.mxu0 0
  %213 = vmatmul.mubr.bf16.gmra.mrb[0].mxu0 %v172
  %v214 = vpop.f32.mrb[0].mxu0
  %v215 = vadd.f32 %v157, %v214
  %v216 = vpop.f32.mrb[0].mxu0
  %v217 = vpop.f32.mrb[0].mxu0
  %v218 = vadd.f32 %v157, %v217
  %v219 = vpop.f32.mrb[0].mxu0
  %220 = vmatprep.mubr.bf16.mxu0 0
  %221 = vmatmul.mubr.bf16.gmra.mrb[0].mxu0 %v175
  %v222 = vpop.f32.mrb[0].mxu0
  %v223 = vadd.f32 %v157, %v222
  %v224 = vpop.f32.mrb[0].mxu0
  %v225 = vpop.f32.mrb[0].mxu0
  %v226 = vadd.f32 %v157, %v225
  %v227 = vpop.f32.mrb[0].mxu0
  %228 = vmatprep.mubr.bf16.mxu0 0
  %229 = vmatmul.mubr.bf16.gmra.mrb[0].mxu0 %v178
  %v230 = vpop.f32.mrb[0].mxu0
  %v231 = vadd.f32 %v157, %v230
  %v232 = vpop.f32.mrb[0].mxu0
  %v233 = vpop.f32.mrb[0].mxu0
  %v234 = vadd.f32 %v157, %v233
  %v235 = vpop.f32.mrb[0].mxu0
  %236 = vdwg.mxu0
  %v237 = vmul.f32 %v215, 0.5
  %v238 = vmul.f32 %v218, 0.5
  %v239 = vmul.f32 %v223, 0.5
  %v240 = vmul.f32 %v226, 0.5
  %v241 = vmul.f32 %v231, 0.5
  %v242 = vmul.f32 %v234, 0.5
  %v243 = vmul.f32 %v215, 0.851
  %v244 = vmul.f32 %v218, 0.851
  %v245 = vmul.f32 %v223, 0.851
  %v246 = vmul.f32 %v226, 0.851
  %v247 = vmul.f32 %v231, 0.851
  %v248 = vmul.f32 %v234, 0.851
  %v249 = vtanh.pop %v243
  %v250 = vtanh.pop %v244
  %v251 = vtanh.pop %v245
  %v252 = vtanh.pop %v246
  %v253 = vtanh.pop %v247
  %v254 = vtanh.pop %v248
  %v255 = vadd.f32 %v249, 1.0
  %v256 = vadd.f32 %v250, 1.0
  %v257 = vadd.f32 %v251, 1.0
  %v258 = vadd.f32 %v252, 1.0
  %v259 = vadd.f32 %v253, 1.0
  %v260 = vadd.f32 %v254, 1.0
  %v261 = vmul.f32 %v237, %v255
  %v262 = vmul.f32 %v238, %v256
  %v263 = vmul.f32 %v239, %v257
  %v264 = vmul.f32 %v240, %v258
  %v265 = vmul.f32 %v241, %v259
  %v266 = vmul.f32 %v242, %v260
  %v267 = vpack.c.bf16 %v262, %v261
  %v268 = vpack.c.bf16 %v264, %v263
  %v269 = vpack.c.bf16 %v266, %v265
  %v270 = vld [vmem:[%s5] sm:$0xf]
  %v271 = vld [vmem:[%s5 + $0x4] sm:$0xf]
  %v272 = vld [vmem:[%s5 + $0x8] sm:$0xf]
  %v273 = vld [vmem:[%s5 + $0xc] sm:$0xf]
  %v274 = vld [vmem:[%s5 + $0x10] sm:$0xf]
  %v275 = vld [vmem:[%s5 + $0x14] sm:$0xf]
  %v276 = vld [vmem:[%s5 + $0x18] sm:$0xf]
  %v277 = vld [vmem:[%s5 + $0x1c] sm:$0xf]
  %v278 = vld [vmem:[%s5 + $0x20] sm:$0xf]
  %v279 = vld [vmem:[%s5 + $0x24] sm:$0xf]
  %v280 = vld [vmem:[%s5 + $0x28] sm:$0xf]
  %v281 = vld [vmem:[%s5 + $0x2c] sm:$0xf]
  %v282 = vld [vmem:[%s5 + $0x30] sm:$0xf]
  %v283 = vld [vmem:[%s5 + $0x34] sm:$0xf]
  %v284 = vld [vmem:[%s5 + $0x38] sm:$0xf]
  %v285 = vld [vmem:[%s5 + $0x3c] sm:$0xf]
  %v286 = vld [vmem:[%s6] sm:$0x1]
  %v288 = vlaneseq
  %v289 = vshrl.u32 %v288, 7
  %v290 = vsub.s32 0, %v289
  %v291 = vrot.slane %v286, %v290
  %v309 = vunpack.c.l.b16 %v270
  %v310 = vunpack.c.l.b16 %v271
  %v311 = vunpack.c.l.b16 %v272
  %v312 = vunpack.c.l.b16 %v273
  %v313 = vunpack.c.l.b16 %v274
  %v314 = vunpack.c.l.b16 %v275
  %v315 = vunpack.c.l.b16 %v276
  %v316 = vunpack.c.l.b16 %v277
  %v317 = vunpack.c.l.b16 %v278
  %v318 = vunpack.c.l.b16 %v279
  %v319 = vunpack.c.l.b16 %v280
  %v320 = vunpack.c.l.b16 %v281
  %v321 = vunpack.c.l.b16 %v282
  %v322 = vunpack.c.l.b16 %v283
  %v323 = vunpack.c.l.b16 %v284
  %v324 = vunpack.c.l.b16 %v285
  %v325 = vpack.c.b16 %v310, %v309
  %v326 = vpack.c.b16 %v312, %v311
  %v327 = vpack.c.b16 %v314, %v313
  %v328 = vpack.c.b16 %v316, %v315
  %v329 = vpack.c.b16 %v318, %v317
  %v330 = vpack.c.b16 %v320, %v319
  %v331 = vpack.c.b16 %v322, %v321
  %v332 = vpack.c.b16 %v324, %v323
  %341 = vmatprep.subr.bf16.mxu0 0
  %342 = vmatpush1.bf16.msra.mxu0 %v325
  %343 = vmatprep.subr.bf16.mxu0 0
  %344 = vmatpush1.bf16.msra.mxu0 %v326
  %345 = vmatprep.subr.bf16.mxu0 0
  %346 = vmatpush1.bf16.msra.mxu0 %v327
  %347 = vmatprep.subr.bf16.mxu0 0
  %348 = vmatpush1.bf16.msra.mxu0 %v328
  %349 = vmatprep.subr.bf16.mxu0 0
  %350 = vmatpush1.bf16.msra.mxu0 %v329
  %351 = vmatprep.subr.bf16.mxu0 0
  %352 = vmatpush1.bf16.msra.mxu0 %v330
  %353 = vmatprep.subr.bf16.mxu0 0
  %354 = vmatpush1.bf16.msra.mxu0 %v331
  %355 = vmatprep.subr.bf16.mxu0 0
  %356 = vmatpush1.bf16.msra.mxu0 %v332
  %357 = vmatprep.subr.bf16.mxu0 0
  %358 = vmatpush1.bf16.msra.mxu0 0
  %359 = vmatprep.subr.bf16.mxu0 0
  %360 = vmatpush1.bf16.msra.mxu0 0
  %361 = vmatprep.subr.bf16.mxu0 0
  %362 = vmatpush1.bf16.msra.mxu0 0
  %363 = vmatprep.subr.bf16.mxu0 0
  %364 = vmatpush1.bf16.msra.mxu0 0
  %365 = vmatprep.subr.bf16.mxu0 0
  %366 = vmatpush1.bf16.msra.mxu0 0
  %367 = vmatprep.subr.bf16.mxu0 0
  %368 = vmatpush1.bf16.msra.mxu0 0
  %369 = vmatprep.subr.bf16.mxu0 0
  %370 = vmatpush1.bf16.msra.mxu0 0
  %371 = vmatprep.subr.bf16.mxu0 0
  %372 = vmatpush1.bf16.msra.mxu0 0
  %373 = vmatprep.mubr.bf16.mxu0 0
  %374 = vmatmul.mubr.bf16.gmra.mrb[0].mxu0 %v267
  %v375 = vpop.f32.mrb[0].mxu0
  %v376 = vadd.f32 %v291, %v375
  %v377 = vpop.f32.mrb[0].mxu0
  %v378 = vpop.f32.mrb[0].mxu0
  %v379 = vadd.f32 %v291, %v378
  %v380 = vpop.f32.mrb[0].mxu0
  %381 = vmatprep.mubr.bf16.mxu0 0
  %382 = vmatmul.mubr.bf16.gmra.mrb[0].mxu0 %v268
  %v383 = vpop.f32.mrb[0].mxu0
  %v384 = vadd.f32 %v291, %v383
  %v385 = vpop.f32.mrb[0].mxu0
  %v386 = vpop.f32.mrb[0].mxu0
  %v387 = vadd.f32 %v291, %v386
  %v388 = vpop.f32.mrb[0].mxu0
  %389 = vmatprep.mubr.bf16.mxu0 0
  %390 = vmatmul.mubr.bf16.gmra.mrb[0].mxu0 %v269
  %v391 = vpop.f32.mrb[0].mxu0
  %v392 = vadd.f32 %v291, %v391
  %v393 = vpop.f32.mrb[0].mxu0
  %v394 = vpop.f32.mrb[0].mxu0
  %v395 = vadd.f32 %v291, %v394
  %v396 = vpop.f32.mrb[0].mxu0
  %397 = vdwg.mxu0
  %v398 = vadd.f32 %v376, %v33
  %v399 = vadd.f32 %v379, %v34
  %v400 = vadd.f32 %v384, %v35
  %v401 = vadd.f32 %v387, %v36
  %v402 = vadd.f32 %v392, %v37
  %v403 = vadd.f32 %v395, %v38
  %v404 = vpack.c.bf16 %v399, %v398
  %v405 = vpack.c.bf16 %v401, %v400
  %v406 = vpack.c.bf16 %v403, %v402
  %v410 = vunpack.c.l.b16 %v404
  %v411 = vunpack.c.h.b16 %v404
  %v412 = vunpack.c.l.b16 %v405
  %v413 = vunpack.c.h.b16 %v405
  %v414 = vunpack.c.l.b16 %v406
  %v415 = vunpack.c.h.b16 %v406
  %v416 = vpack.c.b16 %v410, %v410
  %v417 = vpack.c.b16 %v411, %v411
  %v418 = vpack.c.b16 %v412, %v412
  %v419 = vpack.c.b16 %v413, %v413
  %v420 = vpack.c.b16 %v414, %v414
  %v421 = vpack.c.b16 %v415, %v415
  %vm428 = vcmask 257024
  %429 = vst.msk [vmem:[%s7] sm:$0xf] %vm428, %v416
  %430 = vst.msk [vmem:[%s7 + $0x4] sm:$0xf] %vm428, %v417
  %431 = vst.msk [vmem:[%s7 + $0x8] sm:$0xf] %vm428, %v418
  %432 = vst.msk [vmem:[%s7 + $0xc] sm:$0xf] %vm428, %v419
  %433 = vst.msk [vmem:[%s7 + $0x10] sm:$0xf] %vm428, %v420
  %434 = vst.msk [vmem:[%s7 + $0x14] sm:$0xf] %vm428, %v421
  // Predicated region
  $region30: #{_lambda_.15} parent=0 // pred_check
    _
  $region31: #{_lambda_.15} parent=0 // pred_check_branch
    %436 = sbr.rel (0) target = $region33
  $region32: #{_lambda_.15} parent=0 // pred_region
    _
  $region33: #{_lambda_.15} parent=0 // pred_fallthru
    _
  // Predicated region
  $region34: #{_lambda_.15} parent=0 // pred_check
    _
  $region35: #{_lambda_.15} parent=0 // pred_check_branch
    %438 = sbr.rel (0) target = $region37
  $region36: #{_lambda_.15} parent=0 // pred_region
    _
  $region37: #{_lambda_.15} parent=0 // pred_fallthru
    _

// kernel: _lambda_.18
$region0: #{_lambda_.18}
  #allocation0 [shape = 'u32[]', space=smem, size = 0x4, offset = 0x4, fixed_abs, tag = 'smem constant byte address 0x4 - core index']
  #allocation1 [shape = 'u32[144,128]{1,0:T(1,128)}', space=vmem, size = 0x12000, scoped, tag = 'internal scratch']
  %s0 = inlined_call_operand.vmem [shape: bf16[48,32], index: 0, kind: input, shape index: {}]
  %s1 = inlined_call_operand.vmem [shape: f32[1,32], index: 1, kind: input, shape index: {}]
  %s2 = inlined_call_operand.vmem [shape: f32[1,32], index: 2, kind: input, shape index: {}]
  %s3 = inlined_call_operand.vmem [shape: bf16[48,32], index: 3, kind: output, shape index: {}]
  %s4 = sld [smem:[#allocation0]]
  $region22: #{_lambda_.18} parent=0
    _
  %s6 = ssub.s32 1, %s4
  %s7 = scalar_select 0, %s6, %s4
  // Predicated region
  $region2: #{_lambda_.18} parent=0 // pred_check
    _
  $region3: #{_lambda_.18} parent=0 // pred_check_branch
    %9 = sbr.rel (0) target = $region5
  $region4: #{_lambda_.18} parent=0 // pred_region
    _
  $region5: #{_lambda_.18} parent=0 // pred_fallthru
    _
  // Predicated region
  $region6: #{_lambda_.18} parent=0 // pred_check
    _
  $region7: #{_lambda_.18} parent=0 // pred_check_branch
    %11 = sbr.rel (0) target = $region9
  $region8: #{_lambda_.18} parent=0 // pred_region
    _
  $region9: #{_lambda_.18} parent=0 // pred_fallthru
    _
  // Predicated region
  $region10: #{_lambda_.18} parent=0 // pred_check
    _
  $region11: #{_lambda_.18} parent=0 // pred_check_branch
    %13 = sbr.rel (0) target = $region13
  $region12: #{_lambda_.18} parent=0 // pred_region
    _
  $region13: #{_lambda_.18} parent=0 // pred_fallthru
    _
  %v14 = vld [vmem:[%s0] sm:$0xf]
  %v15 = vld [vmem:[%s0 + $0x4] sm:$0xf]
  %v16 = vld [vmem:[%s0 + $0x8] sm:$0xf]
  %v17 = vld [vmem:[%s0 + $0xc] sm:$0xf]
  %v18 = vld [vmem:[%s0 + $0x10] sm:$0xf]
  %v19 = vld [vmem:[%s0 + $0x14] sm:$0xf]
  %v20 = vunpack.c.l.bf16 %v14
  %v21 = vunpack.c.l.bf16 %v15
  %v22 = vunpack.c.l.bf16 %v16
  %v23 = vunpack.c.l.bf16 %v17
  %v24 = vunpack.c.l.bf16 %v18
  %v25 = vunpack.c.l.bf16 %v19
  %vm26 = vcmask 261120
  %v27 = vsel %vm26, %v20, 0.0
  %28 = vadd.xlane.f32.xlu0 %v27
  %v29 = vpop.xlane.xlu0 %28
  %v30 = vsel %vm26, %v21, 0.0
  %31 = vadd.xlane.f32.xlu0 %v30
  %v32 = vpop.xlane.xlu0 %31
  %v33 = vsel %vm26, %v22, 0.0
  %34 = vadd.xlane.f32.xlu0 %v33
  %v35 = vpop.xlane.xlu0 %34
  %v36 = vsel %vm26, %v23, 0.0
  %37 = vadd.xlane.f32.xlu0 %v36
  %v38 = vpop.xlane.xlu0 %37
  %v39 = vsel %vm26, %v24, 0.0
  %40 = vadd.xlane.f32.xlu0 %v39
  %v41 = vpop.xlane.xlu0 %40
  %v42 = vsel %vm26, %v25, 0.0
  %43 = vadd.xlane.f32.xlu0 %v42
  %v44 = vpop.xlane.xlu0 %43
  %v45 = vrcp.pop 32.0
  %v46 = vmul.f32 %v29, %v45
  %v47 = vmul.f32 %v32, %v45
  %v48 = vmul.f32 %v35, %v45
  %v49 = vmul.f32 %v38, %v45
  %v50 = vmul.f32 %v41, %v45
  %v51 = vmul.f32 %v44, %v45
  %v52 = vsub.f32 %v20, %v46
  %v53 = vsub.f32 %v21, %v47
  %v54 = vsub.f32 %v22, %v48
  %v55 = vsub.f32 %v23, %v49
  %v56 = vsub.f32 %v24, %v50
  %v57 = vsub.f32 %v25, %v51
  %v58 = vmul.f32 %v52, %v52
  %v59 = vmul.f32 %v53, %v53
  %v60 = vmul.f32 %v54, %v54
  %v61 = vmul.f32 %v55, %v55
  %v62 = vmul.f32 %v56, %v56
  %v63 = vmul.f32 %v57, %v57
  %v64 = vsel %vm26, %v58, 0.0
  %65 = vadd.xlane.f32.xlu0 %v64
  %v66 = vpop.xlane.xlu0 %65
  %v67 = vsel %vm26, %v59, 0.0
  %68 = vadd.xlane.f32.xlu0 %v67
  %v69 = vpop.xlane.xlu0 %68
  %v70 = vsel %vm26, %v60, 0.0
  %71 = vadd.xlane.f32.xlu0 %v70
  %v72 = vpop.xlane.xlu0 %71
  %v73 = vsel %vm26, %v61, 0.0
  %74 = vadd.xlane.f32.xlu0 %v73
  %v75 = vpop.xlane.xlu0 %74
  %v76 = vsel %vm26, %v62, 0.0
  %77 = vadd.xlane.f32.xlu0 %v76
  %v78 = vpop.xlane.xlu0 %77
  %v79 = vsel %vm26, %v63, 0.0
  %80 = vadd.xlane.f32.xlu0 %v79
  %v81 = vpop.xlane.xlu0 %80
  %v82 = vmul.f32 %v66, %v45
  %v83 = vmul.f32 %v69, %v45
  %v84 = vmul.f32 %v72, %v45
  %v85 = vmul.f32 %v75, %v45
  %v86 = vmul.f32 %v78, %v45
  %v87 = vmul.f32 %v81, %v45
  %v88 = vadd.f32 %v82, 1e-05
  %v89 = vadd.f32 %v83, 1e-05
  %v90 = vadd.f32 %v84, 1e-05
  %v91 = vadd.f32 %v85, 1e-05
  %v92 = vadd.f32 %v86, 1e-05
  %v93 = vadd.f32 %v87, 1e-05
  %v94 = vrsqrt.pop %v88
  %v95 = vrsqrt.pop %v89
  %v96 = vrsqrt.pop %v90
  %v97 = vrsqrt.pop %v91
  %v98 = vrsqrt.pop %v92
  %v99 = vrsqrt.pop %v93
  %v100 = vmul.f32 %v52, %v94
  %v101 = vmul.f32 %v53, %v95
  %v102 = vmul.f32 %v54, %v96
  %v103 = vmul.f32 %v55, %v97
  %v104 = vmul.f32 %v56, %v98
  %v105 = vmul.f32 %v57, %v99
  %v106 = vld [vmem:[%s1] sm:$0x1]
  %v108 = vlaneseq
  %v109 = vshrl.u32 %v108, 7
  %v110 = vsub.s32 0, %v109
  %v111 = vrot.slane %v106, %v110
  %v113 = vmul.f32 %v100, %v111
  %v114 = vmul.f32 %v101, %v111
  %v115 = vmul.f32 %v102, %v111
  %v116 = vmul.f32 %v103, %v111
  %v117 = vmul.f32 %v104, %v111
  %v118 = vmul.f32 %v105, %v111
  %v119 = vld [vmem:[%s2] sm:$0x1]
  %v121 = vlaneseq
  %v122 = vshrl.u32 %v121, 7
  %v123 = vsub.s32 0, %v122
  %v124 = vrot.slane %v119, %v123
  %v126 = vadd.f32 %v113, %v124
  %v127 = vadd.f32 %v114, %v124
  %v128 = vadd.f32 %v115, %v124
  %v129 = vadd.f32 %v116, %v124
  %v130 = vadd.f32 %v117, %v124
  %v131 = vadd.f32 %v118, %v124
  %v132 = vpack.c.bf16 %v127, %v126
  %v133 = vpack.c.bf16 %v129, %v128
  %v134 = vpack.c.bf16 %v131, %v130
  %v138 = vunpack.c.l.b16 %v132
  %v139 = vunpack.c.h.b16 %v132
  %v140 = vunpack.c.l.b16 %v133
  %v141 = vunpack.c.h.b16 %v133
  %v142 = vunpack.c.l.b16 %v134
  %v143 = vunpack.c.h.b16 %v134
  %v144 = vpack.c.b16 %v138, %v138
  %v145 = vpack.c.b16 %v139, %v139
  %v146 = vpack.c.b16 %v140, %v140
  %v147 = vpack.c.b16 %v141, %v141
  %v148 = vpack.c.b16 %v142, %v142
  %v149 = vpack.c.b16 %v143, %v143
  %vm156 = vcmask 257024
  %157 = vst.msk [vmem:[%s3] sm:$0xf] %vm156, %v144
  %158 = vst.msk [vmem:[%s3 + $0x4] sm:$0xf] %vm156, %v145
  %159 = vst.msk [vmem:[%s3 + $0x8] sm:$0xf] %vm156, %v146
  %160 = vst.msk [vmem:[%s3 + $0xc] sm:$0xf] %vm156, %v147
  %161 = vst.msk [vmem:[%s3 + $0x10] sm:$0xf] %vm156, %v148
  %162 = vst.msk [vmem:[%s3 + $0x14] sm:$0xf] %vm156, %v149
  // Predicated region
  $region14: #{_lambda_.18} parent=0 // pred_check
    _
  $region15: #{_lambda_.18} parent=0 // pred_check_branch
    %164 = sbr.rel (0) target = $region17
  $region16: #{_lambda_.18} parent=0 // pred_region
    _
  $region17: #{_lambda_.18} parent=0 // pred_fallthru
    _
  // Predicated region
  $region18: #{_lambda_.18} parent=0 // pred_check
    _
  $region19: #{_lambda_.18} parent=0 // pred_check_branch
    %166 = sbr.rel (0) target = $region21
  $region20: #{_lambda_.18} parent=0 // pred_region
    _
  $region21: #{_lambda_.18} parent=0 // pred_fallthru
    _

// kernel: _lambda_.14
$region0: #{_lambda_.14}
  #allocation0 [shape = 'u32[]', space=smem, size = 0x4, offset = 0x4, fixed_abs, tag = 'smem constant byte address 0x4 - core index']
  #allocation1 [shape = 'u32[144,128]{1,0:T(1,128)}', space=vmem, size = 0x12000, scoped, tag = 'internal scratch']
  %s0 = inlined_call_operand.vmem [shape: bf16[3,16,32], index: 0, kind: input, shape index: {}]
  %s1 = inlined_call_operand.vmem [shape: f32[1,32], index: 1, kind: input, shape index: {}]
  %s2 = inlined_call_operand.vmem [shape: f32[1,32], index: 2, kind: input, shape index: {}]
  %s3 = inlined_call_operand.vmem [shape: bf16[32,96], index: 3, kind: input, shape index: {}]
  %s4 = inlined_call_operand.vmem [shape: f32[1,96], index: 4, kind: input, shape index: {}]
  %s5 = inlined_call_operand.vmem [shape: bf16[32,32], index: 5, kind: input, shape index: {}]
  %s6 = inlined_call_operand.vmem [shape: f32[1,32], index: 6, kind: input, shape index: {}]
  %s7 = inlined_call_operand.vmem [shape: f32[16,16], index: 7, kind: input, shape index: {}]
  %s8 = inlined_call_operand.vmem [shape: bf16[3,16,32], index: 8, kind: output, shape index: {}]
  %s9 = sld [smem:[#allocation0]]
  $region65: #{_lambda_.14} parent=0
    _
  %s11 = ssub.s32 1, %s9
  %s12 = scalar_select 0, %s11, %s9
  loop: start=0, step=1, limit=5
  $region2: #{_lambda_.14} parent=0 // loop_pre_header
    _
  $region3: #{_lambda_.14} parent=0 // loop_header
    %s14 = sphi 0, %s18
    %p15 = scmp.ge.s32.totalorder %s14, 5
    %s24 = sphi 0, %s26
    %s27 = sphi 0, %s24
    %s28 = sphi 0, %s27
    %s44 = sphi 0, %s28
    %s48 = sphi 0, %s48
    %s50 = sphi 0, %s48
    %s51 = sphi 0, %s50
    %s65 = sphi 0, %s51
    %s69 = sphi 0, %s69
    %s71 = sphi 0, %s69
    %s72 = sphi 0, %s71
    %s86 = sphi 0, %s72
    %s90 = sphi 0, %s90
    %s92 = sphi 0, %s90
    %s93 = sphi 0, %s92
    %s107 = sphi 0, %s93
    %s111 = sphi 0, %s111
    %s113 = sphi 0, %s111
    %s114 = sphi 0, %s113
    %s128 = sphi 0, %s114
    %s132 = sphi 0, %s132
    %s134 = sphi 0, %s132
    %s135 = sphi 0, %s134
    %s149 = sphi 0, %s135
    %s153 = sphi 0, %s153
    %s155 = sphi 0, %s153
    %s156 = sphi 0, %s155
    %s170 = sphi 0, %s156
    %s174 = sphi 0, %s174
    %s176 = sphi 0, %s174
    %s177 = sphi 0, %s176
    %s191 = sphi 0, %s177
    %s197 = sphi 0, %s199
    %s200 = sphi 0, %s197
    %s201 = sphi 0, %s200
    %s217 = sphi 0, %s201
  $region4: #{_lambda_.14} parent=0 // loop_header_branch
    %17 = sbr.rel (%p15) target = $region8
  $region5: #{_lambda_.14} parent=0 // loop_body
    %s19 = ssub.s32 %s14, 1
    %s20 = ssub.s32 %s14, 2
    %s21 = sadd.s32 %s14, 1
    %s22 = ssub.s32 %s14, %s21
    %p23 = scmp.eq.s32.totalorder %s22, 0
    %s25 = sadd.s32 %s24, 1
    %s26 = scalar_select %p23, %s24, %s25
    %p29 = pneg %p23
    %p30 = scmp.eq.s32.totalorder %s14, 2
    %p31 = por %p29, %p30
    %p32 = scmp.ne.s32.totalorder %s24, %s27
    %p33 = scmp.eq.s32.totalorder %s14, 0
    %p34 = por %p32, %p33
    %p35 = scmp.ne.s32.totalorder %s24, %s27
    %p36 = scmp.eq.s32.totalorder %s19, 2
    %p37 = por %p35, %p36
    %p38 = scmp.ne.s32.totalorder %s27, %s28
    %p39 = scmp.eq.s32.totalorder %s19, 0
    %p40 = por %p38, %p39
    %p41 = scmp.ne.s32.totalorder %s27, %s28
    %p42 = scmp.eq.s32.totalorder %s20, 2
    %p43 = por %p41, %p42
    %p45 = scmp.ne.s32.totalorder %s28, %s44
    %p46 = scmp.eq.s32.totalorder %s20, 0
    %p47 = por %p45, %p46
    %s49 = sadd.s32 %s48, 1
    %p52 = scmp.eq.s32.totalorder %s14, 2
    %p53 = scmp.ne.s32.totalorder %s48, %s50
    %p54 = scmp.eq.s32.totalorder %s14, 0
    %p55 = por %p53, %p54
    %p56 = scmp.ne.s32.totalorder %s48, %s50
    %p57 = scmp.eq.s32.totalorder %s19, 2
    %p58 = por %p56, %p57
    %p59 = scmp.ne.s32.totalorder %s50, %s51
    %p60 = scmp.eq.s32.totalorder %s19, 0
    %p61 = por %p59, %p60
    %p62 = scmp.ne.s32.totalorder %s50, %s51
    %p63 = scmp.eq.s32.totalorder %s20, 2
    %p64 = por %p62, %p63
    %p66 = scmp.ne.s32.totalorder %s51, %s65
    %p67 = scmp.eq.s32.totalorder %s20, 0
    %p68 = por %p66, %p67
    %s70 = sadd.s32 %s69, 1
    %p73 = scmp.eq.s32.totalorder %s14, 2
    %p74 = scmp.ne.s32.totalorder %s69, %s71
    %p75 = scmp.eq.s32.totalorder %s14, 0
    %p76 = por %p74, %p75
    %p77 = scmp.ne.s32.totalorder %s69, %s71
    %p78 = scmp.eq.s32.totalorder %s19, 2
    %p79 = por %p77, %p78
    %p80 = scmp.ne.s32.totalorder %s71, %s72
    %p81 = scmp.eq.s32.totalorder %s19, 0
    %p82 = por %p80, %p81
    %p83 = scmp.ne.s32.totalorder %s71, %s72
    %p84 = scmp.eq.s32.totalorder %s20, 2
    %p85 = por %p83, %p84
    %p87 = scmp.ne.s32.totalorder %s72, %s86
    %p88 = scmp.eq.s32.totalorder %s20, 0
    %p89 = por %p87, %p88
    %s91 = sadd.s32 %s90, 1
    %p94 = scmp.eq.s32.totalorder %s14, 2
    %p95 = scmp.ne.s32.totalorder %s90, %s92
    %p96 = scmp.eq.s32.totalorder %s14, 0
    %p97 = por %p95, %p96
    %p98 = scmp.ne.s32.totalorder %s90, %s92
    %p99 = scmp.eq.s32.totalorder %s19, 2
    %p100 = por %p98, %p99
    %p101 = scmp.ne.s32.totalorder %s92, %s93
    %p102 = scmp.eq.s32.totalorder %s19, 0
    %p103 = por %p101, %p102
    %p104 = scmp.ne.s32.totalorder %s92, %s93
    %p105 = scmp.eq.s32.totalorder %s20, 2
    %p106 = por %p104, %p105
    %p108 = scmp.ne.s32.totalorder %s93, %s107
    %p109 = scmp.eq.s32.totalorder %s20, 0
    %p110 = por %p108, %p109
    %s112 = sadd.s32 %s111, 1
    %p115 = scmp.eq.s32.totalorder %s14, 2
    %p116 = scmp.ne.s32.totalorder %s111, %s113
    %p117 = scmp.eq.s32.totalorder %s14, 0
    %p118 = por %p116, %p117
    %p119 = scmp.ne.s32.totalorder %s111, %s113
    %p120 = scmp.eq.s32.totalorder %s19, 2
    %p121 = por %p119, %p120
    %p122 = scmp.ne.s32.totalorder %s113, %s114
    %p123 = scmp.eq.s32.totalorder %s19, 0
    %p124 = por %p122, %p123
    %p125 = scmp.ne.s32.totalorder %s113, %s114
    %p126 = scmp.eq.s32.totalorder %s20, 2
    %p127 = por %p125, %p126
    %p129 = scmp.ne.s32.totalorder %s114, %s128
    %p130 = scmp.eq.s32.totalorder %s20, 0
    %p131 = por %p129, %p130
    %s133 = sadd.s32 %s132, 1
    %p136 = scmp.eq.s32.totalorder %s14, 2
    %p137 = scmp.ne.s32.totalorder %s132, %s134
    %p138 = scmp.eq.s32.totalorder %s14, 0
    %p139 = por %p137, %p138
    %p140 = scmp.ne.s32.totalorder %s132, %s134
    %p141 = scmp.eq.s32.totalorder %s19, 2
    %p142 = por %p140, %p141
    %p143 = scmp.ne.s32.totalorder %s134, %s135
    %p144 = scmp.eq.s32.totalorder %s19, 0
    %p145 = por %p143, %p144
    %p146 = scmp.ne.s32.totalorder %s134, %s135
    %p147 = scmp.eq.s32.totalorder %s20, 2
    %p148 = por %p146, %p147
    %p150 = scmp.ne.s32.totalorder %s135, %s149
    %p151 = scmp.eq.s32.totalorder %s20, 0
    %p152 = por %p150, %p151
    %s154 = sadd.s32 %s153, 1
    %p157 = scmp.eq.s32.totalorder %s14, 2
    %p158 = scmp.ne.s32.totalorder %s153, %s155
    %p159 = scmp.eq.s32.totalorder %s14, 0
    %p160 = por %p158, %p159
    %p161 = scmp.ne.s32.totalorder %s153, %s155
    %p162 = scmp.eq.s32.totalorder %s19, 2
    %p163 = por %p161, %p162
    %p164 = scmp.ne.s32.totalorder %s155, %s156
    %p165 = scmp.eq.s32.totalorder %s19, 0
    %p166 = por %p164, %p165
    %p167 = scmp.ne.s32.totalorder %s155, %s156
    %p168 = scmp.eq.s32.totalorder %s20, 2
    %p169 = por %p167, %p168
    %p171 = scmp.ne.s32.totalorder %s156, %s170
    %p172 = scmp.eq.s32.totalorder %s20, 0
    %p173 = por %p171, %p172
    %s175 = sadd.s32 %s174, 1
    %p178 = scmp.eq.s32.totalorder %s14, 2
    %p179 = scmp.ne.s32.totalorder %s174, %s176
    %p180 = scmp.eq.s32.totalorder %s14, 0
    %p181 = por %p179, %p180
    %p182 = scmp.ne.s32.totalorder %s174, %s176
    %p183 = scmp.eq.s32.totalorder %s19, 2
    %p184 = por %p182, %p183
    %p185 = scmp.ne.s32.totalorder %s176, %s177
    %p186 = scmp.eq.s32.totalorder %s19, 0
    %p187 = por %p185, %p186
    %p188 = scmp.ne.s32.totalorder %s176, %s177
    %p189 = scmp.eq.s32.totalorder %s20, 2
    %p190 = por %p188, %p189
    %p192 = scmp.ne.s32.totalorder %s177, %s191
    %p193 = scmp.eq.s32.totalorder %s20, 0
    %p194 = por %p192, %p193
    %s195 = ssub.s32 %s14, %s21
    %p196 = scmp.eq.s32.totalorder %s195, 0
    %s198 = sadd.s32 %s197, 1
    %s199 = scalar_select %p196, %s197, %s198
    %p202 = pneg %p196
    %p203 = scmp.eq.s32.totalorder %s14, 2
    %p204 = por %p202, %p203
    %p205 = scmp.ne.s32.totalorder %s197, %s200
    %p206 = scmp.eq.s32.totalorder %s14, 0
    %p207 = por %p205, %p206
    %p208 = scmp.ne.s32.totalorder %s197, %s200
    %p209 = scmp.eq.s32.totalorder %s19, 2
    %p210 = por %p208, %p209
    %p211 = scmp.ne.s32.totalorder %s200, %s201
    %p212 = scmp.eq.s32.totalorder %s19, 0
    %p213 = por %p211, %p212
    %p214 = scmp.ne.s32.totalorder %s200, %s201
    %p215 = scmp.eq.s32.totalorder %s20, 2
    %p216 = por %p214, %p215
    %p218 = scmp.ne.s32.totalorder %s201, %s217
    %p219 = scmp.eq.s32.totalorder %s20, 0
    %p220 = por %p218, %p219
    %p221 = scmp.le.s32.totalorder 1, %s14
    %p222 = scmp.lt.s32.totalorder %s14, 4
    %p223 = pnand %p221, %p222
    %p224 = pneg %p223
    // Predicated region
    $region9: #{_lambda_.14} parent=5 // pred_check
      _
    $region10: #{_lambda_.14} parent=5 // pred_check_branch
      %226 = sbr.rel (%p223) target = $region12
    $region11: #{_lambda_.14} parent=5 // pred_region
      %s227 = ssub.s32 %s14, 1
      // Predicated region
      $region13: #{_lambda_.14} parent=11 // pred_check
        %p228 = pneg %p61
      $region14: #{_lambda_.14} parent=11 // pred_check_branch
        %230 = sbr.rel (%p228) target = $region16
      $region15: #{_lambda_.14} parent=11 // pred_region
        _
      $region16: #{_lambda_.14} parent=11 // pred_fallthru
        _
      // Predicated region
      $region17: #{_lambda_.14} parent=11 // pred_check
        %p231 = pneg %p82
      $region18: #{_lambda_.14} parent=11 // pred_check_branch
        %233 = sbr.rel (%p231) target = $region20
      $region19: #{_lambda_.14} parent=11 // pred_region
        _
      $region20: #{_lambda_.14} parent=11 // pred_fallthru
        _
      // Predicated region
      $region21: #{_lambda_.14} parent=11 // pred_check
        %p234 = pneg %p103
      $region22: #{_lambda_.14} parent=11 // pred_check_branch
        %236 = sbr.rel (%p234) target = $region24
      $region23: #{_lambda_.14} parent=11 // pred_region
        _
      $region24: #{_lambda_.14} parent=11 // pred_fallthru
        _
      // Predicated region
      $region25: #{_lambda_.14} parent=11 // pred_check
        %p237 = pneg %p124
      $region26: #{_lambda_.14} parent=11 // pred_check_branch
        %239 = sbr.rel (%p237) target = $region28
      $region27: #{_lambda_.14} parent=11 // pred_region
        _
      $region28: #{_lambda_.14} parent=11 // pred_fallthru
        _
      // Predicated region
      $region29: #{_lambda_.14} parent=11 // pred_check
        %p240 = pneg %p145
      $region30: #{_lambda_.14} parent=11 // pred_check_branch
        %242 = sbr.rel (%p240) target = $region32
      $region31: #{_lambda_.14} parent=11 // pred_region
        _
      $region32: #{_lambda_.14} parent=11 // pred_fallthru
        _
      // Predicated region
      $region33: #{_lambda_.14} parent=11 // pred_check
        %p243 = pneg %p166
      $region34: #{_lambda_.14} parent=11 // pred_check_branch
        %245 = sbr.rel (%p243) target = $region36
      $region35: #{_lambda_.14} parent=11 // pred_region
        _
      $region36: #{_lambda_.14} parent=11 // pred_fallthru
        _
      // Predicated region
      $region37: #{_lambda_.14} parent=11 // pred_check
        %p246 = pneg %p187
      $region38: #{_lambda_.14} parent=11 // pred_check_branch
        %248 = sbr.rel (%p246) target = $region40
      $region39: #{_lambda_.14} parent=11 // pred_region
        _
      $region40: #{_lambda_.14} parent=11 // pred_fallthru
        _
    $region12: #{_lambda_.14} parent=5 // pred_fallthru
      _
    %p249 = scmp.lt.s32.totalorder %s14, 3
    // Predicated region
    $region41: #{_lambda_.14} parent=5 // pred_check
      %p250 = pneg %p249
    $region42: #{_lambda_.14} parent=5 // pred_check_branch
      %252 = sbr.rel (%p250) target = $region44
    $region43: #{_lambda_.14} parent=5 // pred_region
      // Predicated region
      $region45: #{_lambda_.14} parent=43 // pred_check
        %p253 = pneg %p34
      $region46: #{_lambda_.14} parent=43 // pred_check_branch
        %255 = sbr.rel (%p253) target = $region48
      $region47: #{_lambda_.14} parent=43 // pred_region
        %p256 = scmp.lt.s32.totalorder %s14, 2
        %s257 = scalar_select %p256, %s14, 2
        %s258 = smul.addr %s257, 2
        %s259 = smul.addr %s258, 4
        %s260 = scalar_lea.vmem %s0, %s259
      $region48: #{_lambda_.14} parent=43 // pred_fallthru
        _
    $region44: #{_lambda_.14} parent=5 // pred_fallthru
      _
    %p261 = scmp.le.s32.totalorder 1, %s14
    %p262 = scmp.lt.s32.totalorder %s14, 4
    %p263 = pnand %p261, %p262
    %p264 = pneg %p263
    // Predicated region
    $region49: #{_lambda_.14} parent=5 // pred_check
      _
    $region50: #{_lambda_.14} parent=5 // pred_check_branch
      %266 = sbr.rel (%p263) target = $region52
    $region51: #{_lambda_.14} parent=5 // pred_region
      %s267 = ssub.s32 %s14, 1
      %p268 = scmp.lt.s32.totalorder %s19, 2
      %s269 = scalar_select %p268, %s19, 2
      %s270 = smul.addr %s269, 2
      %s271 = smul.addr %s270, 4
      %s272 = scalar_lea.vmem %s0, %s271
      %p273 = pneg %p40
      %p274 = pneg %p37
      %p275 = pneg %p61
      %p276 = pneg %p58
      %p277 = pneg %p82
      %p278 = pneg %p79
      %p279 = pneg %p103
      %p280 = pneg %p100
      %p281 = pneg %p124
      %p282 = pneg %p121
      %p283 = pneg %p145
      %p284 = pneg %p142
      %p285 = pneg %p166
      %p286 = pneg %p163
      %p287 = pneg %p187
      %p288 = pneg %p184
      %p289 = pneg %p213
      %p290 = pneg %p210
      %p291 = scmp.lt.s32.totalorder %s19, 2
      %s292 = scalar_select %p291, %s19, 2
      %s293 = smul.addr %s292, 2
      %s294 = smul.addr %s293, 4
      %s295 = scalar_lea.vmem %s8, %s294
      %p296 = scmp.lt.s32.totalorder %s19, 2
      %s297 = scalar_select %p296, %s19, 2
      %s298 = smul.addr %s297, 2
      %s299 = smul.addr %s298, 4
      %s300 = scalar_lea.vmem %s0, %s299
      %p301 = scmp.lt.s32.totalorder %s19, 2
      %s302 = scalar_select %p301, %s19, 2
      %s303 = smul.addr %s302, 2
      %s304 = smul.addr %s303, 4
      %s305 = scalar_lea.vmem %s8, %s304
      %v307 = vld [vmem:[%s300] sm:$0xf]
      %v308 = vld [vmem:[%s300 + $0x4] sm:$0xf]
      %v309 = vunpack.c.l.bf16 %v307
      %v310 = vunpack.c.l.bf16 %v308
      %vm311 = vcmask 261120
      %v312 = vsel %vm311, %v309, 0.0
      %313 = vadd.xlane.f32.xlu0 %v312
      %v314 = vpop.xlane.xlu0 %313
      %v315 = vsel %vm311, %v310, 0.0
      %316 = vadd.xlane.f32.xlu0 %v315
      %v317 = vpop.xlane.xlu0 %316
      %v318 = vrcp.pop 32.0
      %v319 = vmul.f32 %v314, %v318
      %v320 = vmul.f32 %v317, %v318
      %v321 = vsub.f32 %v309, %v319
      %v322 = vsub.f32 %v310, %v320
      %v323 = vmul.f32 %v321, %v321
      %v324 = vmul.f32 %v322, %v322
      %v325 = vsel %vm311, %v323, 0.0
      %326 = vadd.xlane.f32.xlu0 %v325
      %v327 = vpop.xlane.xlu0 %326
      %v328 = vsel %vm311, %v324, 0.0
      %329 = vadd.xlane.f32.xlu0 %v328
      %v330 = vpop.xlane.xlu0 %329
      %v331 = vmul.f32 %v327, %v318
      %v332 = vmul.f32 %v330, %v318
      %v333 = vadd.f32 %v331, 1e-05
      %v334 = vadd.f32 %v332, 1e-05
      %v335 = vrsqrt.pop %v333
      %v336 = vrsqrt.pop %v334
      %v337 = vmul.f32 %v321, %v335
      %v338 = vmul.f32 %v322, %v336
      %v339 = vld [vmem:[%s1] sm:$0x1]
      %v341 = vlaneseq
      %v342 = vshrl.u32 %v341, 7
      %v343 = vsub.s32 0, %v342
      %v344 = vrot.slane %v339, %v343
      %v346 = vmul.f32 %v337, %v344
      %v347 = vmul.f32 %v338, %v344
      %v348 = vld [vmem:[%s2] sm:$0x1]
      %v350 = vlaneseq
      %v351 = vshrl.u32 %v350, 7
      %v352 = vsub.s32 0, %v351
      %v353 = vrot.slane %v348, %v352
      %v355 = vadd.f32 %v346, %v353
      %v356 = vadd.f32 %v347, %v353
      %v357 = vpack.c.bf16 %v356, %v355
      %v358 = vld [vmem:[%s3] sm:$0xf]
      %v359 = vld [vmem:[%s3 + $0x4] sm:$0xf]
      %v360 = vld [vmem:[%s3 + $0x8] sm:$0xf]
      %v361 = vld [vmem:[%s3 + $0xc] sm:$0xf]
      %v362 = vld [vmem:[%s4] sm:$0x1]
      %v364 = vlaneseq
      %v365 = vshrl.u32 %v364, 7
      %v366 = vsub.s32 0, %v365
      %v367 = vrot.slane %v362, %v366
      %v373 = vunpack.c.l.b16 %v358
      %v374 = vunpack.c.l.b16 %v359
      %v375 = vunpack.c.l.b16 %v360
      %v376 = vunpack.c.l.b16 %v361
      %v377 = vpack.c.b16 %v374, %v373
      %v378 = vpack.c.b16 %v376, %v375
      %v382 = vsel %vm311, %v357, 0
      %384 = vmatprep.subr.bf16.mxu0 0
      %385 = vmatpush1.bf16.msra.mxu0 %v377
      %386 = vmatprep.subr.bf16.mxu0 0
      %387 = vmatpush1.bf16.msra.mxu0 %v378
      %388 = vmatprep.subr.bf16.mxu0 0
      %389 = vmatpush1.bf16.msra.mxu0 0
      %390 = vmatprep.subr.bf16.mxu0 0
      %391 = vmatpush1.bf16.msra.mxu0 0
      %392 = vmatprep.subr.bf16.mxu0 0
      %393 = vmatpush1.bf16.msra.mxu0 0
      %394 = vmatprep.subr.bf16.mxu0 0
      %395 = vmatpush1.bf16.msra.mxu0 0
      %396 = vmatprep.subr.bf16.mxu0 0
      %397 = vmatpush1.bf16.msra.mxu0 0
      %398 = vmatprep.subr.bf16.mxu0 0
      %399 = vmatpush1.bf16.msra.mxu0 0
      %400 = vmatprep.subr.bf16.mxu0 0
      %401 = vmatpush1.bf16.msra.mxu0 0
      %402 = vmatprep.subr.bf16.mxu0 0
      %403 = vmatpush1.bf16.msra.mxu0 0
      %404 = vmatprep.subr.bf16.mxu0 0
      %405 = vmatpush1.bf16.msra.mxu0 0
      %406 = vmatprep.subr.bf16.mxu0 0
      %407 = vmatpush1.bf16.msra.mxu0 0
      %408 = vmatprep.subr.bf16.mxu0 0
      %409 = vmatpush1.bf16.msra.mxu0 0
      %410 = vmatprep.subr.bf16.mxu0 0
      %411 = vmatpush1.bf16.msra.mxu0 0
      %412 = vmatprep.subr.bf16.mxu0 0
      %413 = vmatpush1.bf16.msra.mxu0 0
      %414 = vmatprep.subr.bf16.mxu0 0
      %415 = vmatpush1.bf16.msra.mxu0 0
      %416 = vmatprep.mubr.bf16.mxu0 0
      %417 = vmatmul.mubr.bf16.gmra.mrb[0].mxu0 %v382
      %v418 = vpop.f32.mrb[0].mxu0
      %v419 = vadd.f32 %v367, %v418
      %v420 = vpop.f32.mrb[0].mxu0
      %v421 = vpop.f32.mrb[0].mxu0
      %v422 = vadd.f32 %v367, %v421
      %v423 = vpop.f32.mrb[0].mxu0
      %424 = vdwg.mxu0
      %v425 = vld [vmem:[%s6] sm:$0x1]
      %v427 = vlaneseq
      %v428 = vshrl.u32 %v427, 7
      %v429 = vsub.s32 0, %v428
      %v430 = vrot.slane %v425, %v429
      %v432 = vadd.f32 %v309, %v430
      %v433 = vadd.f32 %v310, %v430
      %v434 = vmul.f32 %v419, 0.35355338
      %v435 = vmul.f32 %v422, 0.35355338
      %v436 = vpack.c.bf16 %v435, %v434
      %v437 = vpack.c.bf16 %v422, %v419
      %v438 = vld [vmem:[%s7] sm:$0xff]
      %v439 = vld [vmem:[%s7 + $0x8] sm:$0xff]
      %441 = vrot.lane.b32.xlu0 %v437, 96
      %v442 = vpop.permute.xlu0 %441
      %vm443 = vcmask 64512
      %v445 = vsel %vm443, %v436, 0
      %v448 = vsel %vm443, %v442, 0
      %450 = vmatprep.subr.bf16.mxu0 0
      %451 = vmatpush1.bf16.xpose.msra.mxu0 %v448
      %452 = vmatprep.subr.bf16.mxu0 0
      %453 = vmatpush1.bf16.xpose.msra.mxu0 0
      %454 = vmatprep.subr.bf16.mxu0 0
      %455 = vmatpush1.bf16.xpose.msra.mxu0 0
      %456 = vmatprep.subr.bf16.mxu0 0
      %457 = vmatpush1.bf16.xpose.msra.mxu0 0
      %458 = vmatprep.subr.bf16.mxu0 0
      %459 = vmatpush1.bf16.xpose.msra.mxu0 0
      %460 = vmatprep.subr.bf16.mxu0 0
      %461 = vmatpush1.bf16.xpose.msra.mxu0 0
      %462 = vmatprep.subr.bf16.mxu0 0
      %463 = vmatpush1.bf16.xpose.msra.mxu0 0
      %464 = vmatprep.subr.bf16.mxu0 0
      %465 = vmatpush1.bf16.xpose.msra.mxu0 0
      %466 = vmatprep.subr.bf16.mxu0 0
      %467 = vmatpush1.bf16.xpose.msra.mxu0 0
      %468 = vmatprep.subr.bf16.mxu0 0
      %469 = vmatpush1.bf16.xpose.msra.mxu0 0
      %470 = vmatprep.subr.bf16.mxu0 0
      %471 = vmatpush1.bf16.xpose.msra.mxu0 0
      %472 = vmatprep.subr.bf16.mxu0 0
      %473 = vmatpush1.bf16.xpose.msra.mxu0 0
      %474 = vmatprep.subr.bf16.mxu0 0
      %475 = vmatpush1.bf16.xpose.msra.mxu0 0
      %476 = vmatprep.subr.bf16.mxu0 0
      %477 = vmatpush1.bf16.xpose.msra.mxu0 0
      %478 = vmatprep.subr.bf16.mxu0 0
      %479 = vmatpush1.bf16.xpose.msra.mxu0 0
      %480 = vmatprep.subr.bf16.mxu0 0
      %481 = vmatpush1.bf16.xpose.msra.mxu0 0
      %482 = vmatprep.mubr.bf16.mxu0 0
      %483 = vmatmul.mubr.bf16.gmra.mrb[0].mxu0 %v445
      %v484 = vpop.f32.mrb[0].mxu0
      %v485 = vadd.f32 %v438, %v484
      %v486 = vpop.f32.mrb[0].mxu0
      %v487 = vpop.f32.mrb[0].mxu0
      %v488 = vadd.f32 %v439, %v487
      %v489 = vpop.f32.mrb[0].mxu0
      %490 = vdwg.mxu0
      %vm491 = vcmask 130048
      %v492 = vsel %vm491, %v485, -inf
      %493 = vmax.xlane.f32.xlu0 %v492
      %v494 = vpop.xlane.xlu0 %493
      %v495 = vsel %vm491, %v488, -inf
      %496 = vmax.xlane.f32.xlu0 %v495
      %v497 = vpop.xlane.xlu0 %496
      %v498 = vsub.f32 %v485, %v494
      %v499 = vsub.f32 %v488, %v497
      %v500 = vmul.f32 %v498, 1.442695
      %v501 = vpow.pop %v500
      %v502 = vmul.f32 %v499, 1.442695
      %v503 = vpow.pop %v502
      %v504 = vsel %vm491, %v501, 0.0
      %505 = vadd.xlane.f32.xlu0 %v504
      %v506 = vpop.xlane.xlu0 %505
      %v507 = vsel %vm491, %v503, 0.0
      %508 = vadd.xlane.f32.xlu0 %v507
      %v509 = vpop.xlane.xlu0 %508
      %v510 = vrcp.pop %v506
      %v511 = vrcp.pop %v509
      %v512 = vmul.f32 %v501, %v510
      %v513 = vmul.f32 %v503, %v511
      %v514 = vpack.c.bf16 %v513, %v512
      %515 = vrot.lane.b32.xlu0 %v437, 64
      %v516 = vpop.permute.xlu0 %515
      %v519 = vsel %vm491, %v514, 0
      %521 = vmatprep.subr.bf16.mxu0 0
      %522 = vmatpush1.bf16.msra.mxu0 %v516
      %523 = vmatprep.subr.bf16.mxu0 0
      %524 = vmatpush1.bf16.msra.mxu0 0
      %525 = vmatprep.subr.bf16.mxu0 0
      %526 = vmatpush1.bf16.msra.mxu0 0
      %527 = vmatprep.subr.bf16.mxu0 0
      %528 = vmatpush1.bf16.msra.mxu0 0
      %529 = vmatprep.subr.bf16.mxu0 0
      %530 = vmatpush1.bf16.msra.mxu0 0
      %531 = vmatprep.subr.bf16.mxu0 0
      %532 = vmatpush1.bf16.msra.mxu0 0
      %533 = vmatprep.subr.bf16.mxu0 0
      %534 = vmatpush1.bf16.msra.mxu0 0
      %535 = vmatprep.subr.bf16.mxu0 0
      %536 = vmatpush1.bf16.msra.mxu0 0
      %537 = vmatprep.subr.bf16.mxu0 0
      %538 = vmatpush1.bf16.msra.mxu0 0
      %539 = vmatprep.subr.bf16.mxu0 0
      %540 = vmatpush1.bf16.msra.mxu0 0
      %541 = vmatprep.subr.bf16.mxu0 0
      %542 = vmatpush1.bf16.msra.mxu0 0
      %543 = vmatprep.subr.bf16.mxu0 0
      %544 = vmatpush1.bf16.msra.mxu0 0
      %545 = vmatprep.subr.bf16.mxu0 0
      %546 = vmatpush1.bf16.msra.mxu0 0
      %547 = vmatprep.subr.bf16.mxu0 0
      %548 = vmatpush1.bf16.msra.mxu0 0
      %549 = vmatprep.subr.bf16.mxu0 0
      %550 = vmatpush1.bf16.msra.mxu0 0
      %551 = vmatprep.subr.bf16.mxu0 0
      %552 = vmatpush1.bf16.msra.mxu0 0
      %553 = vmatprep.mubr.bf16.mxu0 0
      %554 = vmatmul.mubr.bf16.gmra.mrb[0].mxu0 %v519
      %v555 = vpop.f32.mrb[0].mxu0
      %v556 = vadd.f32 0.0, %v555
      %v557 = vpop.f32.mrb[0].mxu0
      %v558 = vpop.f32.mrb[0].mxu0
      %v559 = vadd.f32 0.0, %v558
      %v560 = vpop.f32.mrb[0].mxu0
      %561 = vdwg.mxu0
      %v562 = vpack.c.bf16 %v559, %v556
      %v563 = vld [vmem:[%s5] sm:$0xf]
      %v565 = vsel %vm443, %v562, 0
      %vm567 = vcmask 1043456
      %v569 = vsel %vm567, %v563, 0
      %571 = vmatprep.subr.bf16.mxu0 0
      %572 = vmatpush1.bf16.msra.mxu0 %v569
      %573 = vmatprep.subr.bf16.mxu0 0
      %574 = vmatpush1.bf16.msra.mxu0 0
      %575 = vmatprep.subr.bf16.mxu0 0
      %576 = vmatpush1.bf16.msra.mxu0 0
      %577 = vmatprep.subr.bf16.mxu0 0
      %578 = vmatpush1.bf16.msra.mxu0 0
      %579 = vmatprep.subr.bf16.mxu0 0
      %580 = vmatpush1.bf16.msra.mxu0 0
      %581 = vmatprep.subr.bf16.mxu0 0
      %582 = vmatpush1.bf16.msra.mxu0 0
      %583 = vmatprep.subr.bf16.mxu0 0
      %584 = vmatpush1.bf16.msra.mxu0 0
      %585 = vmatprep.subr.bf16.mxu0 0
      %586 = vmatpush1.bf16.msra.mxu0 0
      %587 = vmatprep.subr.bf16.mxu0 0
      %588 = vmatpush1.bf16.msra.mxu0 0
      %589 = vmatprep.subr.bf16.mxu0 0
      %590 = vmatpush1.bf16.msra.mxu0 0
      %591 = vmatprep.subr.bf16.mxu0 0
      %592 = vmatpush1.bf16.msra.mxu0 0
      %593 = vmatprep.subr.bf16.mxu0 0
      %594 = vmatpush1.bf16.msra.mxu0 0
      %595 = vmatprep.subr.bf16.mxu0 0
      %596 = vmatpush1.bf16.msra.mxu0 0
      %597 = vmatprep.subr.bf16.mxu0 0
      %598 = vmatpush1.bf16.msra.mxu0 0
      %599 = vmatprep.subr.bf16.mxu0 0
      %600 = vmatpush1.bf16.msra.mxu0 0
      %601 = vmatprep.subr.bf16.mxu0 0
      %602 = vmatpush1.bf16.msra.mxu0 0
      %603 = vmatprep.mubr.bf16.mxu0 0
      %604 = vmatmul.mubr.bf16.gmra.mrb[0].mxu0 %v565
      %v605 = vpop.f32.mrb[0].mxu0
      %v606 = vadd.f32 0.0, %v605
      %v607 = vpop.f32.mrb[0].mxu0
      %v608 = vpop.f32.mrb[0].mxu0
      %v609 = vadd.f32 0.0, %v608
      %v610 = vpop.f32.mrb[0].mxu0
      %611 = vdwg.mxu0
      %v612 = vadd.f32 %v432, %v606
      %v613 = vadd.f32 %v433, %v609
      %615 = vrot.lane.b32.xlu0 %v436, 120
      %v616 = vpop.permute.xlu0 %615
      %617 = vrot.lane.b32.xlu0 %v437, 88
      %v618 = vpop.permute.xlu0 %617
      %v620 = vsel %vm443, %v616, 0
      %v623 = vsel %vm443, %v618, 0
      %625 = vmatprep.subr.bf16.mxu0 0
      %626 = vmatpush1.bf16.xpose.msra.mxu0 %v623
      %627 = vmatprep.subr.bf16.mxu0 0
      %628 = vmatpush1.bf16.xpose.msra.mxu0 0
      %629 = vmatprep.subr.bf16.mxu0 0
      %630 = vmatpush1.bf16.xpose.msra.mxu0 0
      %631 = vmatprep.subr.bf16.mxu0 0
      %632 = vmatpush1.bf16.xpose.msra.mxu0 0
      %633 = vmatprep.subr.bf16.mxu0 0
      %634 = vmatpush1.bf16.xpose.msra.mxu0 0
      %635 = vmatprep.subr.bf16.mxu0 0
      %636 = vmatpush1.bf16.xpose.msra.mxu0 0
      %637 = vmatprep.subr.bf16.mxu0 0
      %638 = vmatpush1.bf16.xpose.msra.mxu0 0
      %639 = vmatprep.subr.bf16.mxu0 0
      %640 = vmatpush1.bf16.xpose.msra.mxu0 0
      %641 = vmatprep.subr.bf16.mxu0 0
      %642 = vmatpush1.bf16.xpose.msra.mxu0 0
      %643 = vmatprep.subr.bf16.mxu0 0
      %644 = vmatpush1.bf16.xpose.msra.mxu0 0
      %645 = vmatprep.subr.bf16.mxu0 0
      %646 = vmatpush1.bf16.xpose.msra.mxu0 0
      %647 = vmatprep.subr.bf16.mxu0 0
      %648 = vmatpush1.bf16.xpose.msra.mxu0 0
      %649 = vmatprep.subr.bf16.mxu0 0
      %650 = vmatpush1.bf16.xpose.msra.mxu0 0
      %651 = vmatprep.subr.bf16.mxu0 0
      %652 = vmatpush1.bf16.xpose.msra.mxu0 0
      %653 = vmatprep.subr.bf16.mxu0 0
      %654 = vmatpush1.bf16.xpose.msra.mxu0 0
      %655 = vmatprep.subr.bf16.mxu0 0
      %656 = vmatpush1.bf16.xpose.msra.mxu0 0
      %657 = vmatprep.mubr.bf16.mxu0 0
      %658 = vmatmul.mubr.bf16.gmra.mrb[0].mxu0 %v620
      %v659 = vpop.f32.mrb[0].mxu0
      %v660 = vadd.f32 %v438, %v659
      %v661 = vpop.f32.mrb[0].mxu0
      %v662 = vpop.f32.mrb[0].mxu0
      %v663 = vadd.f32 %v439, %v662
      %v664 = vpop.f32.mrb[0].mxu0
      %665 = vdwg.mxu0
      %v666 = vsel %vm491, %v660, -inf
      %667 = vmax.xlane.f32.xlu0 %v666
      %v668 = vpop.xlane.xlu0 %667
      %v669 = vsel %vm491, %v663, -inf
      %670 = vmax.xlane.f32.xlu0 %v669
      %v671 = vpop.xlane.xlu0 %670
      %v672 = vsub.f32 %v660, %v668
      %v673 = vsub.f32 %v663, %v671
      %v674 = vmul.f32 %v672, 1.442695
      %v675 = vpow.pop %v674
      %v676 = vmul.f32 %v673, 1.442695
      %v677 = vpow.pop %v676
      %v678 = vsel %vm491, %v675, 0.0
      %679 = vadd.xlane.f32.xlu0 %v678
      %v680 = vpop.xlane.xlu0 %679
      %v681 = vsel %vm491, %v677, 0.0
      %682 = vadd.xlane.f32.xlu0 %v681
      %v683 = vpop.xlane.xlu0 %682
      %v684 = vrcp.pop %v680
      %v685 = vrcp.pop %v683
      %v686 = vmul.f32 %v675, %v684
      %v687 = vmul.f32 %v677, %v685
      %v688 = vpack.c.bf16 %v687, %v686
      %689 = vrot.lane.b32.xlu0 %v437, 56
      %v690 = vpop.permute.xlu0 %689
      %v693 = vsel %vm491, %v688, 0
      %695 = vmatprep.subr.bf16.mxu0 0
      %696 = vmatpush1.bf16.msra.mxu0 %v690
      %697 = vmatprep.subr.bf16.mxu0 0
      %698 = vmatpush1.bf16.msra.mxu0 0
      %699 = vmatprep.subr.bf16.mxu0 0
      %700 = vmatpush1.bf16.msra.mxu0 0
      %701 = vmatprep.subr.bf16.mxu0 0
      %702 = vmatpush1.bf16.msra.mxu0 0
      %703 = vmatprep.subr.bf16.mxu0 0
      %704 = vmatpush1.bf16.msra.mxu0 0
      %705 = vmatprep.subr.bf16.mxu0 0
      %706 = vmatpush1.bf16.msra.mxu0 0
      %707 = vmatprep.subr.bf16.mxu0 0
      %708 = vmatpush1.bf16.msra.mxu0 0
      %709 = vmatprep.subr.bf16.mxu0 0
      %710 = vmatpush1.bf16.msra.mxu0 0
      %711 = vmatprep.subr.bf16.mxu0 0
      %712 = vmatpush1.bf16.msra.mxu0 0
      %713 = vmatprep.subr.bf16.mxu0 0
      %714 = vmatpush1.bf16.msra.mxu0 0
      %715 = vmatprep.subr.bf16.mxu0 0
      %716 = vmatpush1.bf16.msra.mxu0 0
      %717 = vmatprep.subr.bf16.mxu0 0
      %718 = vmatpush1.bf16.msra.mxu0 0
      %719 = vmatprep.subr.bf16.mxu0 0
      %720 = vmatpush1.bf16.msra.mxu0 0
      %721 = vmatprep.subr.bf16.mxu0 0
      %722 = vmatpush1.bf16.msra.mxu0 0
      %723 = vmatprep.subr.bf16.mxu0 0
      %724 = vmatpush1.bf16.msra.mxu0 0
      %725 = vmatprep.subr.bf16.mxu0 0
      %726 = vmatpush1.bf16.msra.mxu0 0
      %727 = vmatprep.mubr.bf16.mxu0 0
      %728 = vmatmul.mubr.bf16.gmra.mrb[0].mxu0 %v693
      %v729 = vpop.f32.mrb[0].mxu0
      %v730 = vadd.f32 0.0, %v729
      %v731 = vpop.f32.mrb[0].mxu0
      %v732 = vpop.f32.mrb[0].mxu0
      %v733 = vadd.f32 0.0, %v732
      %v734 = vpop.f32.mrb[0].mxu0
      %735 = vdwg.mxu0
      %v736 = vpack.c.bf16 %v733, %v730
      %v737 = vld [vmem:[%s5 + $0x4] sm:$0xf]
      %v739 = vsel %vm443, %v736, 0
      %v742 = vsel %vm567, %v737, 0
      %744 = vmatprep.subr.bf16.mxu0 0
      %745 = vmatpush1.bf16.msra.mxu0 %v742
      %746 = vmatprep.subr.bf16.mxu0 0
      %747 = vmatpush1.bf16.msra.mxu0 0
      %748 = vmatprep.subr.bf16.mxu0 0
      %749 = vmatpush1.bf16.msra.mxu0 0
      %750 = vmatprep.subr.bf16.mxu0 0
      %751 = vmatpush1.bf16.msra.mxu0 0
      %752 = vmatprep.subr.bf16.mxu0 0
      %753 = vmatpush1.bf16.msra.mxu0 0
      %754 = vmatprep.subr.bf16.mxu0 0
      %755 = vmatpush1.bf16.msra.mxu0 0
      %756 = vmatprep.subr.bf16.mxu0 0
      %757 = vmatpush1.bf16.msra.mxu0 0
      %758 = vmatprep.subr.bf16.mxu0 0
      %759 = vmatpush1.bf16.msra.mxu0 0
      %760 = vmatprep.subr.bf16.mxu0 0
      %761 = vmatpush1.bf16.msra.mxu0 0
      %762 = vmatprep.subr.bf16.mxu0 0
      %763 = vmatpush1.bf16.msra.mxu0 0
      %764 = vmatprep.subr.bf16.mxu0 0
      %765 = vmatpush1.bf16.msra.mxu0 0
      %766 = vmatprep.subr.bf16.mxu0 0
      %767 = vmatpush1.bf16.msra.mxu0 0
      %768 = vmatprep.subr.bf16.mxu0 0
      %769 = vmatpush1.bf16.msra.mxu0 0
      %770 = vmatprep.subr.bf16.mxu0 0
      %771 = vmatpush1.bf16.msra.mxu0 0
      %772 = vmatprep.subr.bf16.mxu0 0
      %773 = vmatpush1.bf16.msra.mxu0 0
      %774 = vmatprep.subr.bf16.mxu0 0
      %775 = vmatpush1.bf16.msra.mxu0 0
      %776 = vmatprep.mubr.bf16.mxu0 0
      %777 = vmatmul.mubr.bf16.gmra.mrb[0].mxu0 %v739
      %v778 = vpop.f32.mrb[0].mxu0
      %v779 = vadd.f32 0.0, %v778
      %v780 = vpop.f32.mrb[0].mxu0
      %v781 = vpop.f32.mrb[0].mxu0
      %v782 = vadd.f32 0.0, %v781
      %v783 = vpop.f32.mrb[0].mxu0
      %784 = vdwg.mxu0
      %v785 = vadd.f32 %v612, %v779
      %v786 = vadd.f32 %v613, %v782
      %787 = vrot.lane.b32.xlu0 %v436, 112
      %v788 = vpop.permute.xlu0 %787
      %789 = vrot.lane.b32.xlu0 %v437, 80
      %v790 = vpop.permute.xlu0 %789
      %v792 = vsel %vm443, %v788, 0
      %v795 = vsel %vm443, %v790, 0
      %797 = vmatprep.subr.bf16.mxu0 0
      %798 = vmatpush1.bf16.xpose.msra.mxu0 %v795
      %799 = vmatprep.subr.bf16.mxu0 0
      %800 = vmatpush1.bf16.xpose.msra.mxu0 0
      %801 = vmatprep.subr.bf16.mxu0 0
      %802 = vmatpush1.bf16.xpose.msra.mxu0 0
      %803 = vmatprep.subr.bf16.mxu0 0
      %804 = vmatpush1.bf16.xpose.msra.mxu0 0
      %805 = vmatprep.subr.bf16.mxu0 0
      %806 = vmatpush1.bf16.xpose.msra.mxu0 0
      %807 = vmatprep.subr.bf16.mxu0 0
      %808 = vmatpush1.bf16.xpose.msra.mxu0 0
      %809 = vmatprep.subr.bf16.mxu0 0
      %810 = vmatpush1.bf16.xpose.msra.mxu0 0
      %811 = vmatprep.subr.bf16.mxu0 0
      %812 = vmatpush1.bf16.xpose.msra.mxu0 0
      %813 = vmatprep.subr.bf16.mxu0 0
      %814 = vmatpush1.bf16.xpose.msra.mxu0 0
      %815 = vmatprep.subr.bf16.mxu0 0
      %816 = vmatpush1.bf16.xpose.msra.mxu0 0
      %817 = vmatprep.subr.bf16.mxu0 0
      %818 = vmatpush1.bf16.xpose.msra.mxu0 0
      %819 = vmatprep.subr.bf16.mxu0 0
      %820 = vmatpush1.bf16.xpose.msra.mxu0 0
      %821 = vmatprep.subr.bf16.mxu0 0
      %822 = vmatpush1.bf16.xpose.msra.mxu0 0
      %823 = vmatprep.subr.bf16.mxu0 0
      %824 = vmatpush1.bf16.xpose.msra.mxu0 0
      %825 = vmatprep.subr.bf16.mxu0 0
      %826 = vmatpush1.bf16.xpose.msra.mxu0 0
      %827 = vmatprep.subr.bf16.mxu0 0
      %828 = vmatpush1.bf16.xpose.msra.mxu0 0
      %829 = vmatprep.mubr.bf16.mxu0 0
      %830 = vmatmul.mubr.bf16.gmra.mrb[0].mxu0 %v792
      %v831 = vpop.f32.mrb[0].mxu0
      %v832 = vadd.f32 %v438, %v831
      %v833 = vpop.f32.mrb[0].mxu0
      %v834 = vpop.f32.mrb[0].mxu0
      %v835 = vadd.f32 %v439, %v834
      %v836 = vpop.f32.mrb[0].mxu0
      %837 = vdwg.mxu0
      %v838 = vsel %vm491, %v832, -inf
      %839 = vmax.xlane.f32.xlu0 %v838
      %v840 = vpop.xlane.xlu0 %839
      %v841 = vsel %vm491, %v835, -inf
      %842 = vmax.xlane.f32.xlu0 %v841
      %v843 = vpop.xlane.xlu0 %842
      %v844 = vsub.f32 %v832, %v840
      %v845 = vsub.f32 %v835, %v843
      %v846 = vmul.f32 %v844, 1.442695
      %v847 = vpow.pop %v846
      %v848 = vmul.f32 %v845, 1.442695
      %v849 = vpow.pop %v848
      %v850 = vsel %vm491, %v847, 0.0
      %851 = vadd.xlane.f32.xlu0 %v850
      %v852 = vpop.xlane.xlu0 %851
      %v853 = vsel %vm491, %v849, 0.0
      %854 = vadd.xlane.f32.xlu0 %v853
      %v855 = vpop.xlane.xlu0 %854
      %v856 = vrcp.pop %v852
      %v857 = vrcp.pop %v855
      %v858 = vmul.f32 %v847, %v856
      %v859 = vmul.f32 %v849, %v857
      %v860 = vpack.c.bf16 %v859, %v858
      %861 = vrot.lane.b32.xlu0 %v437, 48
      %v862 = vpop.permute.xlu0 %861
      %v865 = vsel %vm491, %v860, 0
      %867 = vmatprep.subr.bf16.mxu0 0
      %868 = vmatpush1.bf16.msra.mxu0 %v862
      %869 = vmatprep.subr.bf16.mxu0 0
      %870 = vmatpush1.bf16.msra.mxu0 0
      %871 = vmatprep.subr.bf16.mxu0 0
      %872 = vmatpush1.bf16.msra.mxu0 0
      %873 = vmatprep.subr.bf16.mxu0 0
      %874 = vmatpush1.bf16.msra.mxu0 0
      %875 = vmatprep.subr.bf16.mxu0 0
      %876 = vmatpush1.bf16.msra.mxu0 0
      %877 = vmatprep.subr.bf16.mxu0 0
      %878 = vmatpush1.bf16.msra.mxu0 0
      %879 = vmatprep.subr.bf16.mxu0 0
      %880 = vmatpush1.bf16.msra.mxu0 0
      %881 = vmatprep.subr.bf16.mxu0 0
      %882 = vmatpush1.bf16.msra.mxu0 0
      %883 = vmatprep.subr.bf16.mxu0 0
      %884 = vmatpush1.bf16.msra.mxu0 0
      %885 = vmatprep.subr.bf16.mxu0 0
      %886 = vmatpush1.bf16.msra.mxu0 0
      %887 = vmatprep.subr.bf16.mxu0 0
      %888 = vmatpush1.bf16.msra.mxu0 0
      %889 = vmatprep.subr.bf16.mxu0 0
      %890 = vmatpush1.bf16.msra.mxu0 0
      %891 = vmatprep.subr.bf16.mxu0 0
      %892 = vmatpush1.bf16.msra.mxu0 0
      %893 = vmatprep.subr.bf16.mxu0 0
      %894 = vmatpush1.bf16.msra.mxu0 0
      %895 = vmatprep.subr.bf16.mxu0 0
      %896 = vmatpush1.bf16.msra.mxu0 0
      %897 = vmatprep.subr.bf16.mxu0 0
      %898 = vmatpush1.bf16.msra.mxu0 0
      %899 = vmatprep.mubr.bf16.mxu0 0
      %900 = vmatmul.mubr.bf16.gmra.mrb[0].mxu0 %v865
      %v901 = vpop.f32.mrb[0].mxu0
      %v902 = vadd.f32 0.0, %v901
      %v903 = vpop.f32.mrb[0].mxu0
      %v904 = vpop.f32.mrb[0].mxu0
      %v905 = vadd.f32 0.0, %v904
      %v906 = vpop.f32.mrb[0].mxu0
      %907 = vdwg.mxu0
      %v908 = vpack.c.bf16 %v905, %v902
      %v909 = vld [vmem:[%s5 + $0x8] sm:$0xf]
      %v911 = vsel %vm443, %v908, 0
      %v914 = vsel %vm567, %v909, 0
      %916 = vmatprep.subr.bf16.mxu0 0
      %917 = vmatpush1.bf16.msra.mxu0 %v914
      %918 = vmatprep.subr.bf16.mxu0 0
      %919 = vmatpush1.bf16.msra.mxu0 0
      %920 = vmatprep.subr.bf16.mxu0 0
      %921 = vmatpush1.bf16.msra.mxu0 0
      %922 = vmatprep.subr.bf16.mxu0 0
      %923 = vmatpush1.bf16.msra.mxu0 0
      %924 = vmatprep.subr.bf16.mxu0 0
      %925 = vmatpush1.bf16.msra.mxu0 0
      %926 = vmatprep.subr.bf16.mxu0 0
      %927 = vmatpush1.bf16.msra.mxu0 0
      %928 = vmatprep.subr.bf16.mxu0 0
      %929 = vmatpush1.bf16.msra.mxu0 0
      %930 = vmatprep.subr.bf16.mxu0 0
      %931 = vmatpush1.bf16.msra.mxu0 0
      %932 = vmatprep.subr.bf16.mxu0 0
      %933 = vmatpush1.bf16.msra.mxu0 0
      %934 = vmatprep.subr.bf16.mxu0 0
      %935 = vmatpush1.bf16.msra.mxu0 0
      %936 = vmatprep.subr.bf16.mxu0 0
      %937 = vmatpush1.bf16.msra.mxu0 0
      %938 = vmatprep.subr.bf16.mxu0 0
      %939 = vmatpush1.bf16.msra.mxu0 0
      %940 = vmatprep.subr.bf16.mxu0 0
      %941 = vmatpush1.bf16.msra.mxu0 0
      %942 = vmatprep.subr.bf16.mxu0 0
      %943 = vmatpush1.bf16.msra.mxu0 0
      %944 = vmatprep.subr.bf16.mxu0 0
      %945 = vmatpush1.bf16.msra.mxu0 0
      %946 = vmatprep.subr.bf16.mxu0 0
      %947 = vmatpush1.bf16.msra.mxu0 0
      %948 = vmatprep.mubr.bf16.mxu0 0
      %949 = vmatmul.mubr.bf16.gmra.mrb[0].mxu0 %v911
      %v950 = vpop.f32.mrb[0].mxu0
      %v951 = vadd.f32 0.0, %v950
      %v952 = vpop.f32.mrb[0].mxu0
      %v953 = vpop.f32.mrb[0].mxu0
      %v954 = vadd.f32 0.0, %v953
      %v955 = vpop.f32.mrb[0].mxu0
      %956 = vdwg.mxu0
      %v957 = vadd.f32 %v785, %v951
      %v958 = vadd.f32 %v786, %v954
      %959 = vrot.lane.b32.xlu0 %v436, 104
      %v960 = vpop.permute.xlu0 %959
      %961 = vrot.lane.b32.xlu0 %v437, 72
      %v962 = vpop.permute.xlu0 %961
      %v964 = vsel %vm443, %v960, 0
      %v967 = vsel %vm443, %v962, 0
      %969 = vmatprep.subr.bf16.mxu0 0
      %970 = vmatpush1.bf16.xpose.msra.mxu0 %v967
      %971 = vmatprep.subr.bf16.mxu0 0
      %972 = vmatpush1.bf16.xpose.msra.mxu0 0
      %973 = vmatprep.subr.bf16.mxu0 0
      %974 = vmatpush1.bf16.xpose.msra.mxu0 0
      %975 = vmatprep.subr.bf16.mxu0 0
      %976 = vmatpush1.bf16.xpose.msra.mxu0 0
      %977 = vmatprep.subr.bf16.mxu0 0
      %978 = vmatpush1.bf16.xpose.msra.mxu0 0
      %979 = vmatprep.subr.bf16.mxu0 0
      %980 = vmatpush1.bf16.xpose.msra.mxu0 0
      %981 = vmatprep.subr.bf16.mxu0 0
      %982 = vmatpush1.bf16.xpose.msra.mxu0 0
      %983 = vmatprep.subr.bf16.mxu0 0
      %984 = vmatpush1.bf16.xpose.msra.mxu0 0
      %985 = vmatprep.subr.bf16.mxu0 0
      %986 = vmatpush1.bf16.xpose.msra.mxu0 0
      %987 = vmatprep.subr.bf16.mxu0 0
      %988 = vmatpush1.bf16.xpose.msra.mxu0 0
      %989 = vmatprep.subr.bf16.mxu0 0
      %990 = vmatpush1.bf16.xpose.msra.mxu0 0
      %991 = vmatprep.subr.bf16.mxu0 0
      %992 = vmatpush1.bf16.xpose.msra.mxu0 0
      %993 = vmatprep.subr.bf16.mxu0 0
      %994 = vmatpush1.bf16.xpose.msra.mxu0 0
      %995 = vmatprep.subr.bf16.mxu0 0
      %996 = vmatpush1.bf16.xpose.msra.mxu0 0
      %997 = vmatprep.subr.bf16.mxu0 0
      %998 = vmatpush1.bf16.xpose.msra.mxu0 0
      %999 = vmatprep.subr.bf16.mxu0 0
      %1000 = vmatpush1.bf16.xpose.msra.mxu0 0
      %1001 = vmatprep.mubr.bf16.mxu0 0
      %1002 = vmatmul.mubr.bf16.gmra.mrb[0].mxu0 %v964
      %v1003 = vpop.f32.mrb[0].mxu0
      %v1004 = vadd.f32 %v438, %v1003
      %v1005 = vpop.f32.mrb[0].mxu0
      %v1006 = vpop.f32.mrb[0].mxu0
      %v1007 = vadd.f32 %v439, %v1006
      %v1008 = vpop.f32.mrb[0].mxu0
      %1009 = vdwg.mxu0
      %v1010 = vsel %vm491, %v1004, -inf
      %1011 = vmax.xlane.f32.xlu0 %v1010
      %v1012 = vpop.xlane.xlu0 %1011
      %v1013 = vsel %vm491, %v1007, -inf
      %1014 = vmax.xlane.f32.xlu0 %v1013
      %v1015 = vpop.xlane.xlu0 %1014
      %v1016 = vsub.f32 %v1004, %v1012
      %v1017 = vsub.f32 %v1007, %v1015
      %v1018 = vmul.f32 %v1016, 1.442695
      %v1019 = vpow.pop %v1018
      %v1020 = vmul.f32 %v1017, 1.442695
      %v1021 = vpow.pop %v1020
      %v1022 = vsel %vm491, %v1019, 0.0
      %1023 = vadd.xlane.f32.xlu0 %v1022
      %v1024 = vpop.xlane.xlu0 %1023
      %v1025 = vsel %vm491, %v1021, 0.0
      %1026 = vadd.xlane.f32.xlu0 %v1025
      %v1027 = vpop.xlane.xlu0 %1026
      %v1028 = vrcp.pop %v1024
      %v1029 = vrcp.pop %v1027
      %v1030 = vmul.f32 %v1019, %v1028
      %v1031 = vmul.f32 %v1021, %v1029
      %v1032 = vpack.c.bf16 %v1031, %v1030
      %1033 = vrot.lane.b32.xlu0 %v437, 40
      %v1034 = vpop.permute.xlu0 %1033
      %v1037 = vsel %vm491, %v1032, 0
      %1039 = vmatprep.subr.bf16.mxu0 0
      %1040 = vmatpush1.bf16.msra.mxu0 %v1034
      %1041 = vmatprep.subr.bf16.mxu0 0
      %1042 = vmatpush1.bf16.msra.mxu0 0
      %1043 = vmatprep.subr.bf16.mxu0 0
      %1044 = vmatpush1.bf16.msra.mxu0 0
      %1045 = vmatprep.subr.bf16.mxu0 0
      %1046 = vmatpush1.bf16.msra.mxu0 0
      %1047 = vmatprep.subr.bf16.mxu0 0
      %1048 = vmatpush1.bf16.msra.mxu0 0
      %1049 = vmatprep.subr.bf16.mxu0 0
      %1050 = vmatpush1.bf16.msra.mxu0 0
      %1051 = vmatprep.subr.bf16.mxu0 0
      %1052 = vmatpush1.bf16.msra.mxu0 0
      %1053 = vmatprep.subr.bf16.mxu0 0
      %1054 = vmatpush1.bf16.msra.mxu0 0
      %1055 = vmatprep.subr.bf16.mxu0 0
      %1056 = vmatpush1.bf16.msra.mxu0 0
      %1057 = vmatprep.subr.bf16.mxu0 0
      %1058 = vmatpush1.bf16.msra.mxu0 0
      %1059 = vmatprep.subr.bf16.mxu0 0
      %1060 = vmatpush1.bf16.msra.mxu0 0
      %1061 = vmatprep.subr.bf16.mxu0 0
      %1062 = vmatpush1.bf16.msra.mxu0 0
      %1063 = vmatprep.subr.bf16.mxu0 0
      %1064 = vmatpush1.bf16.msra.mxu0 0
      %1065 = vmatprep.subr.bf16.mxu0 0
      %1066 = vmatpush1.bf16.msra.mxu0 0
      %1067 = vmatprep.subr.bf16.mxu0 0
      %1068 = vmatpush1.bf16.msra.mxu0 0
      %1069 = vmatprep.subr.bf16.mxu0 0
      %1070 = vmatpush1.bf16.msra.mxu0 0
      %1071 = vmatprep.mubr.bf16.mxu0 0
      %1072 = vmatmul.mubr.bf16.gmra.mrb[0].mxu0 %v1037
      %v1073 = vpop.f32.mrb[0].mxu0
      %v1074 = vadd.f32 0.0, %v1073
      %v1075 = vpop.f32.mrb[0].mxu0
      %v1076 = vpop.f32.mrb[0].mxu0
      %v1077 = vadd.f32 0.0, %v1076
      %v1078 = vpop.f32.mrb[0].mxu0
      %1079 = vdwg.mxu0
      %v1080 = vpack.c.bf16 %v1077, %v1074
      %v1081 = vld [vmem:[%s5 + $0xc] sm:$0xf]
      %v1083 = vsel %vm443, %v1080, 0
      %v1086 = vsel %vm567, %v1081, 0
      %1088 = vmatprep.subr.bf16.mxu0 0
      %1089 = vmatpush1.bf16.msra.mxu0 %v1086
      %1090 = vmatprep.subr.bf16.mxu0 0
      %1091 = vmatpush1.bf16.msra.mxu0 0
      %1092 = vmatprep.subr.bf16.mxu0 0
      %1093 = vmatpush1.bf16.msra.mxu0 0
      %1094 = vmatprep.subr.bf16.mxu0 0
      %1095 = vmatpush1.bf16.msra.mxu0 0
      %1096 = vmatprep.subr.bf16.mxu0 0
      %1097 = vmatpush1.bf16.msra.mxu0 0
      %1098 = vmatprep.subr.bf16.mxu0 0
      %1099 = vmatpush1.bf16.msra.mxu0 0
      %1100 = vmatprep.subr.bf16.mxu0 0
      %1101 = vmatpush1.bf16.msra.mxu0 0
      %1102 = vmatprep.subr.bf16.mxu0 0
      %1103 = vmatpush1.bf16.msra.mxu0 0
      %1104 = vmatprep.subr.bf16.mxu0 0
      %1105 = vmatpush1.bf16.msra.mxu0 0
      %1106 = vmatprep.subr.bf16.mxu0 0
      %1107 = vmatpush1.bf16.msra.mxu0 0
      %1108 = vmatprep.subr.bf16.mxu0 0
      %1109 = vmatpush1.bf16.msra.mxu0 0
      %1110 = vmatprep.subr.bf16.mxu0 0
      %1111 = vmatpush1.bf16.msra.mxu0 0
      %1112 = vmatprep.subr.bf16.mxu0 0
      %1113 = vmatpush1.bf16.msra.mxu0 0
      %1114 = vmatprep.subr.bf16.mxu0 0
      %1115 = vmatpush1.bf16.msra.mxu0 0
      %1116 = vmatprep.subr.bf16.mxu0 0
      %1117 = vmatpush1.bf16.msra.mxu0 0
      %1118 = vmatprep.subr.bf16.mxu0 0
      %1119 = vmatpush1.bf16.msra.mxu0 0
      %1120 = vmatprep.mubr.bf16.mxu0 0
      %1121 = vmatmul.mubr.bf16.gmra.mrb[0].mxu0 %v1083
      %v1122 = vpop.f32.mrb[0].mxu0
      %v1123 = vadd.f32 0.0, %v1122
      %v1124 = vpop.f32.mrb[0].mxu0
      %v1125 = vpop.f32.mrb[0].mxu0
      %v1126 = vadd.f32 0.0, %v1125
      %v1127 = vpop.f32.mrb[0].mxu0
      %1128 = vdwg.mxu0
      %v1129 = vadd.f32 %v957, %v1123
      %v1130 = vadd.f32 %v958, %v1126
      %v1131 = vpack.c.bf16 %v1130, %v1129
      %v1133 = vunpack.c.l.b16 %v1131
      %v1134 = vunpack.c.h.b16 %v1131
      %v1135 = vpack.c.b16 %v1133, %v1133
      %v1136 = vpack.c.b16 %v1134, %v1134
      %vm1139 = vcmask 257024
      %1140 = vst.msk [vmem:[%s305] sm:$0xf] %vm1139, %v1135
      %1141 = vst.msk [vmem:[%s305 + $0x4] sm:$0xf] %vm1139, %v1136
      %p1142 = scmp.lt.s32.totalorder %s19, 2
      %s1143 = scalar_select %p1142, %s19, 2
      %s1144 = smul.addr %s1143, 2
      %s1145 = smul.addr %s1144, 4
      %s1146 = scalar_lea.vmem %s8, %s1145
      // Predicated region
      $region53: #{_lambda_.14} parent=51 // pred_check
        %p1147 = pneg %p210
      $region54: #{_lambda_.14} parent=51 // pred_check_branch
        %1149 = sbr.rel (%p1147) target = $region56
      $region55: #{_lambda_.14} parent=51 // pred_region
        _
      $region56: #{_lambda_.14} parent=51 // pred_fallthru
        _
    $region52: #{_lambda_.14} parent=5 // pred_fallthru
      _
    %p1150 = scmp.le.s32.totalorder 2, %s14
    // Predicated region
    $region57: #{_lambda_.14} parent=5 // pred_check
      %p1151 = pneg %p1150
    $region58: #{_lambda_.14} parent=5 // pred_check_branch
      %1153 = sbr.rel (%p1151) target = $region60
    $region59: #{_lambda_.14} parent=5 // pred_region
      %s1154 = ssub.s32 %s14, 2
      // Predicated region
      $region61: #{_lambda_.14} parent=59 // pred_check
        %p1155 = pneg %p216
      $region62: #{_lambda_.14} parent=59 // pred_check_branch
        %1157 = sbr.rel (%p1155) target = $region64
      $region63: #{_lambda_.14} parent=59 // pred_region
        %p1158 = scmp.lt.s32.totalorder %s20, 2
        %s1159 = scalar_select %p1158, %s20, 2
        %s1160 = smul.addr %s1159, 2
        %s1161 = smul.addr %s1160, 4
        %s1162 = scalar_lea.vmem %s8, %s1161
      $region64: #{_lambda_.14} parent=59 // pred_fallthru
        _
    $region60: #{_lambda_.14} parent=5 // pred_fallthru
      _
  $region6: #{_lambda_.14} parent=0 // loop_footer
    %s18 = sadd.s32 1, %s14
  $region7: #{_lambda_.14} parent=0 // loop_footer_branch
    %13 = sbr.rel target = $region3
  $region8: #{_lambda_.14} parent=0 // loop_exit
    _

// kernel: _lambda_.19
$region0: #{_lambda_.19}
  #allocation0 [shape = 'u32[]', space=smem, size = 0x4, offset = 0x4, fixed_abs, tag = 'smem constant byte address 0x4 - core index']
  #allocation1 [shape = 'u32[144,128]{1,0:T(1,128)}', space=vmem, size = 0x12000, scoped, tag = 'internal scratch']
  #allocation2 [shape = 'f32[8,128]{1,0:T(8,128)}', space=vmem, size = 0x1000, scoped, tag = 'scratch operand']
  %s0 = inlined_call_operand.vmem [shape: bf16[8,128], index: 0, kind: input, shape index: {}]
  %s1 = inlined_call_operand.vmem [shape: bf16[128,128], index: 1, kind: input, shape index: {}]
  %s2 = inlined_call_operand.vmem [shape: f32[8,128], index: 2, kind: output, shape index: {}]
  %s3 = sld [smem:[#allocation0]]
  $region26: #{_lambda_.19} parent=0
    _
  %s5 = ssub.s32 1, %s3
  %s6 = scalar_select 0, %s5, %s3
  // Predicated region
  $region2: #{_lambda_.19} parent=0 // pred_check
    _
  $region3: #{_lambda_.19} parent=0 // pred_check_branch
    %8 = sbr.rel (0) target = $region5
  $region4: #{_lambda_.19} parent=0 // pred_region
    _
  $region5: #{_lambda_.19} parent=0 // pred_fallthru
    _
  // Predicated region
  $region6: #{_lambda_.19} parent=0 // pred_check
    _
  $region7: #{_lambda_.19} parent=0 // pred_check_branch
    %10 = sbr.rel (0) target = $region9
  $region8: #{_lambda_.19} parent=0 // pred_region
    _
  $region9: #{_lambda_.19} parent=0 // pred_fallthru
    _
  %p12 = scmp.eq.s32.totalorder 0, 0
  // Predicated region
  $region10: #{_lambda_.19} parent=0 // pred_check
    %p13 = pneg %p12
  $region11: #{_lambda_.19} parent=0 // pred_check_branch
    %15 = sbr.rel (%p13) target = $region13
  $region12: #{_lambda_.19} parent=0 // pred_region
    %16 = vst [vmem:[#allocation2] sm:$0xff] 0.0
  $region13: #{_lambda_.19} parent=0 // pred_fallthru
    _
  %v17 = vld [vmem:[#allocation2] sm:$0xff]
  %v18 = vld [vmem:[%s0] sm:$0xf]
  %v19 = vld [vmem:[%s1] sm:$0xf]
  %v20 = vld [vmem:[%s1 + $0x4] sm:$0xf]
  %v21 = vld [vmem:[%s1 + $0x8] sm:$0xf]
  %v22 = vld [vmem:[%s1 + $0xc] sm:$0xf]
  %v23 = vld [vmem:[%s1 + $0x10] sm:$0xf]
  %v24 = vld [vmem:[%s1 + $0x14] sm:$0xf]
  %v25 = vld [vmem:[%s1 + $0x18] sm:$0xf]
  %v26 = vld [vmem:[%s1 + $0x1c] sm:$0xf]
  %v27 = vld [vmem:[%s1 + $0x20] sm:$0xf]
  %v28 = vld [vmem:[%s1 + $0x24] sm:$0xf]
  %v29 = vld [vmem:[%s1 + $0x28] sm:$0xf]
  %v30 = vld [vmem:[%s1 + $0x2c] sm:$0xf]
  %v31 = vld [vmem:[%s1 + $0x30] sm:$0xf]
  %v32 = vld [vmem:[%s1 + $0x34] sm:$0xf]
  %v33 = vld [vmem:[%s1 + $0x38] sm:$0xf]
  %v34 = vld [vmem:[%s1 + $0x3c] sm:$0xf]
  %v51 = vunpack.c.l.b16 %v19
  %v52 = vunpack.c.l.b16 %v20
  %v53 = vunpack.c.l.b16 %v21
  %v54 = vunpack.c.l.b16 %v22
  %v55 = vunpack.c.l.b16 %v23
  %v56 = vunpack.c.l.b16 %v24
  %v57 = vunpack.c.l.b16 %v25
  %v58 = vunpack.c.l.b16 %v26
  %v59 = vunpack.c.l.b16 %v27
  %v60 = vunpack.c.l.b16 %v28
  %v61 = vunpack.c.l.b16 %v29
  %v62 = vunpack.c.l.b16 %v30
  %v63 = vunpack.c.l.b16 %v31
  %v64 = vunpack.c.l.b16 %v32
  %v65 = vunpack.c.l.b16 %v33
  %v66 = vunpack.c.l.b16 %v34
  %v67 = vpack.c.b16 %v52, %v51
  %v68 = vpack.c.b16 %v54, %v53
  %v69 = vpack.c.b16 %v56, %v55
  %v70 = vpack.c.b16 %v58, %v57
  %v71 = vpack.c.b16 %v60, %v59
  %v72 = vpack.c.b16 %v62, %v61
  %v73 = vpack.c.b16 %v64, %v63
  %v74 = vpack.c.b16 %v66, %v65
  %83 = vmatprep.subr.bf16.mxu0 0
  %84 = vmatpush1.bf16.msra.mxu0 %v67
  %85 = vmatprep.subr.bf16.mxu0 0
  %86 = vmatpush1.bf16.msra.mxu0 %v68
  %87 = vmatprep.subr.bf16.mxu0 0
  %88 = vmatpush1.bf16.msra.mxu0 %v69
  %89 = vmatprep.subr.bf16.mxu0 0
  %90 = vmatpush1.bf16.msra.mxu0 %v70
  %91 = vmatprep.subr.bf16.mxu0 0
  %92 = vmatpush1.bf16.msra.mxu0 %v71
  %93 = vmatprep.subr.bf16.mxu0 0
  %94 = vmatpush1.bf16.msra.mxu0 %v72
  %95 = vmatprep.subr.bf16.mxu0 0
  %96 = vmatpush1.bf16.msra.mxu0 %v73
  %97 = vmatprep.subr.bf16.mxu0 0
  %98 = vmatpush1.bf16.msra.mxu0 %v74
  %99 = vmatprep.subr.bf16.mxu0 0
  %100 = vmatpush1.bf16.msra.mxu0 0
  %101 = vmatprep.subr.bf16.mxu0 0
  %102 = vmatpush1.bf16.msra.mxu0 0
  %103 = vmatprep.subr.bf16.mxu0 0
  %104 = vmatpush1.bf16.msra.mxu0 0
  %105 = vmatprep.subr.bf16.mxu0 0
  %106 = vmatpush1.bf16.msra.mxu0 0
  %107 = vmatprep.subr.bf16.mxu0 0
  %108 = vmatpush1.bf16.msra.mxu0 0
  %109 = vmatprep.subr.bf16.mxu0 0
  %110 = vmatpush1.bf16.msra.mxu0 0
  %111 = vmatprep.subr.bf16.mxu0 0
  %112 = vmatpush1.bf16.msra.mxu0 0
  %113 = vmatprep.subr.bf16.mxu0 0
  %114 = vmatpush1.bf16.msra.mxu0 0
  %115 = vmatprep.mubr.bf16.mxu0 0
  %116 = vmatmul.mubr.bf16.gmra.mrb[0].mxu0 %v18
  %v117 = vpop.f32.mrb[0].mxu0
  %v118 = vadd.f32 0.0, %v117
  %v119 = vpop.f32.mrb[0].mxu0
  %v120 = vpop.f32.mrb[0].mxu0
  %v121 = vpop.f32.mrb[0].mxu0
  %122 = vdwg.mxu0
  %v123 = vadd.f32 %v17, %v118
  %124 = vst [vmem:[#allocation2] sm:$0xff] %v123
  // Predicated region
  $region14: #{_lambda_.19} parent=0 // pred_check
    %p125 = pneg %p12
  $region15: #{_lambda_.19} parent=0 // pred_check_branch
    %127 = sbr.rel (%p125) target = $region17
  $region16: #{_lambda_.19} parent=0 // pred_region
    %v128 = vld [vmem:[#allocation2] sm:$0xff]
    %129 = vst [vmem:[%s2] sm:$0xff] %v128
  $region17: #{_lambda_.19} parent=0 // pred_fallthru
    _
  // Predicated region
  $region18: #{_lambda_.19} parent=0 // pred_check
    _
  $region19: #{_lambda_.19} parent=0 // pred_check_branch
    %131 = sbr.rel (0) target = $region21
  $region20: #{_lambda_.19} parent=0 // pred_region
    _
  $region21: #{_lambda_.19} parent=0 // pred_fallthru
    _
  // Predicated region
  $region22: #{_lambda_.19} parent=0 // pred_check
    _
  $region23: #{_lambda_.19} parent=0 // pred_check_branch
    %133 = sbr.rel (0) target = $region25
  $region24: #{_lambda_.19} parent=0 // pred_region
    _
  $region25: #{_lambda_.19} parent=0 // pred_fallthru
    _

// kernel: _lambda_.27
$region0: #{_lambda_.27}
  #allocation0 [shape = 'u32[]', space=smem, size = 0x4, offset = 0x4, fixed_abs, tag = 'smem constant byte address 0x4 - core index']
  #allocation1 [shape = 'u32[144,128]{1,0:T(1,128)}', space=vmem, size = 0x12000, scoped, tag = 'internal scratch']
  #allocation2 [shape = 'f32[1,1]{1,0:T(1,128)S(1)}', space=vmem, size = 0x200, scoped, tag = 'scoped memory for _lambda_.27']
  %s0 = inlined_call_operand.vmem [shape: f32[8,16], index: 0, kind: input, shape index: {}]
  %s1 = inlined_call_operand.vmem [shape: f32[128,16], index: 1, kind: input, shape index: {}]
  %s2 = inlined_call_operand.<no memory space> [shape: f32[1,1], index: 2, kind: input, shape index: {}]
  %s3 = inlined_call_operand.vmem [shape: f32[8,128], index: 3, kind: output, shape index: {}]
  %s4 = sld [smem:[#allocation0]]
  $region22: #{_lambda_.27} parent=0
    _
  %s6 = ssub.s32 1, %s4
  %s7 = scalar_select 0, %s6, %s4
  %v8 = vstv %s2
  %9 = vst [vmem:[#allocation2] sm:$0x1] %v8
  // Predicated region
  $region2: #{_lambda_.27} parent=0 // pred_check
    _
  $region3: #{_lambda_.27} parent=0 // pred_check_branch
    %11 = sbr.rel (0) target = $region5
  $region4: #{_lambda_.27} parent=0 // pred_region
    _
  $region5: #{_lambda_.27} parent=0 // pred_fallthru
    _
  // Predicated region
  $region6: #{_lambda_.27} parent=0 // pred_check
    _
  $region7: #{_lambda_.27} parent=0 // pred_check_branch
    %13 = sbr.rel (0) target = $region9
  $region8: #{_lambda_.27} parent=0 // pred_region
    _
  $region9: #{_lambda_.27} parent=0 // pred_fallthru
    _
  // Predicated region
  $region10: #{_lambda_.27} parent=0 // pred_check
    _
  $region11: #{_lambda_.27} parent=0 // pred_check_branch
    %15 = sbr.rel (0) target = $region13
  $region12: #{_lambda_.27} parent=0 // pred_region
    _
  $region13: #{_lambda_.27} parent=0 // pred_fallthru
    _
  %v16 = vld [vmem:[%s0] sm:$0xff]
  %v17 = vld [vmem:[%s1] sm:$0xff]
  %v18 = vld [vmem:[%s1 + $0x8] sm:$0xff]
  %v19 = vld [vmem:[%s1 + $0x10] sm:$0xff]
  %v20 = vld [vmem:[%s1 + $0x18] sm:$0xff]
  %v21 = vld [vmem:[%s1 + $0x20] sm:$0xff]
  %v22 = vld [vmem:[%s1 + $0x28] sm:$0xff]
  %v23 = vld [vmem:[%s1 + $0x30] sm:$0xff]
  %v24 = vld [vmem:[%s1 + $0x38] sm:$0xff]
  %v25 = vld [vmem:[%s1 + $0x40] sm:$0xff]
  %v26 = vld [vmem:[%s1 + $0x48] sm:$0xff]
  %v27 = vld [vmem:[%s1 + $0x50] sm:$0xff]
  %v28 = vld [vmem:[%s1 + $0x58] sm:$0xff]
  %v29 = vld [vmem:[%s1 + $0x60] sm:$0xff]
  %v30 = vld [vmem:[%s1 + $0x68] sm:$0xff]
  %v31 = vld [vmem:[%s1 + $0x70] sm:$0xff]
  %v32 = vld [vmem:[%s1 + $0x78] sm:$0xff]
  %v33 = vmul.f32 %v16, %v16
  %vm34 = vcmask 130048
  %v35 = vsel %vm34, %v33, 0.0
  %36 = vadd.xlane.f32.xlu0 %v35
  %v37 = vpop.xlane.xlu0 %36
  %v38 = vadd.f32 %v37, 1e-12
  %v39 = vrsqrt.pop %v38
  %v40 = vmul.f32 %v16, %v39
  %v41 = vmul.f32 %v17, %v17
  %v42 = vmul.f32 %v18, %v18
  %v43 = vmul.f32 %v19, %v19
  %v44 = vmul.f32 %v20, %v20
  %v45 = vmul.f32 %v21, %v21
  %v46 = vmul.f32 %v22, %v22
  %v47 = vmul.f32 %v23, %v23
  %v48 = vmul.f32 %v24, %v24
  %v49 = vmul.f32 %v25, %v25
  %v50 = vmul.f32 %v26, %v26
  %v51 = vmul.f32 %v27, %v27
  %v52 = vmul.f32 %v28, %v28
  %v53 = vmul.f32 %v29, %v29
  %v54 = vmul.f32 %v30, %v30
  %v55 = vmul.f32 %v31, %v31
  %v56 = vmul.f32 %v32, %v32
  %v57 = vsel %vm34, %v41, 0.0
  %58 = vadd.xlane.f32.xlu0 %v57
  %v59 = vpop.xlane.xlu0 %58
  %v60 = vsel %vm34, %v42, 0.0
  %61 = vadd.xlane.f32.xlu0 %v60
  %v62 = vpop.xlane.xlu0 %61
  %v63 = vsel %vm34, %v43, 0.0
  %64 = vadd.xlane.f32.xlu0 %v63
  %v65 = vpop.xlane.xlu0 %64
  %v66 = vsel %vm34, %v44, 0.0
  %67 = vadd.xlane.f32.xlu0 %v66
  %v68 = vpop.xlane.xlu0 %67
  %v69 = vsel %vm34, %v45, 0.0
  %70 = vadd.xlane.f32.xlu0 %v69
  %v71 = vpop.xlane.xlu0 %70
  %v72 = vsel %vm34, %v46, 0.0
  %73 = vadd.xlane.f32.xlu0 %v72
  %v74 = vpop.xlane.xlu0 %73
  %v75 = vsel %vm34, %v47, 0.0
  %76 = vadd.xlane.f32.xlu0 %v75
  %v77 = vpop.xlane.xlu0 %76
  %v78 = vsel %vm34, %v48, 0.0
  %79 = vadd.xlane.f32.xlu0 %v78
  %v80 = vpop.xlane.xlu0 %79
  %v81 = vsel %vm34, %v49, 0.0
  %82 = vadd.xlane.f32.xlu0 %v81
  %v83 = vpop.xlane.xlu0 %82
  %v84 = vsel %vm34, %v50, 0.0
  %85 = vadd.xlane.f32.xlu0 %v84
  %v86 = vpop.xlane.xlu0 %85
  %v87 = vsel %vm34, %v51, 0.0
  %88 = vadd.xlane.f32.xlu0 %v87
  %v89 = vpop.xlane.xlu0 %88
  %v90 = vsel %vm34, %v52, 0.0
  %91 = vadd.xlane.f32.xlu0 %v90
  %v92 = vpop.xlane.xlu0 %91
  %v93 = vsel %vm34, %v53, 0.0
  %94 = vadd.xlane.f32.xlu0 %v93
  %v95 = vpop.xlane.xlu0 %94
  %v96 = vsel %vm34, %v54, 0.0
  %97 = vadd.xlane.f32.xlu0 %v96
  %v98 = vpop.xlane.xlu0 %97
  %v99 = vsel %vm34, %v55, 0.0
  %100 = vadd.xlane.f32.xlu0 %v99
  %v101 = vpop.xlane.xlu0 %100
  %v102 = vsel %vm34, %v56, 0.0
  %103 = vadd.xlane.f32.xlu0 %v102
  %v104 = vpop.xlane.xlu0 %103
  %v105 = vadd.f32 %v59, 1e-12
  %v106 = vadd.f32 %v62, 1e-12
  %v107 = vadd.f32 %v65, 1e-12
  %v108 = vadd.f32 %v68, 1e-12
  %v109 = vadd.f32 %v71, 1e-12
  %v110 = vadd.f32 %v74, 1e-12
  %v111 = vadd.f32 %v77, 1e-12
  %v112 = vadd.f32 %v80, 1e-12
  %v113 = vadd.f32 %v83, 1e-12
  %v114 = vadd.f32 %v86, 1e-12
  %v115 = vadd.f32 %v89, 1e-12
  %v116 = vadd.f32 %v92, 1e-12
  %v117 = vadd.f32 %v95, 1e-12
  %v118 = vadd.f32 %v98, 1e-12
  %v119 = vadd.f32 %v101, 1e-12
  %v120 = vadd.f32 %v104, 1e-12
  %v121 = vrsqrt.pop %v105
  %v122 = vrsqrt.pop %v106
  %v123 = vrsqrt.pop %v107
  %v124 = vrsqrt.pop %v108
  %v125 = vrsqrt.pop %v109
  %v126 = vrsqrt.pop %v110
  %v127 = vrsqrt.pop %v111
  %v128 = vrsqrt.pop %v112
  %v129 = vrsqrt.pop %v113
  %v130 = vrsqrt.pop %v114
  %v131 = vrsqrt.pop %v115
  %v132 = vrsqrt.pop %v116
  %v133 = vrsqrt.pop %v117
  %v134 = vrsqrt.pop %v118
  %v135 = vrsqrt.pop %v119
  %v136 = vrsqrt.pop %v120
  %v137 = vmul.f32 %v17, %v121
  %v138 = vmul.f32 %v18, %v122
  %v139 = vmul.f32 %v19, %v123
  %v140 = vmul.f32 %v20, %v124
  %v141 = vmul.f32 %v21, %v125
  %v142 = vmul.f32 %v22, %v126
  %v143 = vmul.f32 %v23, %v127
  %v144 = vmul.f32 %v24, %v128
  %v145 = vmul.f32 %v25, %v129
  %v146 = vmul.f32 %v26, %v130
  %v147 = vmul.f32 %v27, %v131
  %v148 = vmul.f32 %v28, %v132
  %v149 = vmul.f32 %v29, %v133
  %v150 = vmul.f32 %v30, %v134
  %v151 = vmul.f32 %v31, %v135
  %v152 = vmul.f32 %v32, %v136
  %v153 = vld [vmem:[#allocation2] sm:$0x1]
  %s154 = vtos %v153
  %v155 = vstv %s154
  %v156 = vmul.f32 %v155, 1.442695
  %v157 = vpow.pop %v156
  %s158 = vtos %v157
  %v160 = vsel %vm34, %v40, 0
  %v163 = vsel %vm34, %v137, 0
  %v166 = vsel %vm34, %v138, 0
  %v169 = vsel %vm34, %v139, 0
  %v172 = vsel %vm34, %v140, 0
  %v175 = vsel %vm34, %v141, 0
  %v178 = vsel %vm34, %v142, 0
  %v181 = vsel %vm34, %v143, 0
  %v184 = vsel %vm34, %v144, 0
  %v187 = vsel %vm34, %v145, 0
  %v190 = vsel %vm34, %v146, 0
  %v193 = vsel %vm34, %v147, 0
  %v196 = vsel %vm34, %v148, 0
  %v199 = vsel %vm34, %v149, 0
  %v202 = vsel %vm34, %v150, 0
  %v205 = vsel %vm34, %v151, 0
  %v208 = vsel %vm34, %v152, 0
  %210 = vmatprep.subr.mxu0 0.0
  %211 = vmatpush1.xpose.msra.mxu0 %v163
  %212 = vmatprep.subr.mxu0 0.0
  %213 = vmatpush1.xpose.msra.mxu0 %v166
  %214 = vmatprep.subr.mxu0 0.0
  %215 = vmatpush1.xpose.msra.mxu0 %v169
  %216 = vmatprep.subr.mxu0 0.0
  %217 = vmatpush1.xpose.msra.mxu0 %v172
  %218 = vmatprep.subr.mxu0 0.0
  %219 = vmatpush1.xpose.msra.mxu0 %v175
  %220 = vmatprep.subr.mxu0 0.0
  %221 = vmatpush1.xpose.msra.mxu0 %v178
  %222 = vmatprep.subr.mxu0 0.0
  %223 = vmatpush1.xpose.msra.mxu0 %v181
  %224 = vmatprep.subr.mxu0 0.0
  %225 = vmatpush1.xpose.msra.mxu0 %v184
  %226 = vmatprep.subr.mxu0 0.0
  %227 = vmatpush1.xpose.msra.mxu0 %v187
  %228 = vmatprep.subr.mxu0 0.0
  %229 = vmatpush1.xpose.msra.mxu0 %v190
  %230 = vmatprep.subr.mxu0 0.0
  %231 = vmatpush1.xpose.msra.mxu0 %v193
  %232 = vmatprep.subr.mxu0 0.0
  %233 = vmatpush1.xpose.msra.mxu0 %v196
  %234 = vmatprep.subr.mxu0 0.0
  %235 = vmatpush1.xpose.msra.mxu0 %v199
  %236 = vmatprep.subr.mxu0 0.0
  %237 = vmatpush1.xpose.msra.mxu0 %v202
  %238 = vmatprep.subr.mxu0 0.0
  %239 = vmatpush1.xpose.msra.mxu0 %v205
  %240 = vmatprep.subr.mxu0 0.0
  %241 = vmatpush1.xpose.msra.mxu0 %v208
  %242 = vmatprep.subr.mxu0 0.0
  %243 = vmatpush1.xpose.msra.mxu0 0.0
  %244 = vmatprep.subr.mxu0 0.0
  %245 = vmatpush1.xpose.msra.mxu0 0.0
  %246 = vmatprep.subr.mxu0 0.0
  %247 = vmatpush1.xpose.msra.mxu0 0.0
  %248 = vmatprep.subr.mxu0 0.0
  %249 = vmatpush1.xpose.msra.mxu0 0.0
  %250 = vmatprep.subr.mxu0 0.0
  %251 = vmatpush1.xpose.msra.mxu0 0.0
  %252 = vmatprep.subr.mxu0 0.0
  %253 = vmatpush1.xpose.msra.mxu0 0.0
  %254 = vmatprep.subr.mxu0 0.0
  %255 = vmatpush1.xpose.msra.mxu0 0.0
  %256 = vmatprep.subr.mxu0 0.0
  %257 = vmatpush1.xpose.msra.mxu0 0.0
  %258 = vmatprep.subr.mxu0 0.0
  %259 = vmatpush1.xpose.msra.mxu0 0.0
  %260 = vmatprep.subr.mxu0 0.0
  %261 = vmatpush1.xpose.msra.mxu0 0.0
  %262 = vmatprep.subr.mxu0 0.0
  %263 = vmatpush1.xpose.msra.mxu0 0.0
  %264 = vmatprep.subr.mxu0 0.0
  %265 = vmatpush1.xpose.msra.mxu0 0.0
  %266 = vmatprep.subr.mxu0 0.0
  %267 = vmatpush1.xpose.msra.mxu0 0.0
  %268 = vmatprep.subr.mxu0 0.0
  %269 = vmatpush1.xpose.msra.mxu0 0.0
  %270 = vmatprep.subr.mxu0 0.0
  %271 = vmatpush1.xpose.msra.mxu0 0.0
  %272 = vmatprep.subr.mxu0 0.0
  %273 = vmatpush1.xpose.msra.mxu0 0.0
  %274 = vmatprep.mubr.f32.mxu0 0.0
  %275 = vmatmul.mubr.f32.gmra.mrb[0].mxu0 %v160
  %v276 = vpop.f32.mrb[0].mxu0
  %v277 = vadd.f32 0.0, %v276
  %v278 = vpop.f32.mrb[0].mxu0
  %279 = vdwg.mxu0
  %v280 = vstv %s158
  %v281 = vmul.f32 %v280, %v277
  %282 = vst [vmem:[%s3] sm:$0xff] %v281
  // Predicated region
  $region14: #{_lambda_.27} parent=0 // pred_check
    _
  $region15: #{_lambda_.27} parent=0 // pred_check_branch
    %284 = sbr.rel (0) target = $region17
  $region16: #{_lambda_.27} parent=0 // pred_region
    _
  $region17: #{_lambda_.27} parent=0 // pred_fallthru
    _
  // Predicated region
  $region18: #{_lambda_.27} parent=0 // pred_check
    _
  $region19: #{_lambda_.27} parent=0 // pred_check_branch
    %286 = sbr.rel (0) target = $region21
  $region20: #{_lambda_.27} parent=0 // pred_region
    _
  $region21: #{_lambda_.27} parent=0 // pred_fallthru
    _

</llo_original>
